<compile_context>
chip_gen: v7x
topology: tpu7x:2x2x1
jax: 0.10.0
libtpu: 0.0.40
codegen_flags: <defaults>
</compile_context>

<pallas_src>
import jax
import jax.numpy as jnp
from jax.experimental import pallas as pl
from jax.experimental.pallas import tpu as pltpu

FEAT_DIM = 2048      # fixed by `source.view(source.size(0), 2048)`
COMPRESS_DIM = 256   # nn.Linear(2048, 256)
NUM_CLASSES = 16     # num_classes constructor arg (small synthetic choice)


def _round_up(x, m):
    return (x + m - 1) // m * m


def _make_kernel(ns, nt, ns_pad, tm, ns_blocks):
    """Kernel over row tiles of [source_padded; target_padded] pooled feats.

    Tiles 0..ns_blocks-1 are pure source tiles, the rest are pure target
    tiles (per-domain padding guarantees no mixed tile).
    """
    dn_t = (((0,), (0,)), ((), ()))   # contract over rows: x^T @ x without .T

    def kernel(x_ref, wc_ref, bc_ref, wcls_ref, bcls_ref,
               clf_ref, sq_ref,
               sum_s_ref, sum_t_ref, gram_s_ref, gram_t_ref):
        i = pl.program_id(0)
        is_src = i < ns_blocks

        @pl.when(i == 0)
        def _init():
            sum_s_ref[...] = jnp.zeros_like(sum_s_ref)
            sum_t_ref[...] = jnp.zeros_like(sum_t_ref)
            gram_s_ref[...] = jnp.zeros_like(gram_s_ref)
            gram_t_ref[...] = jnp.zeros_like(gram_t_ref)

        # compress = nn.Linear(2048, 256): bf16 operands, f32 accumulation.
        y = (jnp.dot(x_ref[...], wc_ref[...], preferred_element_type=jnp.float32)
             + bc_ref[...])                                          # (tm,256) f32

        # cls_fc = nn.Linear(256, num_classes), padded to 128 lanes (unmasked
        # store).  Only source tiles are classified; target/pad rows were
        # discarded by the wrapper slice anyway.
        @pl.when(is_src)
        def _clf():
            clf_ref[...] = (jnp.dot(y.astype(jnp.bfloat16), wcls_ref[...],
                                    preferred_element_type=jnp.float32)
                            + bcls_ref[...])

        # Validity mask for pad rows only (pad rows have y == compress bias,
        # not zero, so they must be masked before the CORAL sums/grams).
        row = i * tm + jax.lax.broadcasted_iota(jnp.int32, (tm, 1), 0)
        limit = jnp.where(is_src, ns, ns_pad + nt)
        yv = y * (row < limit).astype(jnp.float32)

        # One column-sum and ONE gram per tile (f32, per review: do not cast
        # the gram operands to bf16), routed to the matching accumulator.
        sv = jnp.sum(yv, axis=0, keepdims=True)                      # (1, 256)
        gv = jax.lax.dot_general(yv, yv, dimension_numbers=dn_t,
                                 preferred_element_type=jnp.float32)  # (256,256)

        @pl.when(is_src)
        def _acc_src():
            sum_s_ref[...] += sv
            gram_s_ref[...] += gv

        @pl.when(jnp.logical_not(is_src))
        def _acc_tgt():
            sum_t_ref[...] += sv
            gram_t_ref[...] += gv

        @pl.when(i == pl.num_programs(0) - 1)
        def _finalize():
            ss = sum_s_ref[...]                                      # (1, d)
            st = sum_t_ref[...]
            cs = (gram_s_ref[...] - (ss.T * ss) / ns) / (ns - 1)
            ct = (gram_t_ref[...] - (st.T * st) / nt) / (nt - 1)
            diff = cs - ct
            # Unnormalized squared Frobenius norm; the scalar sqrt / (4 d^2)
            # epilogue is done in the wrapper.
            sq_rows = jnp.sum(diff * diff, axis=1, keepdims=True)    # (d, 1)
            sq_ref[...] = jnp.sum(sq_rows, axis=0, keepdims=True)    # (1, 1)

    return kernel


def deep_coral_forward(source_nchw, target_nchw, params):
    """source/target: (N, 2048, H, W) float32 layer4 activations (NCHW)."""
    ns = source_nchw.shape[0]
    nt = target_nchw.shape[0]
    # NOTE: ns == 1 or nt == 1 divides by zero in (n-1), exactly like the
    # PyTorch CORAL reference.

    # sharedNet tail: AdaptiveAvgPool2d((1,1)) -> view(N, 2048), hoisted out of
    # the kernel (drops the NCHW->NHWC transpose and HW-x the activation DMA).
    s_feat = jnp.mean(source_nchw, axis=(2, 3)).astype(jnp.float32)  # (ns, 2048)
    t_feat = jnp.mean(target_nchw, axis=(2, 3)).astype(jnp.float32)  # (nt, 2048)

    # Row tile: big enough to amortize per-step overhead (0.35us/step, bias
    # broadcasts, accumulator RMW), capped so per-domain pad waste stays small.
    tm = min(512, _round_up(max(ns, nt), 8))
    ns_pad = _round_up(ns, tm)
    nt_pad = _round_up(nt, tm)
    ns_blocks = ns_pad // tm
    total_blocks = (ns_pad + nt_pad) // tm

    # Per-domain padding -> no tile mixes domains.  bf16 inputs for the MXU.
    x = jnp.concatenate(
        [jnp.pad(s_feat, ((0, ns_pad - ns), (0, 0))),
         jnp.pad(t_feat, ((0, nt_pad - nt), (0, 0)))],
        axis=0).astype(jnp.bfloat16)                                 # (ns_pad+nt_pad, 2048)

    num_classes = params["w_cls"].shape[1]
    cls_pad = _round_up(num_classes, 128)       # lane-dense classifier output
    wc = params["w_compress"].astype(jnp.bfloat16)
    bc = params["b_compress"].astype(jnp.float32)
    wcls = jnp.pad(params["w_cls"],
                   ((0, 0), (0, cls_pad - num_classes))).astype(jnp.bfloat16)
    bcls = jnp.pad(params["b_cls"],
                   ((0, 0), (0, cls_pad - num_classes))).astype(jnp.float32)

    kernel = _make_kernel(ns, nt, ns_pad, tm, ns_blocks)
    clf_pad, sq = pl.pallas_call(
        kernel,
        out_shape=(jax.ShapeDtypeStruct((ns_pad, cls_pad), jnp.float32),
                   jax.ShapeDtypeStruct((1, 1), jnp.float32)),
        grid_spec=pltpu.PrefetchScalarGridSpec(
            num_scalar_prefetch=0,
            grid=(total_blocks,),
            in_specs=[
                pl.BlockSpec((tm, FEAT_DIM), lambda i: (i, 0)),
                pl.BlockSpec((FEAT_DIM, COMPRESS_DIM), lambda i: (0, 0)),
                pl.BlockSpec((1, COMPRESS_DIM), lambda i: (0, 0)),
                pl.BlockSpec((COMPRESS_DIM, cls_pad), lambda i: (0, 0)),
                pl.BlockSpec((1, cls_pad), lambda i: (0, 0)),
            ],
            out_specs=(
                # Source tiles write their own block; target tiles revisit the
                # last source block without touching it (no extra writeback).
                pl.BlockSpec((tm, cls_pad),
                             lambda i: (jnp.minimum(i, ns_blocks - 1), 0)),
                pl.BlockSpec((1, 1), lambda i: (0, 0)),
            ),
            scratch_shapes=[
                pltpu.VMEM((1, COMPRESS_DIM), jnp.float32),
                pltpu.VMEM((1, COMPRESS_DIM), jnp.float32),
                pltpu.VMEM((COMPRESS_DIM, COMPRESS_DIM), jnp.float32),
                pltpu.VMEM((COMPRESS_DIM, COMPRESS_DIM), jnp.float32),
            ]),
        compiler_params=pltpu.CompilerParams(
            dimension_semantics=("arbitrary",)),
    )(x, wc, bc, wcls, bcls)

    clf = clf_pad[:ns, :num_classes]
    d = COMPRESS_DIM
    coral_loss = jnp.sqrt(sq[0, 0]) / (4.0 * d * d)
    return clf, coral_loss


def init_params(key):
    k1, k2, k3, k4 = jax.random.split(key, 4)
    # compress = nn.Linear(2048, 256): default torch init U(-1/sqrt(in), 1/sqrt(in)).
    # Weights stored transposed, (in, out), for the kernel's x @ W layout.
    bc = 1.0 / jnp.sqrt(jnp.float32(FEAT_DIM))
    w_compress = jax.random.uniform(k1, (FEAT_DIM, COMPRESS_DIM), jnp.float32, -bc, bc)
    b_compress = jax.random.uniform(k2, (1, COMPRESS_DIM), jnp.float32, -bc, bc)
    # cls_fc: weight.data.normal_(0, 0.005); bias keeps default uniform init.
    w_cls = 0.005 * jax.random.normal(k3, (COMPRESS_DIM, NUM_CLASSES), jnp.float32)
    bf = 1.0 / jnp.sqrt(jnp.float32(COMPRESS_DIM))
    b_cls = jax.random.uniform(k4, (1, NUM_CLASSES), jnp.float32, -bf, bf)
    return {"w_compress": w_compress, "b_compress": b_compress,
            "w_cls": w_cls, "b_cls": b_cls}


def reference_forward(source_nchw, target_nchw, p):
    """Pure-JAX reference mirroring the PyTorch forward (isTrain=True) with the
    same mixed precision as the kernel (bf16 matmul inputs, f32 accumulation,
    f32 CORAL math)."""
    s_feat = jnp.mean(source_nchw, axis=(2, 3))
    t_feat = jnp.mean(target_nchw, axis=(2, 3))
    wc = p["w_compress"].astype(jnp.bfloat16)
    s = jnp.dot(s_feat.astype(jnp.bfloat16), wc,
                preferred_element_type=jnp.float32) + p["b_compress"]
    t = jnp.dot(t_feat.astype(jnp.bfloat16), wc,
                preferred_element_type=jnp.float32) + p["b_compress"]
    d = s.shape[1]
    ns, nt = s.shape[0], t.shape[0]
    tmp_s = jnp.ones((1, ns), jnp.float32) @ s
    cs = (s.T @ s - tmp_s.T @ tmp_s / ns) / (ns - 1)
    tmp_t = jnp.ones((1, nt), jnp.float32) @ t
    ct = (t.T @ t - tmp_t.T @ tmp_t / nt) / (nt - 1)
    loss = jnp.sqrt(jnp.sum((cs - ct) ** 2)) / (4 * d * d)
    wcls = p["w_cls"].astype(jnp.bfloat16)
    clf = jnp.dot(s.astype(jnp.bfloat16), wcls,
                  preferred_element_type=jnp.float32) + p["b_cls"]
    return clf, loss


if __name__ == "__main__":
    key = jax.random.PRNGKey(0)
    k_src, k_tgt, k_par = jax.random.split(key, 3)

    # Small synthetic layer4 activations: batch=4, C=2048 (fixed), spatial 4x4.
    source = jax.random.normal(k_src, (4, FEAT_DIM, 4, 4), jnp.float32)
    target = jax.random.normal(k_tgt, (4, FEAT_DIM, 4, 4), jnp.float32)
    params = init_params(k_par)

    clf, coral_loss = deep_coral_forward(source, target, params)
    clf = jax.block_until_ready(clf)
    coral_loss = jax.block_until_ready(coral_loss)

    clf_ref, coral_ref = reference_forward(source, target, params)
    assert jnp.allclose(clf, clf_ref, rtol=1e-3, atol=1e-3), "clf mismatch"
    assert jnp.allclose(coral_loss, coral_ref, rtol=5e-3, atol=1e-6), "coral mismatch"

    print("KERNEL_OK")
</pallas_src>

<mosaic_0001>
module attributes {stable_mosaic.version = 11 : i64} {
  func.func @kernel(%arg0: i32, %arg1: memref<8x2048xbf16, #tpu.memory_space<vmem>>, %arg2: memref<2048x256xbf16, #tpu.memory_space<vmem>>, %arg3: memref<1x256xf32, #tpu.memory_space<vmem>>, %arg4: memref<256x128xbf16, #tpu.memory_space<vmem>>, %arg5: memref<1x128xf32, #tpu.memory_space<vmem>>, %arg6: memref<8x128xf32, #tpu.memory_space<vmem>>, %arg7: memref<1x1xf32, #tpu.memory_space<vmem>>, %arg8: memref<1x256xf32, #tpu.memory_space<vmem>>, %arg9: memref<1x256xf32, #tpu.memory_space<vmem>>, %arg10: memref<256x256xf32, #tpu.memory_space<vmem>>, %arg11: memref<256x256xf32, #tpu.memory_space<vmem>>) attributes {dimension_semantics = [#tpu.dimension_semantics<arbitrary>], iteration_bounds = array<i64: 2>, scalar_prefetch = 0 : i64, scratch_operands = 4 : i64, tpu.core_type = #tpu.core_type<tc>, window_params = [{transform_indices = @transform_0, window_bounds = array<i64: 8, 2048>}, {pipeline_mode = #tpu.pipeline_mode<synchronous>, transform_indices = @transform_1, window_bounds = array<i64: 2048, 256>}, {pipeline_mode = #tpu.pipeline_mode<synchronous>, transform_indices = @transform_2, window_bounds = array<i64: 1, 256>}, {pipeline_mode = #tpu.pipeline_mode<synchronous>, transform_indices = @transform_3, window_bounds = array<i64: 256, 128>}, {pipeline_mode = #tpu.pipeline_mode<synchronous>, transform_indices = @transform_4, window_bounds = array<i64: 1, 128>}, {transform_indices = @transform_5, window_bounds = array<i64: 8, 128>}, {pipeline_mode = #tpu.pipeline_mode<synchronous>, transform_indices = @transform_6, window_bounds = array<i64: 1, 1>}]} {
    %c1_i32 = arith.constant 1 : i32
    %0 = arith.cmpi slt, %arg0, %c1_i32 : i32
    %c0_i32 = arith.constant 0 : i32
    %1 = arith.cmpi eq, %arg0, %c0_i32 : i32
    %2 = arith.extui %1 : i1 to i32
    %c0_i32_0 = arith.constant 0 : i32
    %3 = arith.cmpi ne, %2, %c0_i32_0 : i32
    scf.if %3 {
      %cst_13 = arith.constant 0.000000e+00 : f32
      %34 = vector.broadcast %cst_13 : f32 to vector<1x256xf32>
      %c0_14 = arith.constant 0 : index
      %c0_15 = arith.constant 0 : index
      %35 = vector.load %arg8[%c0_14, %c0_15] : memref<1x256xf32, #tpu.memory_space<vmem>>, vector<1x256xf32>
      tpu.vector_store %arg8[%c0_14, %c0_15], %34 {strides = array<i32>} : memref<1x256xf32, #tpu.memory_space<vmem>>, vector<1x256xf32>,
      %cst_16 = arith.constant 0.000000e+00 : f32
      %36 = vector.broadcast %cst_16 : f32 to vector<1x256xf32>
      %c0_17 = arith.constant 0 : index
      %c0_18 = arith.constant 0 : index
      %37 = vector.load %arg9[%c0_17, %c0_18] : memref<1x256xf32, #tpu.memory_space<vmem>>, vector<1x256xf32>
      tpu.vector_store %arg9[%c0_17, %c0_18], %36 {strides = array<i32>} : memref<1x256xf32, #tpu.memory_space<vmem>>, vector<1x256xf32>,
      %cst_19 = arith.constant 0.000000e+00 : f32
      %38 = vector.broadcast %cst_19 : f32 to vector<256x256xf32>
      %c0_20 = arith.constant 0 : index
      %c0_21 = arith.constant 0 : index
      %39 = vector.load %arg10[%c0_20, %c0_21] : memref<256x256xf32, #tpu.memory_space<vmem>>, vector<256x256xf32>
      tpu.vector_store %arg10[%c0_20, %c0_21], %38 {strides = array<i32>} : memref<256x256xf32, #tpu.memory_space<vmem>>, vector<256x256xf32>,
      %cst_22 = arith.constant 0.000000e+00 : f32
      %40 = vector.broadcast %cst_22 : f32 to vector<256x256xf32>
      %c0_23 = arith.constant 0 : index
      %c0_24 = arith.constant 0 : index
      %41 = vector.load %arg11[%c0_23, %c0_24] : memref<256x256xf32, #tpu.memory_space<vmem>>, vector<256x256xf32>
      tpu.vector_store %arg11[%c0_23, %c0_24], %40 {strides = array<i32>} : memref<256x256xf32, #tpu.memory_space<vmem>>, vector<256x256xf32>,
    } else {
    }
    %c0 = arith.constant 0 : index
    %c0_1 = arith.constant 0 : index
    %4 = vector.load %arg1[%c0, %c0_1] : memref<8x2048xbf16, #tpu.memory_space<vmem>>, vector<8x2048xbf16>
    %c0_2 = arith.constant 0 : index
    %c0_3 = arith.constant 0 : index
    %5 = vector.load %arg2[%c0_2, %c0_3] : memref<2048x256xbf16, #tpu.memory_space<vmem>>, vector<2048x256xbf16>
    %cst = arith.constant dense<0.000000e+00> : vector<8x256xf32>
    %6 = tpu.matmul %4, %5, %cst {dimension_numbers = #tpu.dot_dimension_numbers<[1], [0], [0], [1], [0, 0, 1, 1], [], []>} : vector<8x2048xbf16>, vector<2048x256xbf16>, vector<8x256xf32> -> vector<8x256xf32>
    %c0_4 = arith.constant 0 : index
    %c0_5 = arith.constant 0 : index
    %7 = vector.load %arg3[%c0_4, %c0_5] : memref<1x256xf32, #tpu.memory_space<vmem>>, vector<1x256xf32>
    %8 = vector.broadcast %7 : vector<1x256xf32> to vector<8x256xf32>
    %9 = arith.addf %6, %8 : vector<8x256xf32>
    %10 = arith.extui %0 : i1 to i32
    %c0_i32_6 = arith.constant 0 : i32
    %11 = arith.cmpi ne, %10, %c0_i32_6 : i32
    scf.if %11 {
      %34 = arith.truncf %9 : vector<8x256xf32> to vector<8x256xbf16>
      %c0_13 = arith.constant 0 : index
      %c0_14 = arith.constant 0 : index
      %35 = vector.load %arg4[%c0_13, %c0_14] : memref<256x128xbf16, #tpu.memory_space<vmem>>, vector<256x128xbf16>
      %cst_15 = arith.constant dense<0.000000e+00> : vector<8x128xf32>
      %36 = tpu.matmul %34, %35, %cst_15 {dimension_numbers = #tpu.dot_dimension_numbers<[1], [0], [0], [1], [0, 0, 1, 1], [], []>} : vector<8x256xbf16>, vector<256x128xbf16>, vector<8x128xf32> -> vector<8x128xf32>
      %c0_16 = arith.constant 0 : index
      %c0_17 = arith.constant 0 : index
      %37 = vector.load %arg5[%c0_16, %c0_17] : memref<1x128xf32, #tpu.memory_space<vmem>>, vector<1x128xf32>
      %38 = vector.broadcast %37 : vector<1x128xf32> to vector<8x128xf32>
      %39 = arith.addf %36, %38 : vector<8x128xf32>
      %c0_18 = arith.constant 0 : index
      %c0_19 = arith.constant 0 : index
      %40 = vector.load %arg6[%c0_18, %c0_19] : memref<8x128xf32, #tpu.memory_space<vmem>>, vector<8x128xf32>
      tpu.vector_store %arg6[%c0_18, %c0_19], %39 {strides = array<i32>} : memref<8x128xf32, #tpu.memory_space<vmem>>, vector<8x128xf32>,
    } else {
    }
    %c8_i32 = arith.constant 8 : i32
    %12 = arith.muli %arg0, %c8_i32 : i32
    %13 = tpu.iota {dimensions = array<i32: 0>} : vector<8x1xi32>
    %14 = vector.broadcast %12 : i32 to vector<8x1xi32>
    %15 = arith.addi %14, %13 : vector<8x1xi32>
    %c4_i32 = arith.constant 4 : i32
    %c12_i32 = arith.constant 12 : i32
    %16 = arith.select %0, %c4_i32, %c12_i32 : i32
    %17 = vector.broadcast %16 : i32 to vector<8x1xi32>
    %18 = arith.cmpi slt, %15, %17 : vector<8x1xi32>
    %19 = arith.extui %18 : vector<8x1xi1> to vector<8x1xi32>
    %20 = arith.sitofp %19 : vector<8x1xi32> to vector<8x1xf32>
    %21 = vector.broadcast %20 : vector<8x1xf32> to vector<8x256xf32>
    %22 = arith.mulf %9, %21 : vector<8x256xf32>
    %cst_7 = arith.constant dense<0.000000e+00> : vector<256xf32>
    %23 = vector.multi_reduction <add>, %22, %cst_7 [0] : vector<8x256xf32> to vector<256xf32>
    %24 = vector.shape_cast %23 : vector<256xf32> to vector<1x256xf32>
    %cst_8 = arith.constant dense<0.000000e+00> : vector<256x256xf32>
    %25 = tpu.matmul %22, %22, %cst_8 {dimension_numbers = #tpu.dot_dimension_numbers<[0], [0], [1], [1], [0, 1, 1, 1], [], []>} : vector<8x256xf32>, vector<8x256xf32>, vector<256x256xf32> -> vector<256x256xf32>
    %26 = arith.extui %0 : i1 to i32
    %c0_i32_9 = arith.constant 0 : i32
    %27 = arith.cmpi ne, %26, %c0_i32_9 : i32
    scf.if %27 {
      %c0_13 = arith.constant 0 : index
      %c0_14 = arith.constant 0 : index
      %34 = vector.load %arg8[%c0_13, %c0_14] : memref<1x256xf32, #tpu.memory_space<vmem>>, vector<1x256xf32>
      %35 = arith.addf %34, %24 : vector<1x256xf32>
      %c0_15 = arith.constant 0 : index
      %c0_16 = arith.constant 0 : index
      %36 = vector.load %arg8[%c0_15, %c0_16] : memref<1x256xf32, #tpu.memory_space<vmem>>, vector<1x256xf32>
      tpu.vector_store %arg8[%c0_15, %c0_16], %35 {strides = array<i32>} : memref<1x256xf32, #tpu.memory_space<vmem>>, vector<1x256xf32>,
      %c0_17 = arith.constant 0 : index
      %c0_18 = arith.constant 0 : index
      %37 = vector.load %arg10[%c0_17, %c0_18] : memref<256x256xf32, #tpu.memory_space<vmem>>, vector<256x256xf32>
      %38 = arith.addf %37, %25 : vector<256x256xf32>
      %c0_19 = arith.constant 0 : index
      %c0_20 = arith.constant 0 : index
      %39 = vector.load %arg10[%c0_19, %c0_20] : memref<256x256xf32, #tpu.memory_space<vmem>>, vector<256x256xf32>
      tpu.vector_store %arg10[%c0_19, %c0_20], %38 {strides = array<i32>} : memref<256x256xf32, #tpu.memory_space<vmem>>, vector<256x256xf32>,
    } else {
    }
    %true = arith.constant true
    %28 = arith.xori %0, %true : i1
    %29 = arith.extui %28 : i1 to i32
    %c0_i32_10 = arith.constant 0 : i32
    %30 = arith.cmpi ne, %29, %c0_i32_10 : i32
    scf.if %30 {
      %c0_13 = arith.constant 0 : index
      %c0_14 = arith.constant 0 : index
      %34 = vector.load %arg9[%c0_13, %c0_14] : memref<1x256xf32, #tpu.memory_space<vmem>>, vector<1x256xf32>
      %35 = arith.addf %34, %24 : vector<1x256xf32>
      %c0_15 = arith.constant 0 : index
      %c0_16 = arith.constant 0 : index
      %36 = vector.load %arg9[%c0_15, %c0_16] : memref<1x256xf32, #tpu.memory_space<vmem>>, vector<1x256xf32>
      tpu.vector_store %arg9[%c0_15, %c0_16], %35 {strides = array<i32>} : memref<1x256xf32, #tpu.memory_space<vmem>>, vector<1x256xf32>,
      %c0_17 = arith.constant 0 : index
      %c0_18 = arith.constant 0 : index
      %37 = vector.load %arg11[%c0_17, %c0_18] : memref<256x256xf32, #tpu.memory_space<vmem>>, vector<256x256xf32>
      %38 = arith.addf %37, %25 : vector<256x256xf32>
      %c0_19 = arith.constant 0 : index
      %c0_20 = arith.constant 0 : index
      %39 = vector.load %arg11[%c0_19, %c0_20] : memref<256x256xf32, #tpu.memory_space<vmem>>, vector<256x256xf32>
      tpu.vector_store %arg11[%c0_19, %c0_20], %38 {strides = array<i32>} : memref<256x256xf32, #tpu.memory_space<vmem>>, vector<256x256xf32>,
    } else {
    }
    %c1_i32_11 = arith.constant 1 : i32
    %31 = arith.cmpi eq, %arg0, %c1_i32_11 : i32
    %32 = arith.extui %31 : i1 to i32
    %c0_i32_12 = arith.constant 0 : i32
    %33 = arith.cmpi ne, %32, %c0_i32_12 : i32
    scf.if %33 {
      %c0_13 = arith.constant 0 : index
      %c0_14 = arith.constant 0 : index
      %34 = vector.load %arg8[%c0_13, %c0_14] : memref<1x256xf32, #tpu.memory_space<vmem>>, vector<1x256xf32>
      %c0_15 = arith.constant 0 : index
      %c0_16 = arith.constant 0 : index
      %35 = vector.load %arg9[%c0_15, %c0_16] : memref<1x256xf32, #tpu.memory_space<vmem>>, vector<1x256xf32>
      %c0_17 = arith.constant 0 : index
      %c0_18 = arith.constant 0 : index
      %36 = vector.load %arg10[%c0_17, %c0_18] : memref<256x256xf32, #tpu.memory_space<vmem>>, vector<256x256xf32>
      %37 = tpu.transpose %34, [1, 0] : vector<1x256xf32> -> vector<256x1xf32>
      %38 = vector.broadcast %37 : vector<256x1xf32> to vector<256x256xf32>
      %39 = vector.broadcast %34 : vector<1x256xf32> to vector<256x256xf32>
      %40 = arith.mulf %38, %39 : vector<256x256xf32>
      %cst_19 = arith.constant 4.000000e+00 : f32
      %41 = vector.broadcast %cst_19 : f32 to vector<256x256xf32>
      %42 = arith.divf %40, %41 : vector<256x256xf32>
      %43 = arith.subf %36, %42 : vector<256x256xf32>
      %cst_20 = arith.constant 3.000000e+00 : f32
      %44 = vector.broadcast %cst_20 : f32 to vector<256x256xf32>
      %45 = arith.divf %43, %44 : vector<256x256xf32>
      %c0_21 = arith.constant 0 : index
      %c0_22 = arith.constant 0 : index
      %46 = vector.load %arg11[%c0_21, %c0_22] : memref<256x256xf32, #tpu.memory_space<vmem>>, vector<256x256xf32>
      %47 = tpu.transpose %35, [1, 0] : vector<1x256xf32> -> vector<256x1xf32>
      %48 = vector.broadcast %47 : vector<256x1xf32> to vector<256x256xf32>
      %49 = vector.broadcast %35 : vector<1x256xf32> to vector<256x256xf32>
      %50 = arith.mulf %48, %49 : vector<256x256xf32>
      %cst_23 = arith.constant 4.000000e+00 : f32
      %51 = vector.broadcast %cst_23 : f32 to vector<256x256xf32>
      %52 = arith.divf %50, %51 : vector<256x256xf32>
      %53 = arith.subf %46, %52 : vector<256x256xf32>
      %cst_24 = arith.constant 3.000000e+00 : f32
      %54 = vector.broadcast %cst_24 : f32 to vector<256x256xf32>
      %55 = arith.divf %53, %54 : vector<256x256xf32>
      %56 = arith.subf %45, %55 : vector<256x256xf32>
      %57 = arith.mulf %56, %56 : vector<256x256xf32>
      %cst_25 = arith.constant dense<0.000000e+00> : vector<256xf32>
      %58 = vector.multi_reduction <add>, %57, %cst_25 [1] : vector<256x256xf32> to vector<256xf32>
      %59 = vector.shape_cast %58 : vector<256xf32> to vector<256x1xf32>
      %cst_26 = arith.constant dense<0.000000e+00> : vector<1xf32>
      %60 = vector.multi_reduction <add>, %59, %cst_26 [0] : vector<256x1xf32> to vector<1xf32>
      %61 = vector.shape_cast %60 : vector<1xf32> to vector<1x1xf32>
      %c0_27 = arith.constant 0 : index
      %c0_28 = arith.constant 0 : index
      %62 = vector.load %arg7[%c0_27, %c0_28] : memref<1x1xf32, #tpu.memory_space<vmem>>, vector<1x1xf32>
      tpu.vector_store %arg7[%c0_27, %c0_28], %61 {strides = array<i32>} : memref<1x1xf32, #tpu.memory_space<vmem>>, vector<1x1xf32>,
    } else {
    }
    return
  }
  func.func @transform_0(%arg0: i32) -> (i32, i32) {
    %c0_i32 = arith.constant 0 : i32
    %c0_i32_0 = arith.constant 0 : i32
    return %arg0, %c0_i32 : i32, i32
  }
  func.func @transform_1(%arg0: i32) -> (i32, i32) {
    %c0_i32 = arith.constant 0 : i32
    %c0_i32_0 = arith.constant 0 : i32
    %c0_i32_1 = arith.constant 0 : i32
    return %c0_i32, %c0_i32_0 : i32, i32
  }
  func.func @transform_2(%arg0: i32) -> (i32, i32) {
    %c0_i32 = arith.constant 0 : i32
    %c0_i32_0 = arith.constant 0 : i32
    %c0_i32_1 = arith.constant 0 : i32
    return %c0_i32, %c0_i32_0 : i32, i32
  }
  func.func @transform_3(%arg0: i32) -> (i32, i32) {
    %c0_i32 = arith.constant 0 : i32
    %c0_i32_0 = arith.constant 0 : i32
    %c0_i32_1 = arith.constant 0 : i32
    return %c0_i32, %c0_i32_0 : i32, i32
  }
  func.func @transform_4(%arg0: i32) -> (i32, i32) {
    %c0_i32 = arith.constant 0 : i32
    %c0_i32_0 = arith.constant 0 : i32
    %c0_i32_1 = arith.constant 0 : i32
    return %c0_i32, %c0_i32_0 : i32, i32
  }
  func.func @transform_5(%arg0: i32) -> (i32, i32) {
    %c0_i32 = arith.constant 0 : i32
    %0 = arith.minsi %arg0, %c0_i32 : i32
    %c0_i32_0 = arith.constant 0 : i32
    %c0_i32_1 = arith.constant 0 : i32
    return %0, %c0_i32_0 : i32, i32
  }
  func.func @transform_6(%arg0: i32) -> (i32, i32) {
    %c0_i32 = arith.constant 0 : i32
    %c0_i32_0 = arith.constant 0 : i32
    %c0_i32_1 = arith.constant 0 : i32
    return %c0_i32, %c0_i32_0 : i32, i32
  }
}

</mosaic_0001>

<llo_original>
// kernel: tpu_custom_call.1
$region0: #{tpu_custom_call.1}
  #allocation0 [shape = 'u32[]', space=smem, size = 0x4, offset = 0x4, fixed_abs, tag = 'smem constant byte address 0x4 - core index']
  #allocation1 [shape = 'u32[144,128]{1,0:T(1,128)}', space=vmem, size = 0x12000, scoped, tag = 'internal scratch']
  #allocation2 [shape = 'f32[1,256]{1,0:T(1,128)}', space=vmem, size = 0x400, scoped, tag = 'scratch operand']
  #allocation3 [shape = 'f32[1,256]{1,0:T(1,128)}', space=vmem, size = 0x400, scoped, tag = 'scratch operand']
  #allocation4 [shape = 'f32[256,256]{1,0:T(8,128)}', space=vmem, size = 0x40000, scoped, tag = 'scratch operand']
  #allocation5 [shape = 'f32[256,256]{1,0:T(8,128)}', space=vmem, size = 0x40000, scoped, tag = 'scratch operand']
  %s0 = inlined_call_operand.hbm [shape: bf16[16,2048], index: 0, kind: input, shape index: {}]
  %s1 = inlined_call_operand.hbm [shape: bf16[2048,256], index: 1, kind: input, shape index: {}]
  %s2 = inlined_call_operand.vmem [shape: f32[1,256], index: 2, kind: input, shape index: {}]
  %s3 = inlined_call_operand.hbm [shape: bf16[256,128], index: 3, kind: input, shape index: {}]
  %s4 = inlined_call_operand.vmem [shape: f32[1,128], index: 4, kind: input, shape index: {}]
  %s5 = inlined_call_operand.hbm [shape: f32[8,128], index: 5, kind: output, shape index: {0}]
  %s6 = inlined_call_operand.hbm [shape: f32[1,1], index: 6, kind: output, shape index: {1}]
  %7 = xla_tuple %s5, %s6
  %s8 = sld [smem:[#allocation0]]
  $region93: #{tpu_custom_call.1} parent=0
    _
  %s10 = ssub.s32 1, %s8
  %s11 = scalar_select 0, %s10, %s8
  $region1: #{tpu_custom_call.1} parent=0
    #allocation6 [shape = 'u8[65536]{0}', space=vmem, size = 0x10000, scoped, tag = 'input window, operand 0']
    #allocation7 [shape = 's32[2]{0}', space=sflag, size = 0x8, scoped, tag = 'scoped memory for tpu_custom_call.1']
    #allocation8 [shape = 's32[2]{0}', space=sflag, size = 0x8, scoped, tag = 'scoped memory for tpu_custom_call.1']
    #allocation9 [shape = 'u8[1048576]{0}', space=vmem, size = 0x100000, scoped, tag = 'input window, operand 1, single buffered']
    #allocation10 [shape = 's32[1]{0}', space=sflag, size = 0x4, scoped, tag = 'scoped memory for tpu_custom_call.1']
    #allocation11 [shape = 'u8[65536]{0}', space=vmem, size = 0x10000, scoped, tag = 'input window, operand 3, single buffered']
    #allocation12 [shape = 'u8[8192]{0}', space=vmem, size = 0x2000, scoped, tag = 'output window, operand 0']
    #allocation13 [shape = 'u8[512]{0}', space=vmem, size = 0x400, scoped, tag = 'output window, operand 1, single buffered']
    #allocation14 [shape = 's32[1]{0}', space=sflag, size = 0x4, scoped, tag = 'scoped memory for tpu_custom_call.1']
    %12 = vsyncpa [#allocation7], 0
    %s13 = scalar_lea.sflag [#allocation7], 1
    %14 = vsyncpa %s13, 0
    %15 = vsyncpa [#allocation10], 0
    %16 = vsyncpa [#allocation8], 0
    %s17 = scalar_lea.sflag [#allocation8], 1
    %18 = vsyncpa %s17, 0
    %19 = vsyncpa [#allocation14], 0
    loop: start=0, step=1, limit=4
    $region2: #{tpu_custom_call.1} parent=1 // loop_pre_header
      _
    $region3: #{tpu_custom_call.1} parent=1 // loop_header
      %s21 = sphi 0, %s25
      %p22 = scmp.ge.s32.totalorder %s21, 4
      %s31 = sphi 0, %s33
      %s34 = sphi 0, %s31
      %s35 = sphi 0, %s34
      %s51 = sphi 0, %s35
      %s55 = sphi 0, %s55
      %s57 = sphi 0, %s55
      %s58 = sphi 0, %s57
      %s72 = sphi 0, %s58
      %s76 = sphi 0, %s76
      %s78 = sphi 0, %s76
      %s79 = sphi 0, %s78
      %s93 = sphi 0, %s79
      %s97 = sphi 0, %s97
      %s99 = sphi 0, %s97
      %s100 = sphi 0, %s99
      %s114 = sphi 0, %s100
      %s118 = sphi 0, %s118
      %s120 = sphi 0, %s118
      %s121 = sphi 0, %s120
      %s135 = sphi 0, %s121
      %s145 = sphi 0, %s147
      %s148 = sphi 0, %s145
      %s149 = sphi 0, %s148
      %s165 = sphi 0, %s149
      %s169 = sphi 0, %s169
      %s171 = sphi 0, %s169
      %s172 = sphi 0, %s171
      %s186 = sphi 0, %s172
    $region4: #{tpu_custom_call.1} parent=1 // loop_header_branch
      %24 = sbr.rel (%p22) target = $region8
    $region5: #{tpu_custom_call.1} parent=1 // loop_body
      %s26 = ssub.s32 %s21, 1
      %s27 = ssub.s32 %s21, 2
      %s28 = sadd.s32 %s21, 1
      %s29 = ssub.s32 %s21, %s28
      %p30 = scmp.eq.s32.totalorder %s29, 0
      %s32 = sadd.s32 %s31, 1
      %s33 = scalar_select %p30, %s31, %s32
      %p36 = pneg %p30
      %p37 = scmp.eq.s32.totalorder %s21, 1
      %p38 = por %p36, %p37
      %p39 = scmp.ne.s32.totalorder %s31, %s34
      %p40 = scmp.eq.s32.totalorder %s21, 0
      %p41 = por %p39, %p40
      %p42 = scmp.ne.s32.totalorder %s31, %s34
      %p43 = scmp.eq.s32.totalorder %s26, 1
      %p44 = por %p42, %p43
      %p45 = scmp.ne.s32.totalorder %s34, %s35
      %p46 = scmp.eq.s32.totalorder %s26, 0
      %p47 = por %p45, %p46
      %p48 = scmp.ne.s32.totalorder %s34, %s35
      %p49 = scmp.eq.s32.totalorder %s27, 1
      %p50 = por %p48, %p49
      %p52 = scmp.ne.s32.totalorder %s35, %s51
      %p53 = scmp.eq.s32.totalorder %s27, 0
      %p54 = por %p52, %p53
      %s56 = sadd.s32 %s55, 1
      %p59 = scmp.eq.s32.totalorder %s21, 1
      %p60 = scmp.ne.s32.totalorder %s55, %s57
      %p61 = scmp.eq.s32.totalorder %s21, 0
      %p62 = por %p60, %p61
      %p63 = scmp.ne.s32.totalorder %s55, %s57
      %p64 = scmp.eq.s32.totalorder %s26, 1
      %p65 = por %p63, %p64
      %p66 = scmp.ne.s32.totalorder %s57, %s58
      %p67 = scmp.eq.s32.totalorder %s26, 0
      %p68 = por %p66, %p67
      %p69 = scmp.ne.s32.totalorder %s57, %s58
      %p70 = scmp.eq.s32.totalorder %s27, 1
      %p71 = por %p69, %p70
      %p73 = scmp.ne.s32.totalorder %s58, %s72
      %p74 = scmp.eq.s32.totalorder %s27, 0
      %p75 = por %p73, %p74
      %s77 = sadd.s32 %s76, 1
      %p80 = scmp.eq.s32.totalorder %s21, 1
      %p81 = scmp.ne.s32.totalorder %s76, %s78
      %p82 = scmp.eq.s32.totalorder %s21, 0
      %p83 = por %p81, %p82
      %p84 = scmp.ne.s32.totalorder %s76, %s78
      %p85 = scmp.eq.s32.totalorder %s26, 1
      %p86 = por %p84, %p85
      %p87 = scmp.ne.s32.totalorder %s78, %s79
      %p88 = scmp.eq.s32.totalorder %s26, 0
      %p89 = por %p87, %p88
      %p90 = scmp.ne.s32.totalorder %s78, %s79
      %p91 = scmp.eq.s32.totalorder %s27, 1
      %p92 = por %p90, %p91
      %p94 = scmp.ne.s32.totalorder %s79, %s93
      %p95 = scmp.eq.s32.totalorder %s27, 0
      %p96 = por %p94, %p95
      %s98 = sadd.s32 %s97, 1
      %p101 = scmp.eq.s32.totalorder %s21, 1
      %p102 = scmp.ne.s32.totalorder %s97, %s99
      %p103 = scmp.eq.s32.totalorder %s21, 0
      %p104 = por %p102, %p103
      %p105 = scmp.ne.s32.totalorder %s97, %s99
      %p106 = scmp.eq.s32.totalorder %s26, 1
      %p107 = por %p105, %p106
      %p108 = scmp.ne.s32.totalorder %s99, %s100
      %p109 = scmp.eq.s32.totalorder %s26, 0
      %p110 = por %p108, %p109
      %p111 = scmp.ne.s32.totalorder %s99, %s100
      %p112 = scmp.eq.s32.totalorder %s27, 1
      %p113 = por %p111, %p112
      %p115 = scmp.ne.s32.totalorder %s100, %s114
      %p116 = scmp.eq.s32.totalorder %s27, 0
      %p117 = por %p115, %p116
      %s119 = sadd.s32 %s118, 1
      %p122 = scmp.eq.s32.totalorder %s21, 1
      %p123 = scmp.ne.s32.totalorder %s118, %s120
      %p124 = scmp.eq.s32.totalorder %s21, 0
      %p125 = por %p123, %p124
      %p126 = scmp.ne.s32.totalorder %s118, %s120
      %p127 = scmp.eq.s32.totalorder %s26, 1
      %p128 = por %p126, %p127
      %p129 = scmp.ne.s32.totalorder %s120, %s121
      %p130 = scmp.eq.s32.totalorder %s26, 0
      %p131 = por %p129, %p130
      %p132 = scmp.ne.s32.totalorder %s120, %s121
      %p133 = scmp.eq.s32.totalorder %s27, 1
      %p134 = por %p132, %p133
      %p136 = scmp.ne.s32.totalorder %s121, %s135
      %p137 = scmp.eq.s32.totalorder %s27, 0
      %p138 = por %p136, %p137
      %p139 = scmp.lt.s32.totalorder %s21, 0
      %s140 = scalar_select %p139, %s21, 0
      %p141 = scmp.lt.s32.totalorder %s28, 0
      %s142 = scalar_select %p141, %s28, 0
      %s143 = ssub.s32 %s140, %s142
      %p144 = scmp.eq.s32.totalorder %s143, 0
      %s146 = sadd.s32 %s145, 1
      %s147 = scalar_select %p144, %s145, %s146
      %p150 = pneg %p144
      %p151 = scmp.eq.s32.totalorder %s21, 1
      %p152 = por %p150, %p151
      %p153 = scmp.ne.s32.totalorder %s145, %s148
      %p154 = scmp.eq.s32.totalorder %s21, 0
      %p155 = por %p153, %p154
      %p156 = scmp.ne.s32.totalorder %s145, %s148
      %p157 = scmp.eq.s32.totalorder %s26, 1
      %p158 = por %p156, %p157
      %p159 = scmp.ne.s32.totalorder %s148, %s149
      %p160 = scmp.eq.s32.totalorder %s26, 0
      %p161 = por %p159, %p160
      %p162 = scmp.ne.s32.totalorder %s148, %s149
      %p163 = scmp.eq.s32.totalorder %s27, 1
      %p164 = por %p162, %p163
      %p166 = scmp.ne.s32.totalorder %s149, %s165
      %p167 = scmp.eq.s32.totalorder %s27, 0
      %p168 = por %p166, %p167
      %s170 = sadd.s32 %s169, 1
      %p173 = scmp.eq.s32.totalorder %s21, 1
      %p174 = scmp.ne.s32.totalorder %s169, %s171
      %p175 = scmp.eq.s32.totalorder %s21, 0
      %p176 = por %p174, %p175
      %p177 = scmp.ne.s32.totalorder %s169, %s171
      %p178 = scmp.eq.s32.totalorder %s26, 1
      %p179 = por %p177, %p178
      %p180 = scmp.ne.s32.totalorder %s171, %s172
      %p181 = scmp.eq.s32.totalorder %s26, 0
      %p182 = por %p180, %p181
      %p183 = scmp.ne.s32.totalorder %s171, %s172
      %p184 = scmp.eq.s32.totalorder %s27, 1
      %p185 = por %p183, %p184
      %p187 = scmp.ne.s32.totalorder %s172, %s186
      %p188 = scmp.eq.s32.totalorder %s27, 0
      %p189 = por %p187, %p188
      %p190 = scmp.le.s32.totalorder 1, %s21
      %p191 = scmp.lt.s32.totalorder %s21, 3
      %p192 = pnand %p190, %p191
      %p193 = pneg %p192
      // Predicated region
      $region9: #{tpu_custom_call.1} parent=5 // pred_check
        _
      $region10: #{tpu_custom_call.1} parent=5 // pred_check_branch
        %195 = sbr.rel (%p192) target = $region12
      $region11: #{tpu_custom_call.1} parent=5 // pred_region
        %s196 = ssub.s32 %s21, 1
        // Predicated region
        $region13: #{tpu_custom_call.1} parent=11 // pred_check
          %p197 = pneg %p68
        $region14: #{tpu_custom_call.1} parent=11 // pred_check_branch
          %199 = sbr.rel (%p197) target = $region16
        $region15: #{tpu_custom_call.1} parent=11 // pred_region
          %s201 = ssub.s32 32768, 32768
          %202 = vsyncadd [#allocation10], %s201
          %s203 = sshll.u32 [#allocation9], 4
          %s204 = int_to_ptr.vmem [resolvable:$true] %s203
          %209 = dma.hbm_to_vmem [thread:$0]  %s1, 32768, %s204, [#allocation10], 128, 128, 8
        $region16: #{tpu_custom_call.1} parent=11 // pred_fallthru
          _
        // Predicated region
        $region17: #{tpu_custom_call.1} parent=11 // pred_check
          %p210 = pneg %p89
        $region18: #{tpu_custom_call.1} parent=11 // pred_check_branch
          %212 = sbr.rel (%p210) target = $region20
        $region19: #{tpu_custom_call.1} parent=11 // pred_region
          _
        $region20: #{tpu_custom_call.1} parent=11 // pred_fallthru
          _
        // Predicated region
        $region21: #{tpu_custom_call.1} parent=11 // pred_check
          %p213 = pneg %p110
        $region22: #{tpu_custom_call.1} parent=11 // pred_check_branch
          %215 = sbr.rel (%p213) target = $region24
        $region23: #{tpu_custom_call.1} parent=11 // pred_region
          %s217 = ssub.s32 2048, 2048
          %218 = vsyncadd [#allocation10], %s217
          %s219 = sshll.u32 [#allocation11], 4
          %s220 = int_to_ptr.vmem [resolvable:$true] %s219
          %225 = dma.hbm_to_vmem [thread:$0]  %s3, 2048, %s220, [#allocation10], 64, 64, 4
        $region24: #{tpu_custom_call.1} parent=11 // pred_fallthru
          _
        // Predicated region
        $region25: #{tpu_custom_call.1} parent=11 // pred_check
          %p226 = pneg %p131
        $region26: #{tpu_custom_call.1} parent=11 // pred_check_branch
          %228 = sbr.rel (%p226) target = $region28
        $region27: #{tpu_custom_call.1} parent=11 // pred_region
          _
        $region28: #{tpu_custom_call.1} parent=11 // pred_fallthru
          _
      $region12: #{tpu_custom_call.1} parent=5 // pred_fallthru
        _
      %p229 = scmp.lt.s32.totalorder %s21, 2
      // Predicated region
      $region29: #{tpu_custom_call.1} parent=5 // pred_check
        %p230 = pneg %p229
      $region30: #{tpu_custom_call.1} parent=5 // pred_check_branch
        %232 = sbr.rel (%p230) target = $region32
      $region31: #{tpu_custom_call.1} parent=5 // pred_region
        // Predicated region
        $region33: #{tpu_custom_call.1} parent=31 // pred_check
          %p233 = pneg %p41
        $region34: #{tpu_custom_call.1} parent=31 // pred_check_branch
          %235 = sbr.rel (%p233) target = $region36
        $region35: #{tpu_custom_call.1} parent=31 // pred_region
          %s236 = sand.u32 %s31, 1
          %s237 = scalar_lea.sflag [#allocation7], %s236
          %s238 = sand.u32 %s31, 1
          %s239 = smul.addr %s238, 64
          %s240 = scalar_lea.vmem [#allocation6], %s239
          %s242 = ssub.s32 1024, 1024
          %243 = vsyncadd %s237, %s242
          %s244 = smul.addr %s21, 16
          %s245 = smul.addr %s244, 64
          %s246 = scalar_lea.hbm %s0, %s245
          %s248 = sshll.u32 %s240, 4
          %s249 = int_to_ptr.vmem [resolvable:$true] %s248
          %251 = dma.hbm_to_vmem [thread:$0]  %s246, 1024, %s249, %s237
        $region36: #{tpu_custom_call.1} parent=31 // pred_fallthru
          _
      $region32: #{tpu_custom_call.1} parent=5 // pred_fallthru
        _
      %p252 = scmp.le.s32.totalorder 1, %s21
      %p253 = scmp.lt.s32.totalorder %s21, 3
      %p254 = pnand %p252, %p253
      %p255 = pneg %p254
      // Predicated region
      $region37: #{tpu_custom_call.1} parent=5 // pred_check
        _
      $region38: #{tpu_custom_call.1} parent=5 // pred_check_branch
        %257 = sbr.rel (%p254) target = $region40
      $region39: #{tpu_custom_call.1} parent=5 // pred_region
        %s258 = ssub.s32 %s21, 1
        %s259 = sand.u32 %s34, 1
        %s260 = scalar_lea.sflag [#allocation7], %s259
        %s261 = sand.u32 %s34, 1
        %s262 = smul.addr %s261, 64
        %s263 = scalar_lea.vmem [#allocation6], %s262
        // Predicated region
        $region41: #{tpu_custom_call.1} parent=39 // pred_check
          %p264 = pneg %p47
        $region42: #{tpu_custom_call.1} parent=39 // pred_check_branch
          %266 = sbr.rel (%p264) target = $region44
        $region43: #{tpu_custom_call.1} parent=39 // pred_region
          %267 = dma.done %s260, 1024
        $region44: #{tpu_custom_call.1} parent=39 // pred_fallthru
          _
        // Predicated region
        $region45: #{tpu_custom_call.1} parent=39 // pred_check
          %p268 = pneg %p68
        $region46: #{tpu_custom_call.1} parent=39 // pred_check_branch
          %270 = sbr.rel (%p268) target = $region48
        $region47: #{tpu_custom_call.1} parent=39 // pred_region
          %271 = dma.done [#allocation10], 32768
        $region48: #{tpu_custom_call.1} parent=39 // pred_fallthru
          _
        // Predicated region
        $region49: #{tpu_custom_call.1} parent=39 // pred_check
          %p272 = pneg %p110
        $region50: #{tpu_custom_call.1} parent=39 // pred_check_branch
          %274 = sbr.rel (%p272) target = $region52
        $region51: #{tpu_custom_call.1} parent=39 // pred_region
          %275 = dma.done [#allocation10], 2048
        $region52: #{tpu_custom_call.1} parent=39 // pred_fallthru
          _
        %s276 = sand.u32 %s34, 1
        %s277 = scalar_lea.sflag [#allocation7], %s276
        %s278 = sand.u32 %s34, 1
        %s279 = smul.addr %s278, 64
        %s280 = scalar_lea.vmem [#allocation6], %s279
        %p281 = pneg %p47
        %p282 = pneg %p44
        %p283 = pneg %p68
        %p284 = pneg %p65
        %p285 = pneg %p89
        %p286 = pneg %p86
        %p287 = pneg %p110
        %p288 = pneg %p107
        %p289 = pneg %p131
        %p290 = pneg %p128
        %p291 = pneg %p161
        %p292 = pneg %p158
        %s293 = sand.u32 %s148, 1
        %s294 = scalar_lea.sflag [#allocation8], %s293
        %s295 = sand.u32 %s148, 1
        %s296 = smul.addr %s295, 8
        %s297 = scalar_lea.vmem [#allocation12], %s296
        %p298 = pneg %p182
        %p299 = pneg %p179
        %p300 = scmp.lt.s32.totalorder %s26, 0
        %s301 = scalar_select %p300, %s26, 0
        %p303 = scmp.lt.s32.totalorder %s26, 1
        %p304 = scmp.eq.s32.totalorder %s26, 0
        // Predicated region
        $region53: #{tpu_custom_call.1} parent=39 // pred_check
          %p305 = pneg %p304
        $region54: #{tpu_custom_call.1} parent=39 // pred_check_branch
          %307 = sbr.rel (%p305) target = $region56
        $region55: #{tpu_custom_call.1} parent=39 // pred_region
          %v308 = vlaneseq
          %vm309 = vcmp.ge.s32.totalorder %v308, 0
          %vm310 = vcmp.lt.s32.totalorder %v308, 256
          %vm311 = vmand %vm309, %vm310
          %312 = vst.msk [vmem:[#allocation2] sm:$0x3] %vm311, 0.0
          %313 = vst.msk [vmem:[#allocation3] sm:$0x3] %vm311, 0.0
          %314 = vst [vmem:[#allocation4] sm:$0xff] 0.0
          %315 = vst [vmem:[#allocation4 + $0x8] sm:$0xff] 0.0
          %316 = vst [vmem:[#allocation4 + $0x10] sm:$0xff] 0.0
          %317 = vst [vmem:[#allocation4 + $0x18] sm:$0xff] 0.0
          %318 = vst [vmem:[#allocation4 + $0x20] sm:$0xff] 0.0
          %319 = vst [vmem:[#allocation4 + $0x28] sm:$0xff] 0.0
          %320 = vst [vmem:[#allocation4 + $0x30] sm:$0xff] 0.0
          %321 = vst [vmem:[#allocation4 + $0x38] sm:$0xff] 0.0
          %322 = vst [vmem:[#allocation4 + $0x40] sm:$0xff] 0.0
          %323 = vst [vmem:[#allocation4 + $0x48] sm:$0xff] 0.0
          %324 = vst [vmem:[#allocation4 + $0x50] sm:$0xff] 0.0
          %325 = vst [vmem:[#allocation4 + $0x58] sm:$0xff] 0.0
          %326 = vst [vmem:[#allocation4 + $0x60] sm:$0xff] 0.0
          %327 = vst [vmem:[#allocation4 + $0x68] sm:$0xff] 0.0
          %328 = vst [vmem:[#allocation4 + $0x70] sm:$0xff] 0.0
          %329 = vst [vmem:[#allocation4 + $0x78] sm:$0xff] 0.0
          %330 = vst [vmem:[#allocation4 + $0x80] sm:$0xff] 0.0
          %331 = vst [vmem:[#allocation4 + $0x88] sm:$0xff] 0.0
          %332 = vst [vmem:[#allocation4 + $0x90] sm:$0xff] 0.0
          %333 = vst [vmem:[#allocation4 + $0x98] sm:$0xff] 0.0
          %334 = vst [vmem:[#allocation4 + $0xa0] sm:$0xff] 0.0
          %335 = vst [vmem:[#allocation4 + $0xa8] sm:$0xff] 0.0
          %336 = vst [vmem:[#allocation4 + $0xb0] sm:$0xff] 0.0
          %337 = vst [vmem:[#allocation4 + $0xb8] sm:$0xff] 0.0
          %338 = vst [vmem:[#allocation4 + $0xc0] sm:$0xff] 0.0
          %339 = vst [vmem:[#allocation4 + $0xc8] sm:$0xff] 0.0
          %340 = vst [vmem:[#allocation4 + $0xd0] sm:$0xff] 0.0
          %341 = vst [vmem:[#allocation4 + $0xd8] sm:$0xff] 0.0
          %342 = vst [vmem:[#allocation4 + $0xe0] sm:$0xff] 0.0
          %343 = vst [vmem:[#allocation4 + $0xe8] sm:$0xff] 0.0
          %344 = vst [vmem:[#allocation4 + $0xf0] sm:$0xff] 0.0
          %345 = vst [vmem:[#allocation4 + $0xf8] sm:$0xff] 0.0
          %346 = vst [vmem:[#allocation4 + $0x100] sm:$0xff] 0.0
          %347 = vst [vmem:[#allocation4 + $0x108] sm:$0xff] 0.0
          %348 = vst [vmem:[#allocation4 + $0x110] sm:$0xff] 0.0
          %349 = vst [vmem:[#allocation4 + $0x118] sm:$0xff] 0.0
          %350 = vst [vmem:[#allocation4 + $0x120] sm:$0xff] 0.0
          %351 = vst [vmem:[#allocation4 + $0x128] sm:$0xff] 0.0
          %352 = vst [vmem:[#allocation4 + $0x130] sm:$0xff] 0.0
          %353 = vst [vmem:[#allocation4 + $0x138] sm:$0xff] 0.0
          %354 = vst [vmem:[#allocation4 + $0x140] sm:$0xff] 0.0
          %355 = vst [vmem:[#allocation4 + $0x148] sm:$0xff] 0.0
          %356 = vst [vmem:[#allocation4 + $0x150] sm:$0xff] 0.0
          %357 = vst [vmem:[#allocation4 + $0x158] sm:$0xff] 0.0
          %358 = vst [vmem:[#allocation4 + $0x160] sm:$0xff] 0.0
          %359 = vst [vmem:[#allocation4 + $0x168] sm:$0xff] 0.0
          %360 = vst [vmem:[#allocation4 + $0x170] sm:$0xff] 0.0
          %361 = vst [vmem:[#allocation4 + $0x178] sm:$0xff] 0.0
          %362 = vst [vmem:[#allocation4 + $0x180] sm:$0xff] 0.0
          %363 = vst [vmem:[#allocation4 + $0x188] sm:$0xff] 0.0
          %364 = vst [vmem:[#allocation4 + $0x190] sm:$0xff] 0.0
          %365 = vst [vmem:[#allocation4 + $0x198] sm:$0xff] 0.0
          %366 = vst [vmem:[#allocation4 + $0x1a0] sm:$0xff] 0.0
          %367 = vst [vmem:[#allocation4 + $0x1a8] sm:$0xff] 0.0
          %368 = vst [vmem:[#allocation4 + $0x1b0] sm:$0xff] 0.0
          %369 = vst [vmem:[#allocation4 + $0x1b8] sm:$0xff] 0.0
          %370 = vst [vmem:[#allocation4 + $0x1c0] sm:$0xff] 0.0
          %371 = vst [vmem:[#allocation4 + $0x1c8] sm:$0xff] 0.0
          %372 = vst [vmem:[#allocation4 + $0x1d0] sm:$0xff] 0.0
          %373 = vst [vmem:[#allocation4 + $0x1d8] sm:$0xff] 0.0
          %374 = vst [vmem:[#allocation4 + $0x1e0] sm:$0xff] 0.0
          %375 = vst [vmem:[#allocation4 + $0x1e8] sm:$0xff] 0.0
          %376 = vst [vmem:[#allocation4 + $0x1f0] sm:$0xff] 0.0
          %377 = vst [vmem:[#allocation4 + $0x1f8] sm:$0xff] 0.0
          %378 = vst [vmem:[#allocation5] sm:$0xff] 0.0
          %379 = vst [vmem:[#allocation5 + $0x8] sm:$0xff] 0.0
          %380 = vst [vmem:[#allocation5 + $0x10] sm:$0xff] 0.0
          %381 = vst [vmem:[#allocation5 + $0x18] sm:$0xff] 0.0
          %382 = vst [vmem:[#allocation5 + $0x20] sm:$0xff] 0.0
          %383 = vst [vmem:[#allocation5 + $0x28] sm:$0xff] 0.0
          %384 = vst [vmem:[#allocation5 + $0x30] sm:$0xff] 0.0
          %385 = vst [vmem:[#allocation5 + $0x38] sm:$0xff] 0.0
          %386 = vst [vmem:[#allocation5 + $0x40] sm:$0xff] 0.0
          %387 = vst [vmem:[#allocation5 + $0x48] sm:$0xff] 0.0
          %388 = vst [vmem:[#allocation5 + $0x50] sm:$0xff] 0.0
          %389 = vst [vmem:[#allocation5 + $0x58] sm:$0xff] 0.0
          %390 = vst [vmem:[#allocation5 + $0x60] sm:$0xff] 0.0
          %391 = vst [vmem:[#allocation5 + $0x68] sm:$0xff] 0.0
          %392 = vst [vmem:[#allocation5 + $0x70] sm:$0xff] 0.0
          %393 = vst [vmem:[#allocation5 + $0x78] sm:$0xff] 0.0
          %394 = vst [vmem:[#allocation5 + $0x80] sm:$0xff] 0.0
          %395 = vst [vmem:[#allocation5 + $0x88] sm:$0xff] 0.0
          %396 = vst [vmem:[#allocation5 + $0x90] sm:$0xff] 0.0
          %397 = vst [vmem:[#allocation5 + $0x98] sm:$0xff] 0.0
          %398 = vst [vmem:[#allocation5 + $0xa0] sm:$0xff] 0.0
          %399 = vst [vmem:[#allocation5 + $0xa8] sm:$0xff] 0.0
          %400 = vst [vmem:[#allocation5 + $0xb0] sm:$0xff] 0.0
          %401 = vst [vmem:[#allocation5 + $0xb8] sm:$0xff] 0.0
          %402 = vst [vmem:[#allocation5 + $0xc0] sm:$0xff] 0.0
          %403 = vst [vmem:[#allocation5 + $0xc8] sm:$0xff] 0.0
          %404 = vst [vmem:[#allocation5 + $0xd0] sm:$0xff] 0.0
          %405 = vst [vmem:[#allocation5 + $0xd8] sm:$0xff] 0.0
          %406 = vst [vmem:[#allocation5 + $0xe0] sm:$0xff] 0.0
          %407 = vst [vmem:[#allocation5 + $0xe8] sm:$0xff] 0.0
          %408 = vst [vmem:[#allocation5 + $0xf0] sm:$0xff] 0.0
          %409 = vst [vmem:[#allocation5 + $0xf8] sm:$0xff] 0.0
          %410 = vst [vmem:[#allocation5 + $0x100] sm:$0xff] 0.0
          %411 = vst [vmem:[#allocation5 + $0x108] sm:$0xff] 0.0
          %412 = vst [vmem:[#allocation5 + $0x110] sm:$0xff] 0.0
          %413 = vst [vmem:[#allocation5 + $0x118] sm:$0xff] 0.0
          %414 = vst [vmem:[#allocation5 + $0x120] sm:$0xff] 0.0
          %415 = vst [vmem:[#allocation5 + $0x128] sm:$0xff] 0.0
          %416 = vst [vmem:[#allocation5 + $0x130] sm:$0xff] 0.0
          %417 = vst [vmem:[#allocation5 + $0x138] sm:$0xff] 0.0
          %418 = vst [vmem:[#allocation5 + $0x140] sm:$0xff] 0.0
          %419 = vst [vmem:[#allocation5 + $0x148] sm:$0xff] 0.0
          %420 = vst [vmem:[#allocation5 + $0x150] sm:$0xff] 0.0
          %421 = vst [vmem:[#allocation5 + $0x158] sm:$0xff] 0.0
          %422 = vst [vmem:[#allocation5 + $0x160] sm:$0xff] 0.0
          %423 = vst [vmem:[#allocation5 + $0x168] sm:$0xff] 0.0
          %424 = vst [vmem:[#allocation5 + $0x170] sm:$0xff] 0.0
          %425 = vst [vmem:[#allocation5 + $0x178] sm:$0xff] 0.0
          %426 = vst [vmem:[#allocation5 + $0x180] sm:$0xff] 0.0
          %427 = vst [vmem:[#allocation5 + $0x188] sm:$0xff] 0.0
          %428 = vst [vmem:[#allocation5 + $0x190] sm:$0xff] 0.0
          %429 = vst [vmem:[#allocation5 + $0x198] sm:$0xff] 0.0
          %430 = vst [vmem:[#allocation5 + $0x1a0] sm:$0xff] 0.0
          %431 = vst [vmem:[#allocation5 + $0x1a8] sm:$0xff] 0.0
          %432 = vst [vmem:[#allocation5 + $0x1b0] sm:$0xff] 0.0
          %433 = vst [vmem:[#allocation5 + $0x1b8] sm:$0xff] 0.0
          %434 = vst [vmem:[#allocation5 + $0x1c0] sm:$0xff] 0.0
          %435 = vst [vmem:[#allocation5 + $0x1c8] sm:$0xff] 0.0
          %436 = vst [vmem:[#allocation5 + $0x1d0] sm:$0xff] 0.0
          %437 = vst [vmem:[#allocation5 + $0x1d8] sm:$0xff] 0.0
          %438 = vst [vmem:[#allocation5 + $0x1e0] sm:$0xff] 0.0
          %439 = vst [vmem:[#allocation5 + $0x1e8] sm:$0xff] 0.0
          %440 = vst [vmem:[#allocation5 + $0x1f0] sm:$0xff] 0.0
          %441 = vst [vmem:[#allocation5 + $0x1f8] sm:$0xff] 0.0
        $region56: #{tpu_custom_call.1} parent=39 // pred_fallthru
          _
        %v442 = vld [vmem:[%s263] sm:$0xff]
        %v443 = vld [vmem:[%s263 + $0x8] sm:$0xff]
        %v444 = vld [vmem:[%s263 + $0x10] sm:$0xff]
        %v445 = vld [vmem:[%s263 + $0x18] sm:$0xff]
        %v446 = vld [vmem:[%s263 + $0x20] sm:$0xff]
        %v447 = vld [vmem:[%s263 + $0x28] sm:$0xff]
        %v448 = vld [vmem:[%s263 + $0x30] sm:$0xff]
        %v449 = vld [vmem:[%s263 + $0x38] sm:$0xff]
        %v450 = vld [vmem:[#allocation9] sm:$0xff]
        %v451 = vld [vmem:[#allocation9 + $0x8] sm:$0xff]
        %v452 = vld [vmem:[#allocation9 + $0x10] sm:$0xff]
        %v453 = vld [vmem:[#allocation9 + $0x18] sm:$0xff]
        %v454 = vld [vmem:[#allocation9 + $0x20] sm:$0xff]
        %v455 = vld [vmem:[#allocation9 + $0x28] sm:$0xff]
        %v456 = vld [vmem:[#allocation9 + $0x30] sm:$0xff]
        %v457 = vld [vmem:[#allocation9 + $0x38] sm:$0xff]
        %v458 = vld [vmem:[#allocation9 + $0x40] sm:$0xff]
        %v459 = vld [vmem:[#allocation9 + $0x48] sm:$0xff]
        %v460 = vld [vmem:[#allocation9 + $0x50] sm:$0xff]
        %v461 = vld [vmem:[#allocation9 + $0x58] sm:$0xff]
        %v462 = vld [vmem:[#allocation9 + $0x60] sm:$0xff]
        %v463 = vld [vmem:[#allocation9 + $0x68] sm:$0xff]
        %v464 = vld [vmem:[#allocation9 + $0x70] sm:$0xff]
        %v465 = vld [vmem:[#allocation9 + $0x78] sm:$0xff]
        %v466 = vld [vmem:[#allocation9 + $0x80] sm:$0xff]
        %v467 = vld [vmem:[#allocation9 + $0x88] sm:$0xff]
        %v468 = vld [vmem:[#allocation9 + $0x90] sm:$0xff]
        %v469 = vld [vmem:[#allocation9 + $0x98] sm:$0xff]
        %v470 = vld [vmem:[#allocation9 + $0xa0] sm:$0xff]
        %v471 = vld [vmem:[#allocation9 + $0xa8] sm:$0xff]
        %v472 = vld [vmem:[#allocation9 + $0xb0] sm:$0xff]
        %v473 = vld [vmem:[#allocation9 + $0xb8] sm:$0xff]
        %v474 = vld [vmem:[#allocation9 + $0xc0] sm:$0xff]
        %v475 = vld [vmem:[#allocation9 + $0xc8] sm:$0xff]
        %v476 = vld [vmem:[#allocation9 + $0xd0] sm:$0xff]
        %v477 = vld [vmem:[#allocation9 + $0xd8] sm:$0xff]
        %v478 = vld [vmem:[#allocation9 + $0xe0] sm:$0xff]
        %v479 = vld [vmem:[#allocation9 + $0xe8] sm:$0xff]
        %v480 = vld [vmem:[#allocation9 + $0xf0] sm:$0xff]
        %v481 = vld [vmem:[#allocation9 + $0xf8] sm:$0xff]
        %v482 = vld [vmem:[#allocation9 + $0x100] sm:$0xff]
        %v483 = vld [vmem:[#allocation9 + $0x108] sm:$0xff]
        %v484 = vld [vmem:[#allocation9 + $0x110] sm:$0xff]
        %v485 = vld [vmem:[#allocation9 + $0x118] sm:$0xff]
        %v486 = vld [vmem:[#allocation9 + $0x120] sm:$0xff]
        %v487 = vld [vmem:[#allocation9 + $0x128] sm:$0xff]
        %v488 = vld [vmem:[#allocation9 + $0x130] sm:$0xff]
        %v489 = vld [vmem:[#allocation9 + $0x138] sm:$0xff]
        %v490 = vld [vmem:[#allocation9 + $0x140] sm:$0xff]
        %v491 = vld [vmem:[#allocation9 + $0x148] sm:$0xff]
        %v492 = vld [vmem:[#allocation9 + $0x150] sm:$0xff]
        %v493 = vld [vmem:[#allocation9 + $0x158] sm:$0xff]
        %v494 = vld [vmem:[#allocation9 + $0x160] sm:$0xff]
        %v495 = vld [vmem:[#allocation9 + $0x168] sm:$0xff]
        %v496 = vld [vmem:[#allocation9 + $0x170] sm:$0xff]
        %v497 = vld [vmem:[#allocation9 + $0x178] sm:$0xff]
        %v498 = vld [vmem:[#allocation9 + $0x180] sm:$0xff]
        %v499 = vld [vmem:[#allocation9 + $0x188] sm:$0xff]
        %v500 = vld [vmem:[#allocation9 + $0x190] sm:$0xff]
        %v501 = vld [vmem:[#allocation9 + $0x198] sm:$0xff]
        %v502 = vld [vmem:[#allocation9 + $0x1a0] sm:$0xff]
        %v503 = vld [vmem:[#allocation9 + $0x1a8] sm:$0xff]
        %v504 = vld [vmem:[#allocation9 + $0x1b0] sm:$0xff]
        %v505 = vld [vmem:[#allocation9 + $0x1b8] sm:$0xff]
        %v506 = vld [vmem:[#allocation9 + $0x1c0] sm:$0xff]
        %v507 = vld [vmem:[#allocation9 + $0x1c8] sm:$0xff]
        %v508 = vld [vmem:[#allocation9 + $0x1d0] sm:$0xff]
        %v509 = vld [vmem:[#allocation9 + $0x1d8] sm:$0xff]
        %v510 = vld [vmem:[#allocation9 + $0x1e0] sm:$0xff]
        %v511 = vld [vmem:[#allocation9 + $0x1e8] sm:$0xff]
        %v512 = vld [vmem:[#allocation9 + $0x1f0] sm:$0xff]
        %v513 = vld [vmem:[#allocation9 + $0x1f8] sm:$0xff]
        %v514 = vld [vmem:[#allocation9 + $0x200] sm:$0xff]
        %v515 = vld [vmem:[#allocation9 + $0x208] sm:$0xff]
        %v516 = vld [vmem:[#allocation9 + $0x210] sm:$0xff]
        %v517 = vld [vmem:[#allocation9 + $0x218] sm:$0xff]
        %v518 = vld [vmem:[#allocation9 + $0x220] sm:$0xff]
        %v519 = vld [vmem:[#allocation9 + $0x228] sm:$0xff]
        %v520 = vld [vmem:[#allocation9 + $0x230] sm:$0xff]
        %v521 = vld [vmem:[#allocation9 + $0x238] sm:$0xff]
        %v522 = vld [vmem:[#allocation9 + $0x240] sm:$0xff]
        %v523 = vld [vmem:[#allocation9 + $0x248] sm:$0xff]
        %v524 = vld [vmem:[#allocation9 + $0x250] sm:$0xff]
        %v525 = vld [vmem:[#allocation9 + $0x258] sm:$0xff]
        %v526 = vld [vmem:[#allocation9 + $0x260] sm:$0xff]
        %v527 = vld [vmem:[#allocation9 + $0x268] sm:$0xff]
        %v528 = vld [vmem:[#allocation9 + $0x270] sm:$0xff]
        %v529 = vld [vmem:[#allocation9 + $0x278] sm:$0xff]
        %v530 = vld [vmem:[#allocation9 + $0x280] sm:$0xff]
        %v531 = vld [vmem:[#allocation9 + $0x288] sm:$0xff]
        %v532 = vld [vmem:[#allocation9 + $0x290] sm:$0xff]
        %v533 = vld [vmem:[#allocation9 + $0x298] sm:$0xff]
        %v534 = vld [vmem:[#allocation9 + $0x2a0] sm:$0xff]
        %v535 = vld [vmem:[#allocation9 + $0x2a8] sm:$0xff]
        %v536 = vld [vmem:[#allocation9 + $0x2b0] sm:$0xff]
        %v537 = vld [vmem:[#allocation9 + $0x2b8] sm:$0xff]
        %v538 = vld [vmem:[#allocation9 + $0x2c0] sm:$0xff]
        %v539 = vld [vmem:[#allocation9 + $0x2c8] sm:$0xff]
        %v540 = vld [vmem:[#allocation9 + $0x2d0] sm:$0xff]
        %v541 = vld [vmem:[#allocation9 + $0x2d8] sm:$0xff]
        %v542 = vld [vmem:[#allocation9 + $0x2e0] sm:$0xff]
        %v543 = vld [vmem:[#allocation9 + $0x2e8] sm:$0xff]
        %v544 = vld [vmem:[#allocation9 + $0x2f0] sm:$0xff]
        %v545 = vld [vmem:[#allocation9 + $0x2f8] sm:$0xff]
        %v546 = vld [vmem:[#allocation9 + $0x300] sm:$0xff]
        %v547 = vld [vmem:[#allocation9 + $0x308] sm:$0xff]
        %v548 = vld [vmem:[#allocation9 + $0x310] sm:$0xff]
        %v549 = vld [vmem:[#allocation9 + $0x318] sm:$0xff]
        %v550 = vld [vmem:[#allocation9 + $0x320] sm:$0xff]
        %v551 = vld [vmem:[#allocation9 + $0x328] sm:$0xff]
        %v552 = vld [vmem:[#allocation9 + $0x330] sm:$0xff]
        %v553 = vld [vmem:[#allocation9 + $0x338] sm:$0xff]
        %v554 = vld [vmem:[#allocation9 + $0x340] sm:$0xff]
        %v555 = vld [vmem:[#allocation9 + $0x348] sm:$0xff]
        %v556 = vld [vmem:[#allocation9 + $0x350] sm:$0xff]
        %v557 = vld [vmem:[#allocation9 + $0x358] sm:$0xff]
        %v558 = vld [vmem:[#allocation9 + $0x360] sm:$0xff]
        %v559 = vld [vmem:[#allocation9 + $0x368] sm:$0xff]
        %v560 = vld [vmem:[#allocation9 + $0x370] sm:$0xff]
        %v561 = vld [vmem:[#allocation9 + $0x378] sm:$0xff]
        %v562 = vld [vmem:[#allocation9 + $0x380] sm:$0xff]
        %v563 = vld [vmem:[#allocation9 + $0x388] sm:$0xff]
        %v564 = vld [vmem:[#allocation9 + $0x390] sm:$0xff]
        %v565 = vld [vmem:[#allocation9 + $0x398] sm:$0xff]
        %v566 = vld [vmem:[#allocation9 + $0x3a0] sm:$0xff]
        %v567 = vld [vmem:[#allocation9 + $0x3a8] sm:$0xff]
        %v568 = vld [vmem:[#allocation9 + $0x3b0] sm:$0xff]
        %v569 = vld [vmem:[#allocation9 + $0x3b8] sm:$0xff]
        %v570 = vld [vmem:[#allocation9 + $0x3c0] sm:$0xff]
        %v571 = vld [vmem:[#allocation9 + $0x3c8] sm:$0xff]
        %v572 = vld [vmem:[#allocation9 + $0x3d0] sm:$0xff]
        %v573 = vld [vmem:[#allocation9 + $0x3d8] sm:$0xff]
        %v574 = vld [vmem:[#allocation9 + $0x3e0] sm:$0xff]
        %v575 = vld [vmem:[#allocation9 + $0x3e8] sm:$0xff]
        %v576 = vld [vmem:[#allocation9 + $0x3f0] sm:$0xff]
        %v577 = vld [vmem:[#allocation9 + $0x3f8] sm:$0xff]
        %v578 = vld [vmem:[#allocation9 + $0x400] sm:$0xff]
        %v579 = vld [vmem:[#allocation9 + $0x408] sm:$0xff]
        %v580 = vld [vmem:[#allocation9 + $0x410] sm:$0xff]
        %v581 = vld [vmem:[#allocation9 + $0x418] sm:$0xff]
        %v582 = vld [vmem:[#allocation9 + $0x420] sm:$0xff]
        %v583 = vld [vmem:[#allocation9 + $0x428] sm:$0xff]
        %v584 = vld [vmem:[#allocation9 + $0x430] sm:$0xff]
        %v585 = vld [vmem:[#allocation9 + $0x438] sm:$0xff]
        %v586 = vld [vmem:[#allocation9 + $0x440] sm:$0xff]
        %v587 = vld [vmem:[#allocation9 + $0x448] sm:$0xff]
        %v588 = vld [vmem:[#allocation9 + $0x450] sm:$0xff]
        %v589 = vld [vmem:[#allocation9 + $0x458] sm:$0xff]
        %v590 = vld [vmem:[#allocation9 + $0x460] sm:$0xff]
        %v591 = vld [vmem:[#allocation9 + $0x468] sm:$0xff]
        %v592 = vld [vmem:[#allocation9 + $0x470] sm:$0xff]
        %v593 = vld [vmem:[#allocation9 + $0x478] sm:$0xff]
        %v594 = vld [vmem:[#allocation9 + $0x480] sm:$0xff]
        %v595 = vld [vmem:[#allocation9 + $0x488] sm:$0xff]
        %v596 = vld [vmem:[#allocation9 + $0x490] sm:$0xff]
        %v597 = vld [vmem:[#allocation9 + $0x498] sm:$0xff]
        %v598 = vld [vmem:[#allocation9 + $0x4a0] sm:$0xff]
        %v599 = vld [vmem:[#allocation9 + $0x4a8] sm:$0xff]
        %v600 = vld [vmem:[#allocation9 + $0x4b0] sm:$0xff]
        %v601 = vld [vmem:[#allocation9 + $0x4b8] sm:$0xff]
        %v602 = vld [vmem:[#allocation9 + $0x4c0] sm:$0xff]
        %v603 = vld [vmem:[#allocation9 + $0x4c8] sm:$0xff]
        %v604 = vld [vmem:[#allocation9 + $0x4d0] sm:$0xff]
        %v605 = vld [vmem:[#allocation9 + $0x4d8] sm:$0xff]
        %v606 = vld [vmem:[#allocation9 + $0x4e0] sm:$0xff]
        %v607 = vld [vmem:[#allocation9 + $0x4e8] sm:$0xff]
        %v608 = vld [vmem:[#allocation9 + $0x4f0] sm:$0xff]
        %v609 = vld [vmem:[#allocation9 + $0x4f8] sm:$0xff]
        %v610 = vld [vmem:[#allocation9 + $0x500] sm:$0xff]
        %v611 = vld [vmem:[#allocation9 + $0x508] sm:$0xff]
        %v612 = vld [vmem:[#allocation9 + $0x510] sm:$0xff]
        %v613 = vld [vmem:[#allocation9 + $0x518] sm:$0xff]
        %v614 = vld [vmem:[#allocation9 + $0x520] sm:$0xff]
        %v615 = vld [vmem:[#allocation9 + $0x528] sm:$0xff]
        %v616 = vld [vmem:[#allocation9 + $0x530] sm:$0xff]
        %v617 = vld [vmem:[#allocation9 + $0x538] sm:$0xff]
        %v618 = vld [vmem:[#allocation9 + $0x540] sm:$0xff]
        %v619 = vld [vmem:[#allocation9 + $0x548] sm:$0xff]
        %v620 = vld [vmem:[#allocation9 + $0x550] sm:$0xff]
        %v621 = vld [vmem:[#allocation9 + $0x558] sm:$0xff]
        %v622 = vld [vmem:[#allocation9 + $0x560] sm:$0xff]
        %v623 = vld [vmem:[#allocation9 + $0x568] sm:$0xff]
        %v624 = vld [vmem:[#allocation9 + $0x570] sm:$0xff]
        %v625 = vld [vmem:[#allocation9 + $0x578] sm:$0xff]
        %v626 = vld [vmem:[#allocation9 + $0x580] sm:$0xff]
        %v627 = vld [vmem:[#allocation9 + $0x588] sm:$0xff]
        %v628 = vld [vmem:[#allocation9 + $0x590] sm:$0xff]
        %v629 = vld [vmem:[#allocation9 + $0x598] sm:$0xff]
        %v630 = vld [vmem:[#allocation9 + $0x5a0] sm:$0xff]
        %v631 = vld [vmem:[#allocation9 + $0x5a8] sm:$0xff]
        %v632 = vld [vmem:[#allocation9 + $0x5b0] sm:$0xff]
        %v633 = vld [vmem:[#allocation9 + $0x5b8] sm:$0xff]
        %v634 = vld [vmem:[#allocation9 + $0x5c0] sm:$0xff]
        %v635 = vld [vmem:[#allocation9 + $0x5c8] sm:$0xff]
        %v636 = vld [vmem:[#allocation9 + $0x5d0] sm:$0xff]
        %v637 = vld [vmem:[#allocation9 + $0x5d8] sm:$0xff]
        %v638 = vld [vmem:[#allocation9 + $0x5e0] sm:$0xff]
        %v639 = vld [vmem:[#allocation9 + $0x5e8] sm:$0xff]
        %v640 = vld [vmem:[#allocation9 + $0x5f0] sm:$0xff]
        %v641 = vld [vmem:[#allocation9 + $0x5f8] sm:$0xff]
        %v642 = vld [vmem:[#allocation9 + $0x600] sm:$0xff]
        %v643 = vld [vmem:[#allocation9 + $0x608] sm:$0xff]
        %v644 = vld [vmem:[#allocation9 + $0x610] sm:$0xff]
        %v645 = vld [vmem:[#allocation9 + $0x618] sm:$0xff]
        %v646 = vld [vmem:[#allocation9 + $0x620] sm:$0xff]
        %v647 = vld [vmem:[#allocation9 + $0x628] sm:$0xff]
        %v648 = vld [vmem:[#allocation9 + $0x630] sm:$0xff]
        %v649 = vld [vmem:[#allocation9 + $0x638] sm:$0xff]
        %v650 = vld [vmem:[#allocation9 + $0x640] sm:$0xff]
        %v651 = vld [vmem:[#allocation9 + $0x648] sm:$0xff]
        %v652 = vld [vmem:[#allocation9 + $0x650] sm:$0xff]
        %v653 = vld [vmem:[#allocation9 + $0x658] sm:$0xff]
        %v654 = vld [vmem:[#allocation9 + $0x660] sm:$0xff]
        %v655 = vld [vmem:[#allocation9 + $0x668] sm:$0xff]
        %v656 = vld [vmem:[#allocation9 + $0x670] sm:$0xff]
        %v657 = vld [vmem:[#allocation9 + $0x678] sm:$0xff]
        %v658 = vld [vmem:[#allocation9 + $0x680] sm:$0xff]
        %v659 = vld [vmem:[#allocation9 + $0x688] sm:$0xff]
        %v660 = vld [vmem:[#allocation9 + $0x690] sm:$0xff]
        %v661 = vld [vmem:[#allocation9 + $0x698] sm:$0xff]
        %v662 = vld [vmem:[#allocation9 + $0x6a0] sm:$0xff]
        %v663 = vld [vmem:[#allocation9 + $0x6a8] sm:$0xff]
        %v664 = vld [vmem:[#allocation9 + $0x6b0] sm:$0xff]
        %v665 = vld [vmem:[#allocation9 + $0x6b8] sm:$0xff]
        %v666 = vld [vmem:[#allocation9 + $0x6c0] sm:$0xff]
        %v667 = vld [vmem:[#allocation9 + $0x6c8] sm:$0xff]
        %v668 = vld [vmem:[#allocation9 + $0x6d0] sm:$0xff]
        %v669 = vld [vmem:[#allocation9 + $0x6d8] sm:$0xff]
        %v670 = vld [vmem:[#allocation9 + $0x6e0] sm:$0xff]
        %v671 = vld [vmem:[#allocation9 + $0x6e8] sm:$0xff]
        %v672 = vld [vmem:[#allocation9 + $0x6f0] sm:$0xff]
        %v673 = vld [vmem:[#allocation9 + $0x6f8] sm:$0xff]
        %v674 = vld [vmem:[#allocation9 + $0x700] sm:$0xff]
        %v675 = vld [vmem:[#allocation9 + $0x708] sm:$0xff]
        %v676 = vld [vmem:[#allocation9 + $0x710] sm:$0xff]
        %v677 = vld [vmem:[#allocation9 + $0x718] sm:$0xff]
        %v678 = vld [vmem:[#allocation9 + $0x720] sm:$0xff]
        %v679 = vld [vmem:[#allocation9 + $0x728] sm:$0xff]
        %v680 = vld [vmem:[#allocation9 + $0x730] sm:$0xff]
        %v681 = vld [vmem:[#allocation9 + $0x738] sm:$0xff]
        %v682 = vld [vmem:[#allocation9 + $0x740] sm:$0xff]
        %v683 = vld [vmem:[#allocation9 + $0x748] sm:$0xff]
        %v684 = vld [vmem:[#allocation9 + $0x750] sm:$0xff]
        %v685 = vld [vmem:[#allocation9 + $0x758] sm:$0xff]
        %v686 = vld [vmem:[#allocation9 + $0x760] sm:$0xff]
        %v687 = vld [vmem:[#allocation9 + $0x768] sm:$0xff]
        %v688 = vld [vmem:[#allocation9 + $0x770] sm:$0xff]
        %v689 = vld [vmem:[#allocation9 + $0x778] sm:$0xff]
        %v690 = vld [vmem:[#allocation9 + $0x780] sm:$0xff]
        %v691 = vld [vmem:[#allocation9 + $0x788] sm:$0xff]
        %v692 = vld [vmem:[#allocation9 + $0x790] sm:$0xff]
        %v693 = vld [vmem:[#allocation9 + $0x798] sm:$0xff]
        %v694 = vld [vmem:[#allocation9 + $0x7a0] sm:$0xff]
        %v695 = vld [vmem:[#allocation9 + $0x7a8] sm:$0xff]
        %v696 = vld [vmem:[#allocation9 + $0x7b0] sm:$0xff]
        %v697 = vld [vmem:[#allocation9 + $0x7b8] sm:$0xff]
        %v698 = vld [vmem:[#allocation9 + $0x7c0] sm:$0xff]
        %v699 = vld [vmem:[#allocation9 + $0x7c8] sm:$0xff]
        %v700 = vld [vmem:[#allocation9 + $0x7d0] sm:$0xff]
        %v701 = vld [vmem:[#allocation9 + $0x7d8] sm:$0xff]
        %v702 = vld [vmem:[#allocation9 + $0x7e0] sm:$0xff]
        %v703 = vld [vmem:[#allocation9 + $0x7e8] sm:$0xff]
        %v704 = vld [vmem:[#allocation9 + $0x7f0] sm:$0xff]
        %v705 = vld [vmem:[#allocation9 + $0x7f8] sm:$0xff]
        %v706 = vld [vmem:[%s2] sm:$0x3]
        %v708 = vlaneseq
        %v709 = vshrl.u32 %v708, 7
        %v710 = vsub.s32 0, %v709
        %v711 = vrot.slane %v706, %v710
        %v712 = vlaneseq
        %v713 = vshrl.u32 %v712, 7
        %v714 = vsub.s32 1, %v713
        %v715 = vrot.slane %v706, %v714
        %v726 = vunpack.c.l.b16 %v442
        %v727 = vunpack.c.h.b16 %v442
        %v728 = vunpack.c.l.b16 %v443
        %v729 = vunpack.c.h.b16 %v443
        %v730 = vunpack.c.l.b16 %v444
        %v731 = vunpack.c.h.b16 %v444
        %v732 = vunpack.c.l.b16 %v445
        %v733 = vunpack.c.h.b16 %v445
        %v734 = vunpack.c.l.b16 %v446
        %v735 = vunpack.c.h.b16 %v446
        %v736 = vunpack.c.l.b16 %v447
        %v737 = vunpack.c.h.b16 %v447
        %v738 = vunpack.c.l.b16 %v448
        %v739 = vunpack.c.h.b16 %v448
        %v740 = vunpack.c.l.b16 %v449
        %v741 = vunpack.c.h.b16 %v449
        %v742 = vpack.c.b16 %v726, %v726
        %v743 = vpack.c.b16 %v727, %v727
        %v744 = vpack.c.b16 %v728, %v728
        %v745 = vpack.c.b16 %v729, %v729
        %v746 = vpack.c.b16 %v730, %v730
        %v747 = vpack.c.b16 %v731, %v731
        %v748 = vpack.c.b16 %v732, %v732
        %v749 = vpack.c.b16 %v733, %v733
        %v750 = vpack.c.b16 %v734, %v734
        %v751 = vpack.c.b16 %v735, %v735
        %v752 = vpack.c.b16 %v736, %v736
        %v753 = vpack.c.b16 %v737, %v737
        %v754 = vpack.c.b16 %v738, %v738
        %v755 = vpack.c.b16 %v739, %v739
        %v756 = vpack.c.b16 %v740, %v740
        %v757 = vpack.c.b16 %v741, %v741
        %v1030 = vunpack.c.l.b16 %v450
        %v1031 = vunpack.c.h.b16 %v450
        %v1032 = vunpack.c.l.b16 %v451
        %v1033 = vunpack.c.h.b16 %v451
        %v1034 = vunpack.c.l.b16 %v452
        %v1035 = vunpack.c.h.b16 %v452
        %v1036 = vunpack.c.l.b16 %v453
        %v1037 = vunpack.c.h.b16 %v453
        %v1038 = vunpack.c.l.b16 %v454
        %v1039 = vunpack.c.h.b16 %v454
        %v1040 = vunpack.c.l.b16 %v455
        %v1041 = vunpack.c.h.b16 %v455
        %v1042 = vunpack.c.l.b16 %v456
        %v1043 = vunpack.c.h.b16 %v456
        %v1044 = vunpack.c.l.b16 %v457
        %v1045 = vunpack.c.h.b16 %v457
        %v1046 = vunpack.c.l.b16 %v458
        %v1047 = vunpack.c.h.b16 %v458
        %v1048 = vunpack.c.l.b16 %v459
        %v1049 = vunpack.c.h.b16 %v459
        %v1050 = vunpack.c.l.b16 %v460
        %v1051 = vunpack.c.h.b16 %v460
        %v1052 = vunpack.c.l.b16 %v461
        %v1053 = vunpack.c.h.b16 %v461
        %v1054 = vunpack.c.l.b16 %v462
        %v1055 = vunpack.c.h.b16 %v462
        %v1056 = vunpack.c.l.b16 %v463
        %v1057 = vunpack.c.h.b16 %v463
        %v1058 = vunpack.c.l.b16 %v464
        %v1059 = vunpack.c.h.b16 %v464
        %v1060 = vunpack.c.l.b16 %v465
        %v1061 = vunpack.c.h.b16 %v465
        %v1062 = vunpack.c.l.b16 %v466
        %v1063 = vunpack.c.h.b16 %v466
        %v1064 = vunpack.c.l.b16 %v467
        %v1065 = vunpack.c.h.b16 %v467
        %v1066 = vunpack.c.l.b16 %v468
        %v1067 = vunpack.c.h.b16 %v468
        %v1068 = vunpack.c.l.b16 %v469
        %v1069 = vunpack.c.h.b16 %v469
        %v1070 = vunpack.c.l.b16 %v470
        %v1071 = vunpack.c.h.b16 %v470
        %v1072 = vunpack.c.l.b16 %v471
        %v1073 = vunpack.c.h.b16 %v471
        %v1074 = vunpack.c.l.b16 %v472
        %v1075 = vunpack.c.h.b16 %v472
        %v1076 = vunpack.c.l.b16 %v473
        %v1077 = vunpack.c.h.b16 %v473
        %v1078 = vunpack.c.l.b16 %v474
        %v1079 = vunpack.c.h.b16 %v474
        %v1080 = vunpack.c.l.b16 %v475
        %v1081 = vunpack.c.h.b16 %v475
        %v1082 = vunpack.c.l.b16 %v476
        %v1083 = vunpack.c.h.b16 %v476
        %v1084 = vunpack.c.l.b16 %v477
        %v1085 = vunpack.c.h.b16 %v477
        %v1086 = vunpack.c.l.b16 %v478
        %v1087 = vunpack.c.h.b16 %v478
        %v1088 = vunpack.c.l.b16 %v479
        %v1089 = vunpack.c.h.b16 %v479
        %v1090 = vunpack.c.l.b16 %v480
        %v1091 = vunpack.c.h.b16 %v480
        %v1092 = vunpack.c.l.b16 %v481
        %v1093 = vunpack.c.h.b16 %v481
        %v1094 = vunpack.c.l.b16 %v482
        %v1095 = vunpack.c.h.b16 %v482
        %v1096 = vunpack.c.l.b16 %v483
        %v1097 = vunpack.c.h.b16 %v483
        %v1098 = vunpack.c.l.b16 %v484
        %v1099 = vunpack.c.h.b16 %v484
        %v1100 = vunpack.c.l.b16 %v485
        %v1101 = vunpack.c.h.b16 %v485
        %v1102 = vunpack.c.l.b16 %v486
        %v1103 = vunpack.c.h.b16 %v486
        %v1104 = vunpack.c.l.b16 %v487
        %v1105 = vunpack.c.h.b16 %v487
        %v1106 = vunpack.c.l.b16 %v488
        %v1107 = vunpack.c.h.b16 %v488
        %v1108 = vunpack.c.l.b16 %v489
        %v1109 = vunpack.c.h.b16 %v489
        %v1110 = vunpack.c.l.b16 %v490
        %v1111 = vunpack.c.h.b16 %v490
        %v1112 = vunpack.c.l.b16 %v491
        %v1113 = vunpack.c.h.b16 %v491
        %v1114 = vunpack.c.l.b16 %v492
        %v1115 = vunpack.c.h.b16 %v492
        %v1116 = vunpack.c.l.b16 %v493
        %v1117 = vunpack.c.h.b16 %v493
        %v1118 = vunpack.c.l.b16 %v494
        %v1119 = vunpack.c.h.b16 %v494
        %v1120 = vunpack.c.l.b16 %v495
        %v1121 = vunpack.c.h.b16 %v495
        %v1122 = vunpack.c.l.b16 %v496
        %v1123 = vunpack.c.h.b16 %v496
        %v1124 = vunpack.c.l.b16 %v497
        %v1125 = vunpack.c.h.b16 %v497
        %v1126 = vunpack.c.l.b16 %v498
        %v1127 = vunpack.c.h.b16 %v498
        %v1128 = vunpack.c.l.b16 %v499
        %v1129 = vunpack.c.h.b16 %v499
        %v1130 = vunpack.c.l.b16 %v500
        %v1131 = vunpack.c.h.b16 %v500
        %v1132 = vunpack.c.l.b16 %v501
        %v1133 = vunpack.c.h.b16 %v501
        %v1134 = vunpack.c.l.b16 %v502
        %v1135 = vunpack.c.h.b16 %v502
        %v1136 = vunpack.c.l.b16 %v503
        %v1137 = vunpack.c.h.b16 %v503
        %v1138 = vunpack.c.l.b16 %v504
        %v1139 = vunpack.c.h.b16 %v504
        %v1140 = vunpack.c.l.b16 %v505
        %v1141 = vunpack.c.h.b16 %v505
        %v1142 = vunpack.c.l.b16 %v506
        %v1143 = vunpack.c.h.b16 %v506
        %v1144 = vunpack.c.l.b16 %v507
        %v1145 = vunpack.c.h.b16 %v507
        %v1146 = vunpack.c.l.b16 %v508
        %v1147 = vunpack.c.h.b16 %v508
        %v1148 = vunpack.c.l.b16 %v509
        %v1149 = vunpack.c.h.b16 %v509
        %v1150 = vunpack.c.l.b16 %v510
        %v1151 = vunpack.c.h.b16 %v510
        %v1152 = vunpack.c.l.b16 %v511
        %v1153 = vunpack.c.h.b16 %v511
        %v1154 = vunpack.c.l.b16 %v512
        %v1155 = vunpack.c.h.b16 %v512
        %v1156 = vunpack.c.l.b16 %v513
        %v1157 = vunpack.c.h.b16 %v513
        %v1158 = vunpack.c.l.b16 %v514
        %v1159 = vunpack.c.h.b16 %v514
        %v1160 = vunpack.c.l.b16 %v515
        %v1161 = vunpack.c.h.b16 %v515
        %v1162 = vunpack.c.l.b16 %v516
        %v1163 = vunpack.c.h.b16 %v516
        %v1164 = vunpack.c.l.b16 %v517
        %v1165 = vunpack.c.h.b16 %v517
        %v1166 = vunpack.c.l.b16 %v518
        %v1167 = vunpack.c.h.b16 %v518
        %v1168 = vunpack.c.l.b16 %v519
        %v1169 = vunpack.c.h.b16 %v519
        %v1170 = vunpack.c.l.b16 %v520
        %v1171 = vunpack.c.h.b16 %v520
        %v1172 = vunpack.c.l.b16 %v521
        %v1173 = vunpack.c.h.b16 %v521
        %v1174 = vunpack.c.l.b16 %v522
        %v1175 = vunpack.c.h.b16 %v522
        %v1176 = vunpack.c.l.b16 %v523
        %v1177 = vunpack.c.h.b16 %v523
        %v1178 = vunpack.c.l.b16 %v524
        %v1179 = vunpack.c.h.b16 %v524
        %v1180 = vunpack.c.l.b16 %v525
        %v1181 = vunpack.c.h.b16 %v525
        %v1182 = vunpack.c.l.b16 %v526
        %v1183 = vunpack.c.h.b16 %v526
        %v1184 = vunpack.c.l.b16 %v527
        %v1185 = vunpack.c.h.b16 %v527
        %v1186 = vunpack.c.l.b16 %v528
        %v1187 = vunpack.c.h.b16 %v528
        %v1188 = vunpack.c.l.b16 %v529
        %v1189 = vunpack.c.h.b16 %v529
        %v1190 = vunpack.c.l.b16 %v530
        %v1191 = vunpack.c.h.b16 %v530
        %v1192 = vunpack.c.l.b16 %v531
        %v1193 = vunpack.c.h.b16 %v531
        %v1194 = vunpack.c.l.b16 %v532
        %v1195 = vunpack.c.h.b16 %v532
        %v1196 = vunpack.c.l.b16 %v533
        %v1197 = vunpack.c.h.b16 %v533
        %v1198 = vunpack.c.l.b16 %v534
        %v1199 = vunpack.c.h.b16 %v534
        %v1200 = vunpack.c.l.b16 %v535
        %v1201 = vunpack.c.h.b16 %v535
        %v1202 = vunpack.c.l.b16 %v536
        %v1203 = vunpack.c.h.b16 %v536
        %v1204 = vunpack.c.l.b16 %v537
        %v1205 = vunpack.c.h.b16 %v537
        %v1206 = vunpack.c.l.b16 %v538
        %v1207 = vunpack.c.h.b16 %v538
        %v1208 = vunpack.c.l.b16 %v539
        %v1209 = vunpack.c.h.b16 %v539
        %v1210 = vunpack.c.l.b16 %v540
        %v1211 = vunpack.c.h.b16 %v540
        %v1212 = vunpack.c.l.b16 %v541
        %v1213 = vunpack.c.h.b16 %v541
        %v1214 = vunpack.c.l.b16 %v542
        %v1215 = vunpack.c.h.b16 %v542
        %v1216 = vunpack.c.l.b16 %v543
        %v1217 = vunpack.c.h.b16 %v543
        %v1218 = vunpack.c.l.b16 %v544
        %v1219 = vunpack.c.h.b16 %v544
        %v1220 = vunpack.c.l.b16 %v545
        %v1221 = vunpack.c.h.b16 %v545
        %v1222 = vunpack.c.l.b16 %v546
        %v1223 = vunpack.c.h.b16 %v546
        %v1224 = vunpack.c.l.b16 %v547
        %v1225 = vunpack.c.h.b16 %v547
        %v1226 = vunpack.c.l.b16 %v548
        %v1227 = vunpack.c.h.b16 %v548
        %v1228 = vunpack.c.l.b16 %v549
        %v1229 = vunpack.c.h.b16 %v549
        %v1230 = vunpack.c.l.b16 %v550
        %v1231 = vunpack.c.h.b16 %v550
        %v1232 = vunpack.c.l.b16 %v551
        %v1233 = vunpack.c.h.b16 %v551
        %v1234 = vunpack.c.l.b16 %v552
        %v1235 = vunpack.c.h.b16 %v552
        %v1236 = vunpack.c.l.b16 %v553
        %v1237 = vunpack.c.h.b16 %v553
        %v1238 = vunpack.c.l.b16 %v554
        %v1239 = vunpack.c.h.b16 %v554
        %v1240 = vunpack.c.l.b16 %v555
        %v1241 = vunpack.c.h.b16 %v555
        %v1242 = vunpack.c.l.b16 %v556
        %v1243 = vunpack.c.h.b16 %v556
        %v1244 = vunpack.c.l.b16 %v557
        %v1245 = vunpack.c.h.b16 %v557
        %v1246 = vunpack.c.l.b16 %v558
        %v1247 = vunpack.c.h.b16 %v558
        %v1248 = vunpack.c.l.b16 %v559
        %v1249 = vunpack.c.h.b16 %v559
        %v1250 = vunpack.c.l.b16 %v560
        %v1251 = vunpack.c.h.b16 %v560
        %v1252 = vunpack.c.l.b16 %v561
        %v1253 = vunpack.c.h.b16 %v561
        %v1254 = vunpack.c.l.b16 %v562
        %v1255 = vunpack.c.h.b16 %v562
        %v1256 = vunpack.c.l.b16 %v563
        %v1257 = vunpack.c.h.b16 %v563
        %v1258 = vunpack.c.l.b16 %v564
        %v1259 = vunpack.c.h.b16 %v564
        %v1260 = vunpack.c.l.b16 %v565
        %v1261 = vunpack.c.h.b16 %v565
        %v1262 = vunpack.c.l.b16 %v566
        %v1263 = vunpack.c.h.b16 %v566
        %v1264 = vunpack.c.l.b16 %v567
        %v1265 = vunpack.c.h.b16 %v567
        %v1266 = vunpack.c.l.b16 %v568
        %v1267 = vunpack.c.h.b16 %v568
        %v1268 = vunpack.c.l.b16 %v569
        %v1269 = vunpack.c.h.b16 %v569
        %v1270 = vunpack.c.l.b16 %v570
        %v1271 = vunpack.c.h.b16 %v570
        %v1272 = vunpack.c.l.b16 %v571
        %v1273 = vunpack.c.h.b16 %v571
        %v1274 = vunpack.c.l.b16 %v572
        %v1275 = vunpack.c.h.b16 %v572
        %v1276 = vunpack.c.l.b16 %v573
        %v1277 = vunpack.c.h.b16 %v573
        %v1278 = vunpack.c.l.b16 %v574
        %v1279 = vunpack.c.h.b16 %v574
        %v1280 = vunpack.c.l.b16 %v575
        %v1281 = vunpack.c.h.b16 %v575
        %v1282 = vunpack.c.l.b16 %v576
        %v1283 = vunpack.c.h.b16 %v576
        %v1284 = vunpack.c.l.b16 %v577
        %v1285 = vunpack.c.h.b16 %v577
        %v1286 = vunpack.c.l.b16 %v578
        %v1287 = vunpack.c.h.b16 %v578
        %v1288 = vunpack.c.l.b16 %v579
        %v1289 = vunpack.c.h.b16 %v579
        %v1290 = vunpack.c.l.b16 %v580
        %v1291 = vunpack.c.h.b16 %v580
        %v1292 = vunpack.c.l.b16 %v581
        %v1293 = vunpack.c.h.b16 %v581
        %v1294 = vunpack.c.l.b16 %v582
        %v1295 = vunpack.c.h.b16 %v582
        %v1296 = vunpack.c.l.b16 %v583
        %v1297 = vunpack.c.h.b16 %v583
        %v1298 = vunpack.c.l.b16 %v584
        %v1299 = vunpack.c.h.b16 %v584
        %v1300 = vunpack.c.l.b16 %v585
        %v1301 = vunpack.c.h.b16 %v585
        %v1302 = vunpack.c.l.b16 %v586
        %v1303 = vunpack.c.h.b16 %v586
        %v1304 = vunpack.c.l.b16 %v587
        %v1305 = vunpack.c.h.b16 %v587
        %v1306 = vunpack.c.l.b16 %v588
        %v1307 = vunpack.c.h.b16 %v588
        %v1308 = vunpack.c.l.b16 %v589
        %v1309 = vunpack.c.h.b16 %v589
        %v1310 = vunpack.c.l.b16 %v590
        %v1311 = vunpack.c.h.b16 %v590
        %v1312 = vunpack.c.l.b16 %v591
        %v1313 = vunpack.c.h.b16 %v591
        %v1314 = vunpack.c.l.b16 %v592
        %v1315 = vunpack.c.h.b16 %v592
        %v1316 = vunpack.c.l.b16 %v593
        %v1317 = vunpack.c.h.b16 %v593
        %v1318 = vunpack.c.l.b16 %v594
        %v1319 = vunpack.c.h.b16 %v594
        %v1320 = vunpack.c.l.b16 %v595
        %v1321 = vunpack.c.h.b16 %v595
        %v1322 = vunpack.c.l.b16 %v596
        %v1323 = vunpack.c.h.b16 %v596
        %v1324 = vunpack.c.l.b16 %v597
        %v1325 = vunpack.c.h.b16 %v597
        %v1326 = vunpack.c.l.b16 %v598
        %v1327 = vunpack.c.h.b16 %v598
        %v1328 = vunpack.c.l.b16 %v599
        %v1329 = vunpack.c.h.b16 %v599
        %v1330 = vunpack.c.l.b16 %v600
        %v1331 = vunpack.c.h.b16 %v600
        %v1332 = vunpack.c.l.b16 %v601
        %v1333 = vunpack.c.h.b16 %v601
        %v1334 = vunpack.c.l.b16 %v602
        %v1335 = vunpack.c.h.b16 %v602
        %v1336 = vunpack.c.l.b16 %v603
        %v1337 = vunpack.c.h.b16 %v603
        %v1338 = vunpack.c.l.b16 %v604
        %v1339 = vunpack.c.h.b16 %v604
        %v1340 = vunpack.c.l.b16 %v605
        %v1341 = vunpack.c.h.b16 %v605
        %v1342 = vunpack.c.l.b16 %v606
        %v1343 = vunpack.c.h.b16 %v606
        %v1344 = vunpack.c.l.b16 %v607
        %v1345 = vunpack.c.h.b16 %v607
        %v1346 = vunpack.c.l.b16 %v608
        %v1347 = vunpack.c.h.b16 %v608
        %v1348 = vunpack.c.l.b16 %v609
        %v1349 = vunpack.c.h.b16 %v609
        %v1350 = vunpack.c.l.b16 %v610
        %v1351 = vunpack.c.h.b16 %v610
        %v1352 = vunpack.c.l.b16 %v611
        %v1353 = vunpack.c.h.b16 %v611
        %v1354 = vunpack.c.l.b16 %v612
        %v1355 = vunpack.c.h.b16 %v612
        %v1356 = vunpack.c.l.b16 %v613
        %v1357 = vunpack.c.h.b16 %v613
        %v1358 = vunpack.c.l.b16 %v614
        %v1359 = vunpack.c.h.b16 %v614
        %v1360 = vunpack.c.l.b16 %v615
        %v1361 = vunpack.c.h.b16 %v615
        %v1362 = vunpack.c.l.b16 %v616
        %v1363 = vunpack.c.h.b16 %v616
        %v1364 = vunpack.c.l.b16 %v617
        %v1365 = vunpack.c.h.b16 %v617
        %v1366 = vunpack.c.l.b16 %v618
        %v1367 = vunpack.c.h.b16 %v618
        %v1368 = vunpack.c.l.b16 %v619
        %v1369 = vunpack.c.h.b16 %v619
        %v1370 = vunpack.c.l.b16 %v620
        %v1371 = vunpack.c.h.b16 %v620
        %v1372 = vunpack.c.l.b16 %v621
        %v1373 = vunpack.c.h.b16 %v621
        %v1374 = vunpack.c.l.b16 %v622
        %v1375 = vunpack.c.h.b16 %v622
        %v1376 = vunpack.c.l.b16 %v623
        %v1377 = vunpack.c.h.b16 %v623
        %v1378 = vunpack.c.l.b16 %v624
        %v1379 = vunpack.c.h.b16 %v624
        %v1380 = vunpack.c.l.b16 %v625
        %v1381 = vunpack.c.h.b16 %v625
        %v1382 = vunpack.c.l.b16 %v626
        %v1383 = vunpack.c.h.b16 %v626
        %v1384 = vunpack.c.l.b16 %v627
        %v1385 = vunpack.c.h.b16 %v627
        %v1386 = vunpack.c.l.b16 %v628
        %v1387 = vunpack.c.h.b16 %v628
        %v1388 = vunpack.c.l.b16 %v629
        %v1389 = vunpack.c.h.b16 %v629
        %v1390 = vunpack.c.l.b16 %v630
        %v1391 = vunpack.c.h.b16 %v630
        %v1392 = vunpack.c.l.b16 %v631
        %v1393 = vunpack.c.h.b16 %v631
        %v1394 = vunpack.c.l.b16 %v632
        %v1395 = vunpack.c.h.b16 %v632
        %v1396 = vunpack.c.l.b16 %v633
        %v1397 = vunpack.c.h.b16 %v633
        %v1398 = vunpack.c.l.b16 %v634
        %v1399 = vunpack.c.h.b16 %v634
        %v1400 = vunpack.c.l.b16 %v635
        %v1401 = vunpack.c.h.b16 %v635
        %v1402 = vunpack.c.l.b16 %v636
        %v1403 = vunpack.c.h.b16 %v636
        %v1404 = vunpack.c.l.b16 %v637
        %v1405 = vunpack.c.h.b16 %v637
        %v1406 = vunpack.c.l.b16 %v638
        %v1407 = vunpack.c.h.b16 %v638
        %v1408 = vunpack.c.l.b16 %v639
        %v1409 = vunpack.c.h.b16 %v639
        %v1410 = vunpack.c.l.b16 %v640
        %v1411 = vunpack.c.h.b16 %v640
        %v1412 = vunpack.c.l.b16 %v641
        %v1413 = vunpack.c.h.b16 %v641
        %v1414 = vunpack.c.l.b16 %v642
        %v1415 = vunpack.c.h.b16 %v642
        %v1416 = vunpack.c.l.b16 %v643
        %v1417 = vunpack.c.h.b16 %v643
        %v1418 = vunpack.c.l.b16 %v644
        %v1419 = vunpack.c.h.b16 %v644
        %v1420 = vunpack.c.l.b16 %v645
        %v1421 = vunpack.c.h.b16 %v645
        %v1422 = vunpack.c.l.b16 %v646
        %v1423 = vunpack.c.h.b16 %v646
        %v1424 = vunpack.c.l.b16 %v647
        %v1425 = vunpack.c.h.b16 %v647
        %v1426 = vunpack.c.l.b16 %v648
        %v1427 = vunpack.c.h.b16 %v648
        %v1428 = vunpack.c.l.b16 %v649
        %v1429 = vunpack.c.h.b16 %v649
        %v1430 = vunpack.c.l.b16 %v650
        %v1431 = vunpack.c.h.b16 %v650
        %v1432 = vunpack.c.l.b16 %v651
        %v1433 = vunpack.c.h.b16 %v651
        %v1434 = vunpack.c.l.b16 %v652
        %v1435 = vunpack.c.h.b16 %v652
        %v1436 = vunpack.c.l.b16 %v653
        %v1437 = vunpack.c.h.b16 %v653
        %v1438 = vunpack.c.l.b16 %v654
        %v1439 = vunpack.c.h.b16 %v654
        %v1440 = vunpack.c.l.b16 %v655
        %v1441 = vunpack.c.h.b16 %v655
        %v1442 = vunpack.c.l.b16 %v656
        %v1443 = vunpack.c.h.b16 %v656
        %v1444 = vunpack.c.l.b16 %v657
        %v1445 = vunpack.c.h.b16 %v657
        %v1446 = vunpack.c.l.b16 %v658
        %v1447 = vunpack.c.h.b16 %v658
        %v1448 = vunpack.c.l.b16 %v659
        %v1449 = vunpack.c.h.b16 %v659
        %v1450 = vunpack.c.l.b16 %v660
        %v1451 = vunpack.c.h.b16 %v660
        %v1452 = vunpack.c.l.b16 %v661
        %v1453 = vunpack.c.h.b16 %v661
        %v1454 = vunpack.c.l.b16 %v662
        %v1455 = vunpack.c.h.b16 %v662
        %v1456 = vunpack.c.l.b16 %v663
        %v1457 = vunpack.c.h.b16 %v663
        %v1458 = vunpack.c.l.b16 %v664
        %v1459 = vunpack.c.h.b16 %v664
        %v1460 = vunpack.c.l.b16 %v665
        %v1461 = vunpack.c.h.b16 %v665
        %v1462 = vunpack.c.l.b16 %v666
        %v1463 = vunpack.c.h.b16 %v666
        %v1464 = vunpack.c.l.b16 %v667
        %v1465 = vunpack.c.h.b16 %v667
        %v1466 = vunpack.c.l.b16 %v668
        %v1467 = vunpack.c.h.b16 %v668
        %v1468 = vunpack.c.l.b16 %v669
        %v1469 = vunpack.c.h.b16 %v669
        %v1470 = vunpack.c.l.b16 %v670
        %v1471 = vunpack.c.h.b16 %v670
        %v1472 = vunpack.c.l.b16 %v671
        %v1473 = vunpack.c.h.b16 %v671
        %v1474 = vunpack.c.l.b16 %v672
        %v1475 = vunpack.c.h.b16 %v672
        %v1476 = vunpack.c.l.b16 %v673
        %v1477 = vunpack.c.h.b16 %v673
        %v1478 = vunpack.c.l.b16 %v674
        %v1479 = vunpack.c.h.b16 %v674
        %v1480 = vunpack.c.l.b16 %v675
        %v1481 = vunpack.c.h.b16 %v675
        %v1482 = vunpack.c.l.b16 %v676
        %v1483 = vunpack.c.h.b16 %v676
        %v1484 = vunpack.c.l.b16 %v677
        %v1485 = vunpack.c.h.b16 %v677
        %v1486 = vunpack.c.l.b16 %v678
        %v1487 = vunpack.c.h.b16 %v678
        %v1488 = vunpack.c.l.b16 %v679
        %v1489 = vunpack.c.h.b16 %v679
        %v1490 = vunpack.c.l.b16 %v680
        %v1491 = vunpack.c.h.b16 %v680
        %v1492 = vunpack.c.l.b16 %v681
        %v1493 = vunpack.c.h.b16 %v681
        %v1494 = vunpack.c.l.b16 %v682
        %v1495 = vunpack.c.h.b16 %v682
        %v1496 = vunpack.c.l.b16 %v683
        %v1497 = vunpack.c.h.b16 %v683
        %v1498 = vunpack.c.l.b16 %v684
        %v1499 = vunpack.c.h.b16 %v684
        %v1500 = vunpack.c.l.b16 %v685
        %v1501 = vunpack.c.h.b16 %v685
        %v1502 = vunpack.c.l.b16 %v686
        %v1503 = vunpack.c.h.b16 %v686
        %v1504 = vunpack.c.l.b16 %v687
        %v1505 = vunpack.c.h.b16 %v687
        %v1506 = vunpack.c.l.b16 %v688
        %v1507 = vunpack.c.h.b16 %v688
        %v1508 = vunpack.c.l.b16 %v689
        %v1509 = vunpack.c.h.b16 %v689
        %v1510 = vunpack.c.l.b16 %v690
        %v1511 = vunpack.c.h.b16 %v690
        %v1512 = vunpack.c.l.b16 %v691
        %v1513 = vunpack.c.h.b16 %v691
        %v1514 = vunpack.c.l.b16 %v692
        %v1515 = vunpack.c.h.b16 %v692
        %v1516 = vunpack.c.l.b16 %v693
        %v1517 = vunpack.c.h.b16 %v693
        %v1518 = vunpack.c.l.b16 %v694
        %v1519 = vunpack.c.h.b16 %v694
        %v1520 = vunpack.c.l.b16 %v695
        %v1521 = vunpack.c.h.b16 %v695
        %v1522 = vunpack.c.l.b16 %v696
        %v1523 = vunpack.c.h.b16 %v696
        %v1524 = vunpack.c.l.b16 %v697
        %v1525 = vunpack.c.h.b16 %v697
        %v1526 = vunpack.c.l.b16 %v698
        %v1527 = vunpack.c.h.b16 %v698
        %v1528 = vunpack.c.l.b16 %v699
        %v1529 = vunpack.c.h.b16 %v699
        %v1530 = vunpack.c.l.b16 %v700
        %v1531 = vunpack.c.h.b16 %v700
        %v1532 = vunpack.c.l.b16 %v701
        %v1533 = vunpack.c.h.b16 %v701
        %v1534 = vunpack.c.l.b16 %v702
        %v1535 = vunpack.c.h.b16 %v702
        %v1536 = vunpack.c.l.b16 %v703
        %v1537 = vunpack.c.h.b16 %v703
        %v1538 = vunpack.c.l.b16 %v704
        %v1539 = vunpack.c.h.b16 %v704
        %v1540 = vunpack.c.l.b16 %v705
        %v1541 = vunpack.c.h.b16 %v705
        %v1542 = vpack.c.b16 %v1032, %v1030
        %v1543 = vpack.c.b16 %v1033, %v1031
        %v1544 = vpack.c.b16 %v1036, %v1034
        %v1545 = vpack.c.b16 %v1037, %v1035
        %v1546 = vpack.c.b16 %v1040, %v1038
        %v1547 = vpack.c.b16 %v1041, %v1039
        %v1548 = vpack.c.b16 %v1044, %v1042
        %v1549 = vpack.c.b16 %v1045, %v1043
        %v1550 = vpack.c.b16 %v1048, %v1046
        %v1551 = vpack.c.b16 %v1049, %v1047
        %v1552 = vpack.c.b16 %v1052, %v1050
        %v1553 = vpack.c.b16 %v1053, %v1051
        %v1554 = vpack.c.b16 %v1056, %v1054
        %v1555 = vpack.c.b16 %v1057, %v1055
        %v1556 = vpack.c.b16 %v1060, %v1058
        %v1557 = vpack.c.b16 %v1061, %v1059
        %v1558 = vpack.c.b16 %v1064, %v1062
        %v1559 = vpack.c.b16 %v1065, %v1063
        %v1560 = vpack.c.b16 %v1068, %v1066
        %v1561 = vpack.c.b16 %v1069, %v1067
        %v1562 = vpack.c.b16 %v1072, %v1070
        %v1563 = vpack.c.b16 %v1073, %v1071
        %v1564 = vpack.c.b16 %v1076, %v1074
        %v1565 = vpack.c.b16 %v1077, %v1075
        %v1566 = vpack.c.b16 %v1080, %v1078
        %v1567 = vpack.c.b16 %v1081, %v1079
        %v1568 = vpack.c.b16 %v1084, %v1082
        %v1569 = vpack.c.b16 %v1085, %v1083
        %v1570 = vpack.c.b16 %v1088, %v1086
        %v1571 = vpack.c.b16 %v1089, %v1087
        %v1572 = vpack.c.b16 %v1092, %v1090
        %v1573 = vpack.c.b16 %v1093, %v1091
        %v1574 = vpack.c.b16 %v1096, %v1094
        %v1575 = vpack.c.b16 %v1097, %v1095
        %v1576 = vpack.c.b16 %v1100, %v1098
        %v1577 = vpack.c.b16 %v1101, %v1099
        %v1578 = vpack.c.b16 %v1104, %v1102
        %v1579 = vpack.c.b16 %v1105, %v1103
        %v1580 = vpack.c.b16 %v1108, %v1106
        %v1581 = vpack.c.b16 %v1109, %v1107
        %v1582 = vpack.c.b16 %v1112, %v1110
        %v1583 = vpack.c.b16 %v1113, %v1111
        %v1584 = vpack.c.b16 %v1116, %v1114
        %v1585 = vpack.c.b16 %v1117, %v1115
        %v1586 = vpack.c.b16 %v1120, %v1118
        %v1587 = vpack.c.b16 %v1121, %v1119
        %v1588 = vpack.c.b16 %v1124, %v1122
        %v1589 = vpack.c.b16 %v1125, %v1123
        %v1590 = vpack.c.b16 %v1128, %v1126
        %v1591 = vpack.c.b16 %v1129, %v1127
        %v1592 = vpack.c.b16 %v1132, %v1130
        %v1593 = vpack.c.b16 %v1133, %v1131
        %v1594 = vpack.c.b16 %v1136, %v1134
        %v1595 = vpack.c.b16 %v1137, %v1135
        %v1596 = vpack.c.b16 %v1140, %v1138
        %v1597 = vpack.c.b16 %v1141, %v1139
        %v1598 = vpack.c.b16 %v1144, %v1142
        %v1599 = vpack.c.b16 %v1145, %v1143
        %v1600 = vpack.c.b16 %v1148, %v1146
        %v1601 = vpack.c.b16 %v1149, %v1147
        %v1602 = vpack.c.b16 %v1152, %v1150
        %v1603 = vpack.c.b16 %v1153, %v1151
        %v1604 = vpack.c.b16 %v1156, %v1154
        %v1605 = vpack.c.b16 %v1157, %v1155
        %v1606 = vpack.c.b16 %v1160, %v1158
        %v1607 = vpack.c.b16 %v1161, %v1159
        %v1608 = vpack.c.b16 %v1164, %v1162
        %v1609 = vpack.c.b16 %v1165, %v1163
        %v1610 = vpack.c.b16 %v1168, %v1166
        %v1611 = vpack.c.b16 %v1169, %v1167
        %v1612 = vpack.c.b16 %v1172, %v1170
        %v1613 = vpack.c.b16 %v1173, %v1171
        %v1614 = vpack.c.b16 %v1176, %v1174
        %v1615 = vpack.c.b16 %v1177, %v1175
        %v1616 = vpack.c.b16 %v1180, %v1178
        %v1617 = vpack.c.b16 %v1181, %v1179
        %v1618 = vpack.c.b16 %v1184, %v1182
        %v1619 = vpack.c.b16 %v1185, %v1183
        %v1620 = vpack.c.b16 %v1188, %v1186
        %v1621 = vpack.c.b16 %v1189, %v1187
        %v1622 = vpack.c.b16 %v1192, %v1190
        %v1623 = vpack.c.b16 %v1193, %v1191
        %v1624 = vpack.c.b16 %v1196, %v1194
        %v1625 = vpack.c.b16 %v1197, %v1195
        %v1626 = vpack.c.b16 %v1200, %v1198
        %v1627 = vpack.c.b16 %v1201, %v1199
        %v1628 = vpack.c.b16 %v1204, %v1202
        %v1629 = vpack.c.b16 %v1205, %v1203
        %v1630 = vpack.c.b16 %v1208, %v1206
        %v1631 = vpack.c.b16 %v1209, %v1207
        %v1632 = vpack.c.b16 %v1212, %v1210
        %v1633 = vpack.c.b16 %v1213, %v1211
        %v1634 = vpack.c.b16 %v1216, %v1214
        %v1635 = vpack.c.b16 %v1217, %v1215
        %v1636 = vpack.c.b16 %v1220, %v1218
        %v1637 = vpack.c.b16 %v1221, %v1219
        %v1638 = vpack.c.b16 %v1224, %v1222
        %v1639 = vpack.c.b16 %v1225, %v1223
        %v1640 = vpack.c.b16 %v1228, %v1226
        %v1641 = vpack.c.b16 %v1229, %v1227
        %v1642 = vpack.c.b16 %v1232, %v1230
        %v1643 = vpack.c.b16 %v1233, %v1231
        %v1644 = vpack.c.b16 %v1236, %v1234
        %v1645 = vpack.c.b16 %v1237, %v1235
        %v1646 = vpack.c.b16 %v1240, %v1238
        %v1647 = vpack.c.b16 %v1241, %v1239
        %v1648 = vpack.c.b16 %v1244, %v1242
        %v1649 = vpack.c.b16 %v1245, %v1243
        %v1650 = vpack.c.b16 %v1248, %v1246
        %v1651 = vpack.c.b16 %v1249, %v1247
        %v1652 = vpack.c.b16 %v1252, %v1250
        %v1653 = vpack.c.b16 %v1253, %v1251
        %v1654 = vpack.c.b16 %v1256, %v1254
        %v1655 = vpack.c.b16 %v1257, %v1255
        %v1656 = vpack.c.b16 %v1260, %v1258
        %v1657 = vpack.c.b16 %v1261, %v1259
        %v1658 = vpack.c.b16 %v1264, %v1262
        %v1659 = vpack.c.b16 %v1265, %v1263
        %v1660 = vpack.c.b16 %v1268, %v1266
        %v1661 = vpack.c.b16 %v1269, %v1267
        %v1662 = vpack.c.b16 %v1272, %v1270
        %v1663 = vpack.c.b16 %v1273, %v1271
        %v1664 = vpack.c.b16 %v1276, %v1274
        %v1665 = vpack.c.b16 %v1277, %v1275
        %v1666 = vpack.c.b16 %v1280, %v1278
        %v1667 = vpack.c.b16 %v1281, %v1279
        %v1668 = vpack.c.b16 %v1284, %v1282
        %v1669 = vpack.c.b16 %v1285, %v1283
        %v1670 = vpack.c.b16 %v1288, %v1286
        %v1671 = vpack.c.b16 %v1289, %v1287
        %v1672 = vpack.c.b16 %v1292, %v1290
        %v1673 = vpack.c.b16 %v1293, %v1291
        %v1674 = vpack.c.b16 %v1296, %v1294
        %v1675 = vpack.c.b16 %v1297, %v1295
        %v1676 = vpack.c.b16 %v1300, %v1298
        %v1677 = vpack.c.b16 %v1301, %v1299
        %v1678 = vpack.c.b16 %v1304, %v1302
        %v1679 = vpack.c.b16 %v1305, %v1303
        %v1680 = vpack.c.b16 %v1308, %v1306
        %v1681 = vpack.c.b16 %v1309, %v1307
        %v1682 = vpack.c.b16 %v1312, %v1310
        %v1683 = vpack.c.b16 %v1313, %v1311
        %v1684 = vpack.c.b16 %v1316, %v1314
        %v1685 = vpack.c.b16 %v1317, %v1315
        %v1686 = vpack.c.b16 %v1320, %v1318
        %v1687 = vpack.c.b16 %v1321, %v1319
        %v1688 = vpack.c.b16 %v1324, %v1322
        %v1689 = vpack.c.b16 %v1325, %v1323
        %v1690 = vpack.c.b16 %v1328, %v1326
        %v1691 = vpack.c.b16 %v1329, %v1327
        %v1692 = vpack.c.b16 %v1332, %v1330
        %v1693 = vpack.c.b16 %v1333, %v1331
        %v1694 = vpack.c.b16 %v1336, %v1334
        %v1695 = vpack.c.b16 %v1337, %v1335
        %v1696 = vpack.c.b16 %v1340, %v1338
        %v1697 = vpack.c.b16 %v1341, %v1339
        %v1698 = vpack.c.b16 %v1344, %v1342
        %v1699 = vpack.c.b16 %v1345, %v1343
        %v1700 = vpack.c.b16 %v1348, %v1346
        %v1701 = vpack.c.b16 %v1349, %v1347
        %v1702 = vpack.c.b16 %v1352, %v1350
        %v1703 = vpack.c.b16 %v1353, %v1351
        %v1704 = vpack.c.b16 %v1356, %v1354
        %v1705 = vpack.c.b16 %v1357, %v1355
        %v1706 = vpack.c.b16 %v1360, %v1358
        %v1707 = vpack.c.b16 %v1361, %v1359
        %v1708 = vpack.c.b16 %v1364, %v1362
        %v1709 = vpack.c.b16 %v1365, %v1363
        %v1710 = vpack.c.b16 %v1368, %v1366
        %v1711 = vpack.c.b16 %v1369, %v1367
        %v1712 = vpack.c.b16 %v1372, %v1370
        %v1713 = vpack.c.b16 %v1373, %v1371
        %v1714 = vpack.c.b16 %v1376, %v1374
        %v1715 = vpack.c.b16 %v1377, %v1375
        %v1716 = vpack.c.b16 %v1380, %v1378
        %v1717 = vpack.c.b16 %v1381, %v1379
        %v1718 = vpack.c.b16 %v1384, %v1382
        %v1719 = vpack.c.b16 %v1385, %v1383
        %v1720 = vpack.c.b16 %v1388, %v1386
        %v1721 = vpack.c.b16 %v1389, %v1387
        %v1722 = vpack.c.b16 %v1392, %v1390
        %v1723 = vpack.c.b16 %v1393, %v1391
        %v1724 = vpack.c.b16 %v1396, %v1394
        %v1725 = vpack.c.b16 %v1397, %v1395
        %v1726 = vpack.c.b16 %v1400, %v1398
        %v1727 = vpack.c.b16 %v1401, %v1399
        %v1728 = vpack.c.b16 %v1404, %v1402
        %v1729 = vpack.c.b16 %v1405, %v1403
        %v1730 = vpack.c.b16 %v1408, %v1406
        %v1731 = vpack.c.b16 %v1409, %v1407
        %v1732 = vpack.c.b16 %v1412, %v1410
        %v1733 = vpack.c.b16 %v1413, %v1411
        %v1734 = vpack.c.b16 %v1416, %v1414
        %v1735 = vpack.c.b16 %v1417, %v1415
        %v1736 = vpack.c.b16 %v1420, %v1418
        %v1737 = vpack.c.b16 %v1421, %v1419
        %v1738 = vpack.c.b16 %v1424, %v1422
        %v1739 = vpack.c.b16 %v1425, %v1423
        %v1740 = vpack.c.b16 %v1428, %v1426
        %v1741 = vpack.c.b16 %v1429, %v1427
        %v1742 = vpack.c.b16 %v1432, %v1430
        %v1743 = vpack.c.b16 %v1433, %v1431
        %v1744 = vpack.c.b16 %v1436, %v1434
        %v1745 = vpack.c.b16 %v1437, %v1435
        %v1746 = vpack.c.b16 %v1440, %v1438
        %v1747 = vpack.c.b16 %v1441, %v1439
        %v1748 = vpack.c.b16 %v1444, %v1442
        %v1749 = vpack.c.b16 %v1445, %v1443
        %v1750 = vpack.c.b16 %v1448, %v1446
        %v1751 = vpack.c.b16 %v1449, %v1447
        %v1752 = vpack.c.b16 %v1452, %v1450
        %v1753 = vpack.c.b16 %v1453, %v1451
        %v1754 = vpack.c.b16 %v1456, %v1454
        %v1755 = vpack.c.b16 %v1457, %v1455
        %v1756 = vpack.c.b16 %v1460, %v1458
        %v1757 = vpack.c.b16 %v1461, %v1459
        %v1758 = vpack.c.b16 %v1464, %v1462
        %v1759 = vpack.c.b16 %v1465, %v1463
        %v1760 = vpack.c.b16 %v1468, %v1466
        %v1761 = vpack.c.b16 %v1469, %v1467
        %v1762 = vpack.c.b16 %v1472, %v1470
        %v1763 = vpack.c.b16 %v1473, %v1471
        %v1764 = vpack.c.b16 %v1476, %v1474
        %v1765 = vpack.c.b16 %v1477, %v1475
        %v1766 = vpack.c.b16 %v1480, %v1478
        %v1767 = vpack.c.b16 %v1481, %v1479
        %v1768 = vpack.c.b16 %v1484, %v1482
        %v1769 = vpack.c.b16 %v1485, %v1483
        %v1770 = vpack.c.b16 %v1488, %v1486
        %v1771 = vpack.c.b16 %v1489, %v1487
        %v1772 = vpack.c.b16 %v1492, %v1490
        %v1773 = vpack.c.b16 %v1493, %v1491
        %v1774 = vpack.c.b16 %v1496, %v1494
        %v1775 = vpack.c.b16 %v1497, %v1495
        %v1776 = vpack.c.b16 %v1500, %v1498
        %v1777 = vpack.c.b16 %v1501, %v1499
        %v1778 = vpack.c.b16 %v1504, %v1502
        %v1779 = vpack.c.b16 %v1505, %v1503
        %v1780 = vpack.c.b16 %v1508, %v1506
        %v1781 = vpack.c.b16 %v1509, %v1507
        %v1782 = vpack.c.b16 %v1512, %v1510
        %v1783 = vpack.c.b16 %v1513, %v1511
        %v1784 = vpack.c.b16 %v1516, %v1514
        %v1785 = vpack.c.b16 %v1517, %v1515
        %v1786 = vpack.c.b16 %v1520, %v1518
        %v1787 = vpack.c.b16 %v1521, %v1519
        %v1788 = vpack.c.b16 %v1524, %v1522
        %v1789 = vpack.c.b16 %v1525, %v1523
        %v1790 = vpack.c.b16 %v1528, %v1526
        %v1791 = vpack.c.b16 %v1529, %v1527
        %v1792 = vpack.c.b16 %v1532, %v1530
        %v1793 = vpack.c.b16 %v1533, %v1531
        %v1794 = vpack.c.b16 %v1536, %v1534
        %v1795 = vpack.c.b16 %v1537, %v1535
        %v1796 = vpack.c.b16 %v1540, %v1538
        %v1797 = vpack.c.b16 %v1541, %v1539
        %2054 = vmatprep.subr.bf16.mxu0 %v1543
        %2055 = vmatpush1.bf16.msra.mxu0 %v1542
        %2056 = vmatprep.subr.bf16.mxu0 %v1545
        %2057 = vmatpush1.bf16.msra.mxu0 %v1544
        %2058 = vmatprep.subr.bf16.mxu0 %v1547
        %2059 = vmatpush1.bf16.msra.mxu0 %v1546
        %2060 = vmatprep.subr.bf16.mxu0 %v1549
        %2061 = vmatpush1.bf16.msra.mxu0 %v1548
        %2062 = vmatprep.subr.bf16.mxu0 %v1551
        %2063 = vmatpush1.bf16.msra.mxu0 %v1550
        %2064 = vmatprep.subr.bf16.mxu0 %v1553
        %2065 = vmatpush1.bf16.msra.mxu0 %v1552
        %2066 = vmatprep.subr.bf16.mxu0 %v1555
        %2067 = vmatpush1.bf16.msra.mxu0 %v1554
        %2068 = vmatprep.subr.bf16.mxu0 %v1557
        %2069 = vmatpush1.bf16.msra.mxu0 %v1556
        %2070 = vmatprep.subr.bf16.mxu0 %v1559
        %2071 = vmatpush1.bf16.msra.mxu0 %v1558
        %2072 = vmatprep.subr.bf16.mxu0 %v1561
        %2073 = vmatpush1.bf16.msra.mxu0 %v1560
        %2074 = vmatprep.subr.bf16.mxu0 %v1563
        %2075 = vmatpush1.bf16.msra.mxu0 %v1562
        %2076 = vmatprep.subr.bf16.mxu0 %v1565
        %2077 = vmatpush1.bf16.msra.mxu0 %v1564
        %2078 = vmatprep.subr.bf16.mxu0 %v1567
        %2079 = vmatpush1.bf16.msra.mxu0 %v1566
        %2080 = vmatprep.subr.bf16.mxu0 %v1569
        %2081 = vmatpush1.bf16.msra.mxu0 %v1568
        %2082 = vmatprep.subr.bf16.mxu0 %v1571
        %2083 = vmatpush1.bf16.msra.mxu0 %v1570
        %2084 = vmatprep.subr.bf16.mxu0 %v1573
        %2085 = vmatpush1.bf16.msra.mxu0 %v1572
        %2086 = vmatprep.mubr.bf16.mxu0 %v743
        %2087 = vmatmul.mubr.bf16.gmra.mrb[0].mxu0 %v742
        %v2088 = vpop.f32.mrb[0].mxu0
        %v2089 = vadd.f32 %v711, %v2088
        %v2090 = vpop.f32.mrb[0].mxu0
        %v2091 = vadd.f32 %v715, %v2090
        %v2092 = vpop.f32.mrb[0].mxu0
        %v2093 = vpop.f32.mrb[0].mxu0
        %2094 = vdwg.mxu0
        %2095 = vmatprep.subr.bf16.mxu0 %v1575
        %2096 = vmatpush1.bf16.msra.mxu0 %v1574
        %2097 = vmatprep.subr.bf16.mxu0 %v1577
        %2098 = vmatpush1.bf16.msra.mxu0 %v1576
        %2099 = vmatprep.subr.bf16.mxu0 %v1579
        %2100 = vmatpush1.bf16.msra.mxu0 %v1578
        %2101 = vmatprep.subr.bf16.mxu0 %v1581
        %2102 = vmatpush1.bf16.msra.mxu0 %v1580
        %2103 = vmatprep.subr.bf16.mxu0 %v1583
        %2104 = vmatpush1.bf16.msra.mxu0 %v1582
        %2105 = vmatprep.subr.bf16.mxu0 %v1585
        %2106 = vmatpush1.bf16.msra.mxu0 %v1584
        %2107 = vmatprep.subr.bf16.mxu0 %v1587
        %2108 = vmatpush1.bf16.msra.mxu0 %v1586
        %2109 = vmatprep.subr.bf16.mxu0 %v1589
        %2110 = vmatpush1.bf16.msra.mxu0 %v1588
        %2111 = vmatprep.subr.bf16.mxu0 %v1591
        %2112 = vmatpush1.bf16.msra.mxu0 %v1590
        %2113 = vmatprep.subr.bf16.mxu0 %v1593
        %2114 = vmatpush1.bf16.msra.mxu0 %v1592
        %2115 = vmatprep.subr.bf16.mxu0 %v1595
        %2116 = vmatpush1.bf16.msra.mxu0 %v1594
        %2117 = vmatprep.subr.bf16.mxu0 %v1597
        %2118 = vmatpush1.bf16.msra.mxu0 %v1596
        %2119 = vmatprep.subr.bf16.mxu0 %v1599
        %2120 = vmatpush1.bf16.msra.mxu0 %v1598
        %2121 = vmatprep.subr.bf16.mxu0 %v1601
        %2122 = vmatpush1.bf16.msra.mxu0 %v1600
        %2123 = vmatprep.subr.bf16.mxu0 %v1603
        %2124 = vmatpush1.bf16.msra.mxu0 %v1602
        %2125 = vmatprep.subr.bf16.mxu0 %v1605
        %2126 = vmatpush1.bf16.msra.mxu0 %v1604
        %2127 = vmatprep.mubr.bf16.mxu0 %v745
        %2128 = vmatmul.mubr.bf16.gmra.mrb[0].mxu0 %v744
        %v2129 = vpop.f32.mrb[0].mxu0
        %v2130 = vadd.f32 %v2089, %v2129
        %v2131 = vpop.f32.mrb[0].mxu0
        %v2132 = vadd.f32 %v2091, %v2131
        %v2133 = vpop.f32.mrb[0].mxu0
        %v2134 = vpop.f32.mrb[0].mxu0
        %2135 = vdwg.mxu0
        %2136 = vmatprep.subr.bf16.mxu0 %v1607
        %2137 = vmatpush1.bf16.msra.mxu0 %v1606
        %2138 = vmatprep.subr.bf16.mxu0 %v1609
        %2139 = vmatpush1.bf16.msra.mxu0 %v1608
        %2140 = vmatprep.subr.bf16.mxu0 %v1611
        %2141 = vmatpush1.bf16.msra.mxu0 %v1610
        %2142 = vmatprep.subr.bf16.mxu0 %v1613
        %2143 = vmatpush1.bf16.msra.mxu0 %v1612
        %2144 = vmatprep.subr.bf16.mxu0 %v1615
        %2145 = vmatpush1.bf16.msra.mxu0 %v1614
        %2146 = vmatprep.subr.bf16.mxu0 %v1617
        %2147 = vmatpush1.bf16.msra.mxu0 %v1616
        %2148 = vmatprep.subr.bf16.mxu0 %v1619
        %2149 = vmatpush1.bf16.msra.mxu0 %v1618
        %2150 = vmatprep.subr.bf16.mxu0 %v1621
        %2151 = vmatpush1.bf16.msra.mxu0 %v1620
        %2152 = vmatprep.subr.bf16.mxu0 %v1623
        %2153 = vmatpush1.bf16.msra.mxu0 %v1622
        %2154 = vmatprep.subr.bf16.mxu0 %v1625
        %2155 = vmatpush1.bf16.msra.mxu0 %v1624
        %2156 = vmatprep.subr.bf16.mxu0 %v1627
        %2157 = vmatpush1.bf16.msra.mxu0 %v1626
        %2158 = vmatprep.subr.bf16.mxu0 %v1629
        %2159 = vmatpush1.bf16.msra.mxu0 %v1628
        %2160 = vmatprep.subr.bf16.mxu0 %v1631
        %2161 = vmatpush1.bf16.msra.mxu0 %v1630
        %2162 = vmatprep.subr.bf16.mxu0 %v1633
        %2163 = vmatpush1.bf16.msra.mxu0 %v1632
        %2164 = vmatprep.subr.bf16.mxu0 %v1635
        %2165 = vmatpush1.bf16.msra.mxu0 %v1634
        %2166 = vmatprep.subr.bf16.mxu0 %v1637
        %2167 = vmatpush1.bf16.msra.mxu0 %v1636
        %2168 = vmatprep.mubr.bf16.mxu0 %v747
        %2169 = vmatmul.mubr.bf16.gmra.mrb[0].mxu0 %v746
        %v2170 = vpop.f32.mrb[0].mxu0
        %v2171 = vadd.f32 %v2130, %v2170
        %v2172 = vpop.f32.mrb[0].mxu0
        %v2173 = vadd.f32 %v2132, %v2172
        %v2174 = vpop.f32.mrb[0].mxu0
        %v2175 = vpop.f32.mrb[0].mxu0
        %2176 = vdwg.mxu0
        %2177 = vmatprep.subr.bf16.mxu0 %v1639
        %2178 = vmatpush1.bf16.msra.mxu0 %v1638
        %2179 = vmatprep.subr.bf16.mxu0 %v1641
        %2180 = vmatpush1.bf16.msra.mxu0 %v1640
        %2181 = vmatprep.subr.bf16.mxu0 %v1643
        %2182 = vmatpush1.bf16.msra.mxu0 %v1642
        %2183 = vmatprep.subr.bf16.mxu0 %v1645
        %2184 = vmatpush1.bf16.msra.mxu0 %v1644
        %2185 = vmatprep.subr.bf16.mxu0 %v1647
        %2186 = vmatpush1.bf16.msra.mxu0 %v1646
        %2187 = vmatprep.subr.bf16.mxu0 %v1649
        %2188 = vmatpush1.bf16.msra.mxu0 %v1648
        %2189 = vmatprep.subr.bf16.mxu0 %v1651
        %2190 = vmatpush1.bf16.msra.mxu0 %v1650
        %2191 = vmatprep.subr.bf16.mxu0 %v1653
        %2192 = vmatpush1.bf16.msra.mxu0 %v1652
        %2193 = vmatprep.subr.bf16.mxu0 %v1655
        %2194 = vmatpush1.bf16.msra.mxu0 %v1654
        %2195 = vmatprep.subr.bf16.mxu0 %v1657
        %2196 = vmatpush1.bf16.msra.mxu0 %v1656
        %2197 = vmatprep.subr.bf16.mxu0 %v1659
        %2198 = vmatpush1.bf16.msra.mxu0 %v1658
        %2199 = vmatprep.subr.bf16.mxu0 %v1661
        %2200 = vmatpush1.bf16.msra.mxu0 %v1660
        %2201 = vmatprep.subr.bf16.mxu0 %v1663
        %2202 = vmatpush1.bf16.msra.mxu0 %v1662
        %2203 = vmatprep.subr.bf16.mxu0 %v1665
        %2204 = vmatpush1.bf16.msra.mxu0 %v1664
        %2205 = vmatprep.subr.bf16.mxu0 %v1667
        %2206 = vmatpush1.bf16.msra.mxu0 %v1666
        %2207 = vmatprep.subr.bf16.mxu0 %v1669
        %2208 = vmatpush1.bf16.msra.mxu0 %v1668
        %2209 = vmatprep.mubr.bf16.mxu0 %v749
        %2210 = vmatmul.mubr.bf16.gmra.mrb[0].mxu0 %v748
        %v2211 = vpop.f32.mrb[0].mxu0
        %v2212 = vadd.f32 %v2171, %v2211
        %v2213 = vpop.f32.mrb[0].mxu0
        %v2214 = vadd.f32 %v2173, %v2213
        %v2215 = vpop.f32.mrb[0].mxu0
        %v2216 = vpop.f32.mrb[0].mxu0
        %2217 = vdwg.mxu0
        %2218 = vmatprep.subr.bf16.mxu0 %v1671
        %2219 = vmatpush1.bf16.msra.mxu0 %v1670
        %2220 = vmatprep.subr.bf16.mxu0 %v1673
        %2221 = vmatpush1.bf16.msra.mxu0 %v1672
        %2222 = vmatprep.subr.bf16.mxu0 %v1675
        %2223 = vmatpush1.bf16.msra.mxu0 %v1674
        %2224 = vmatprep.subr.bf16.mxu0 %v1677
        %2225 = vmatpush1.bf16.msra.mxu0 %v1676
        %2226 = vmatprep.subr.bf16.mxu0 %v1679
        %2227 = vmatpush1.bf16.msra.mxu0 %v1678
        %2228 = vmatprep.subr.bf16.mxu0 %v1681
        %2229 = vmatpush1.bf16.msra.mxu0 %v1680
        %2230 = vmatprep.subr.bf16.mxu0 %v1683
        %2231 = vmatpush1.bf16.msra.mxu0 %v1682
        %2232 = vmatprep.subr.bf16.mxu0 %v1685
        %2233 = vmatpush1.bf16.msra.mxu0 %v1684
        %2234 = vmatprep.subr.bf16.mxu0 %v1687
        %2235 = vmatpush1.bf16.msra.mxu0 %v1686
        %2236 = vmatprep.subr.bf16.mxu0 %v1689
        %2237 = vmatpush1.bf16.msra.mxu0 %v1688
        %2238 = vmatprep.subr.bf16.mxu0 %v1691
        %2239 = vmatpush1.bf16.msra.mxu0 %v1690
        %2240 = vmatprep.subr.bf16.mxu0 %v1693
        %2241 = vmatpush1.bf16.msra.mxu0 %v1692
        %2242 = vmatprep.subr.bf16.mxu0 %v1695
        %2243 = vmatpush1.bf16.msra.mxu0 %v1694
        %2244 = vmatprep.subr.bf16.mxu0 %v1697
        %2245 = vmatpush1.bf16.msra.mxu0 %v1696
        %2246 = vmatprep.subr.bf16.mxu0 %v1699
        %2247 = vmatpush1.bf16.msra.mxu0 %v1698
        %2248 = vmatprep.subr.bf16.mxu0 %v1701
        %2249 = vmatpush1.bf16.msra.mxu0 %v1700
        %2250 = vmatprep.mubr.bf16.mxu0 %v751
        %2251 = vmatmul.mubr.bf16.gmra.mrb[0].mxu0 %v750
        %v2252 = vpop.f32.mrb[0].mxu0
        %v2253 = vadd.f32 %v2212, %v2252
        %v2254 = vpop.f32.mrb[0].mxu0
        %v2255 = vadd.f32 %v2214, %v2254
        %v2256 = vpop.f32.mrb[0].mxu0
        %v2257 = vpop.f32.mrb[0].mxu0
        %2258 = vdwg.mxu0
        %2259 = vmatprep.subr.bf16.mxu0 %v1703
        %2260 = vmatpush1.bf16.msra.mxu0 %v1702
        %2261 = vmatprep.subr.bf16.mxu0 %v1705
        %2262 = vmatpush1.bf16.msra.mxu0 %v1704
        %2263 = vmatprep.subr.bf16.mxu0 %v1707
        %2264 = vmatpush1.bf16.msra.mxu0 %v1706
        %2265 = vmatprep.subr.bf16.mxu0 %v1709
        %2266 = vmatpush1.bf16.msra.mxu0 %v1708
        %2267 = vmatprep.subr.bf16.mxu0 %v1711
        %2268 = vmatpush1.bf16.msra.mxu0 %v1710
        %2269 = vmatprep.subr.bf16.mxu0 %v1713
        %2270 = vmatpush1.bf16.msra.mxu0 %v1712
        %2271 = vmatprep.subr.bf16.mxu0 %v1715
        %2272 = vmatpush1.bf16.msra.mxu0 %v1714
        %2273 = vmatprep.subr.bf16.mxu0 %v1717
        %2274 = vmatpush1.bf16.msra.mxu0 %v1716
        %2275 = vmatprep.subr.bf16.mxu0 %v1719
        %2276 = vmatpush1.bf16.msra.mxu0 %v1718
        %2277 = vmatprep.subr.bf16.mxu0 %v1721
        %2278 = vmatpush1.bf16.msra.mxu0 %v1720
        %2279 = vmatprep.subr.bf16.mxu0 %v1723
        %2280 = vmatpush1.bf16.msra.mxu0 %v1722
        %2281 = vmatprep.subr.bf16.mxu0 %v1725
        %2282 = vmatpush1.bf16.msra.mxu0 %v1724
        %2283 = vmatprep.subr.bf16.mxu0 %v1727
        %2284 = vmatpush1.bf16.msra.mxu0 %v1726
        %2285 = vmatprep.subr.bf16.mxu0 %v1729
        %2286 = vmatpush1.bf16.msra.mxu0 %v1728
        %2287 = vmatprep.subr.bf16.mxu0 %v1731
        %2288 = vmatpush1.bf16.msra.mxu0 %v1730
        %2289 = vmatprep.subr.bf16.mxu0 %v1733
        %2290 = vmatpush1.bf16.msra.mxu0 %v1732
        %2291 = vmatprep.mubr.bf16.mxu0 %v753
        %2292 = vmatmul.mubr.bf16.gmra.mrb[0].mxu0 %v752
        %v2293 = vpop.f32.mrb[0].mxu0
        %v2294 = vadd.f32 %v2253, %v2293
        %v2295 = vpop.f32.mrb[0].mxu0
        %v2296 = vadd.f32 %v2255, %v2295
        %v2297 = vpop.f32.mrb[0].mxu0
        %v2298 = vpop.f32.mrb[0].mxu0
        %2299 = vdwg.mxu0
        %2300 = vmatprep.subr.bf16.mxu0 %v1735
        %2301 = vmatpush1.bf16.msra.mxu0 %v1734
        %2302 = vmatprep.subr.bf16.mxu0 %v1737
        %2303 = vmatpush1.bf16.msra.mxu0 %v1736
        %2304 = vmatprep.subr.bf16.mxu0 %v1739
        %2305 = vmatpush1.bf16.msra.mxu0 %v1738
        %2306 = vmatprep.subr.bf16.mxu0 %v1741
        %2307 = vmatpush1.bf16.msra.mxu0 %v1740
        %2308 = vmatprep.subr.bf16.mxu0 %v1743
        %2309 = vmatpush1.bf16.msra.mxu0 %v1742
        %2310 = vmatprep.subr.bf16.mxu0 %v1745
        %2311 = vmatpush1.bf16.msra.mxu0 %v1744
        %2312 = vmatprep.subr.bf16.mxu0 %v1747
        %2313 = vmatpush1.bf16.msra.mxu0 %v1746
        %2314 = vmatprep.subr.bf16.mxu0 %v1749
        %2315 = vmatpush1.bf16.msra.mxu0 %v1748
        %2316 = vmatprep.subr.bf16.mxu0 %v1751
        %2317 = vmatpush1.bf16.msra.mxu0 %v1750
        %2318 = vmatprep.subr.bf16.mxu0 %v1753
        %2319 = vmatpush1.bf16.msra.mxu0 %v1752
        %2320 = vmatprep.subr.bf16.mxu0 %v1755
        %2321 = vmatpush1.bf16.msra.mxu0 %v1754
        %2322 = vmatprep.subr.bf16.mxu0 %v1757
        %2323 = vmatpush1.bf16.msra.mxu0 %v1756
        %2324 = vmatprep.subr.bf16.mxu0 %v1759
        %2325 = vmatpush1.bf16.msra.mxu0 %v1758
        %2326 = vmatprep.subr.bf16.mxu0 %v1761
        %2327 = vmatpush1.bf16.msra.mxu0 %v1760
        %2328 = vmatprep.subr.bf16.mxu0 %v1763
        %2329 = vmatpush1.bf16.msra.mxu0 %v1762
        %2330 = vmatprep.subr.bf16.mxu0 %v1765
        %2331 = vmatpush1.bf16.msra.mxu0 %v1764
        %2332 = vmatprep.mubr.bf16.mxu0 %v755
        %2333 = vmatmul.mubr.bf16.gmra.mrb[0].mxu0 %v754
        %v2334 = vpop.f32.mrb[0].mxu0
        %v2335 = vadd.f32 %v2294, %v2334
        %v2336 = vpop.f32.mrb[0].mxu0
        %v2337 = vadd.f32 %v2296, %v2336
        %v2338 = vpop.f32.mrb[0].mxu0
        %v2339 = vpop.f32.mrb[0].mxu0
        %2340 = vdwg.mxu0
        %2341 = vmatprep.subr.bf16.mxu0 %v1767
        %2342 = vmatpush1.bf16.msra.mxu0 %v1766
        %2343 = vmatprep.subr.bf16.mxu0 %v1769
        %2344 = vmatpush1.bf16.msra.mxu0 %v1768
        %2345 = vmatprep.subr.bf16.mxu0 %v1771
        %2346 = vmatpush1.bf16.msra.mxu0 %v1770
        %2347 = vmatprep.subr.bf16.mxu0 %v1773
        %2348 = vmatpush1.bf16.msra.mxu0 %v1772
        %2349 = vmatprep.subr.bf16.mxu0 %v1775
        %2350 = vmatpush1.bf16.msra.mxu0 %v1774
        %2351 = vmatprep.subr.bf16.mxu0 %v1777
        %2352 = vmatpush1.bf16.msra.mxu0 %v1776
        %2353 = vmatprep.subr.bf16.mxu0 %v1779
        %2354 = vmatpush1.bf16.msra.mxu0 %v1778
        %2355 = vmatprep.subr.bf16.mxu0 %v1781
        %2356 = vmatpush1.bf16.msra.mxu0 %v1780
        %2357 = vmatprep.subr.bf16.mxu0 %v1783
        %2358 = vmatpush1.bf16.msra.mxu0 %v1782
        %2359 = vmatprep.subr.bf16.mxu0 %v1785
        %2360 = vmatpush1.bf16.msra.mxu0 %v1784
        %2361 = vmatprep.subr.bf16.mxu0 %v1787
        %2362 = vmatpush1.bf16.msra.mxu0 %v1786
        %2363 = vmatprep.subr.bf16.mxu0 %v1789
        %2364 = vmatpush1.bf16.msra.mxu0 %v1788
        %2365 = vmatprep.subr.bf16.mxu0 %v1791
        %2366 = vmatpush1.bf16.msra.mxu0 %v1790
        %2367 = vmatprep.subr.bf16.mxu0 %v1793
        %2368 = vmatpush1.bf16.msra.mxu0 %v1792
        %2369 = vmatprep.subr.bf16.mxu0 %v1795
        %2370 = vmatpush1.bf16.msra.mxu0 %v1794
        %2371 = vmatprep.subr.bf16.mxu0 %v1797
        %2372 = vmatpush1.bf16.msra.mxu0 %v1796
        %2373 = vmatprep.mubr.bf16.mxu0 %v757
        %2374 = vmatmul.mubr.bf16.gmra.mrb[0].mxu0 %v756
        %v2375 = vpop.f32.mrb[0].mxu0
        %v2376 = vadd.f32 %v2335, %v2375
        %v2377 = vpop.f32.mrb[0].mxu0
        %v2378 = vadd.f32 %v2337, %v2377
        %v2379 = vpop.f32.mrb[0].mxu0
        %v2380 = vpop.f32.mrb[0].mxu0
        %2381 = vdwg.mxu0
        // Predicated region
        $region57: #{tpu_custom_call.1} parent=39 // pred_check
          %p2382 = pneg %p303
        $region58: #{tpu_custom_call.1} parent=39 // pred_check_branch
          %2384 = sbr.rel (%p2382) target = $region60
        $region59: #{tpu_custom_call.1} parent=39 // pred_region
          %v2385 = vpack.c.bf16 %v2376, %v2376
          %v2386 = vpack.c.bf16 %v2378, %v2378
          %v2387 = vld [vmem:[#allocation11] sm:$0xf]
          %v2388 = vld [vmem:[#allocation11 + $0x4] sm:$0xf]
          %v2389 = vld [vmem:[#allocation11 + $0x8] sm:$0xf]
          %v2390 = vld [vmem:[#allocation11 + $0xc] sm:$0xf]
          %v2391 = vld [vmem:[#allocation11 + $0x10] sm:$0xf]
          %v2392 = vld [vmem:[#allocation11 + $0x14] sm:$0xf]
          %v2393 = vld [vmem:[#allocation11 + $0x18] sm:$0xf]
          %v2394 = vld [vmem:[#allocation11 + $0x1c] sm:$0xf]
          %v2395 = vld [vmem:[#allocation11 + $0x20] sm:$0xf]
          %v2396 = vld [vmem:[#allocation11 + $0x24] sm:$0xf]
          %v2397 = vld [vmem:[#allocation11 + $0x28] sm:$0xf]
          %v2398 = vld [vmem:[#allocation11 + $0x2c] sm:$0xf]
          %v2399 = vld [vmem:[#allocation11 + $0x30] sm:$0xf]
          %v2400 = vld [vmem:[#allocation11 + $0x34] sm:$0xf]
          %v2401 = vld [vmem:[#allocation11 + $0x38] sm:$0xf]
          %v2402 = vld [vmem:[#allocation11 + $0x3c] sm:$0xf]
          %v2403 = vld [vmem:[#allocation11 + $0x40] sm:$0xf]
          %v2404 = vld [vmem:[#allocation11 + $0x44] sm:$0xf]
          %v2405 = vld [vmem:[#allocation11 + $0x48] sm:$0xf]
          %v2406 = vld [vmem:[#allocation11 + $0x4c] sm:$0xf]
          %v2407 = vld [vmem:[#allocation11 + $0x50] sm:$0xf]
          %v2408 = vld [vmem:[#allocation11 + $0x54] sm:$0xf]
          %v2409 = vld [vmem:[#allocation11 + $0x58] sm:$0xf]
          %v2410 = vld [vmem:[#allocation11 + $0x5c] sm:$0xf]
          %v2411 = vld [vmem:[#allocation11 + $0x60] sm:$0xf]
          %v2412 = vld [vmem:[#allocation11 + $0x64] sm:$0xf]
          %v2413 = vld [vmem:[#allocation11 + $0x68] sm:$0xf]
          %v2414 = vld [vmem:[#allocation11 + $0x6c] sm:$0xf]
          %v2415 = vld [vmem:[#allocation11 + $0x70] sm:$0xf]
          %v2416 = vld [vmem:[#allocation11 + $0x74] sm:$0xf]
          %v2417 = vld [vmem:[#allocation11 + $0x78] sm:$0xf]
          %v2418 = vld [vmem:[#allocation11 + $0x7c] sm:$0xf]
          %v2419 = vld [vmem:[%s4] sm:$0x1]
          %v2421 = vlaneseq
          %v2422 = vshrl.u32 %v2421, 7
          %v2423 = vsub.s32 0, %v2422
          %v2424 = vrot.slane %v2419, %v2423
          %v2458 = vunpack.c.l.b16 %v2387
          %v2459 = vunpack.c.l.b16 %v2388
          %v2460 = vunpack.c.l.b16 %v2389
          %v2461 = vunpack.c.l.b16 %v2390
          %v2462 = vunpack.c.l.b16 %v2391
          %v2463 = vunpack.c.l.b16 %v2392
          %v2464 = vunpack.c.l.b16 %v2393
          %v2465 = vunpack.c.l.b16 %v2394
          %v2466 = vunpack.c.l.b16 %v2395
          %v2467 = vunpack.c.l.b16 %v2396
          %v2468 = vunpack.c.l.b16 %v2397
          %v2469 = vunpack.c.l.b16 %v2398
          %v2470 = vunpack.c.l.b16 %v2399
          %v2471 = vunpack.c.l.b16 %v2400
          %v2472 = vunpack.c.l.b16 %v2401
          %v2473 = vunpack.c.l.b16 %v2402
          %v2474 = vunpack.c.l.b16 %v2403
          %v2475 = vunpack.c.l.b16 %v2404
          %v2476 = vunpack.c.l.b16 %v2405
          %v2477 = vunpack.c.l.b16 %v2406
          %v2478 = vunpack.c.l.b16 %v2407
          %v2479 = vunpack.c.l.b16 %v2408
          %v2480 = vunpack.c.l.b16 %v2409
          %v2481 = vunpack.c.l.b16 %v2410
          %v2482 = vunpack.c.l.b16 %v2411
          %v2483 = vunpack.c.l.b16 %v2412
          %v2484 = vunpack.c.l.b16 %v2413
          %v2485 = vunpack.c.l.b16 %v2414
          %v2486 = vunpack.c.l.b16 %v2415
          %v2487 = vunpack.c.l.b16 %v2416
          %v2488 = vunpack.c.l.b16 %v2417
          %v2489 = vunpack.c.l.b16 %v2418
          %v2490 = vpack.c.b16 %v2459, %v2458
          %v2491 = vpack.c.b16 %v2461, %v2460
          %v2492 = vpack.c.b16 %v2463, %v2462
          %v2493 = vpack.c.b16 %v2465, %v2464
          %v2494 = vpack.c.b16 %v2467, %v2466
          %v2495 = vpack.c.b16 %v2469, %v2468
          %v2496 = vpack.c.b16 %v2471, %v2470
          %v2497 = vpack.c.b16 %v2473, %v2472
          %v2498 = vpack.c.b16 %v2475, %v2474
          %v2499 = vpack.c.b16 %v2477, %v2476
          %v2500 = vpack.c.b16 %v2479, %v2478
          %v2501 = vpack.c.b16 %v2481, %v2480
          %v2502 = vpack.c.b16 %v2483, %v2482
          %v2503 = vpack.c.b16 %v2485, %v2484
          %v2504 = vpack.c.b16 %v2487, %v2486
          %v2505 = vpack.c.b16 %v2489, %v2488
          %2522 = vmatprep.subr.bf16.mxu0 0
          %2523 = vmatpush1.bf16.msra.mxu0 %v2490
          %2524 = vmatprep.subr.bf16.mxu0 0
          %2525 = vmatpush1.bf16.msra.mxu0 %v2491
          %2526 = vmatprep.subr.bf16.mxu0 0
          %2527 = vmatpush1.bf16.msra.mxu0 %v2492
          %2528 = vmatprep.subr.bf16.mxu0 0
          %2529 = vmatpush1.bf16.msra.mxu0 %v2493
          %2530 = vmatprep.subr.bf16.mxu0 0
          %2531 = vmatpush1.bf16.msra.mxu0 %v2494
          %2532 = vmatprep.subr.bf16.mxu0 0
          %2533 = vmatpush1.bf16.msra.mxu0 %v2495
          %2534 = vmatprep.subr.bf16.mxu0 0
          %2535 = vmatpush1.bf16.msra.mxu0 %v2496
          %2536 = vmatprep.subr.bf16.mxu0 0
          %2537 = vmatpush1.bf16.msra.mxu0 %v2497
          %2538 = vmatprep.subr.bf16.mxu0 0
          %2539 = vmatpush1.bf16.msra.mxu0 %v2498
          %2540 = vmatprep.subr.bf16.mxu0 0
          %2541 = vmatpush1.bf16.msra.mxu0 %v2499
          %2542 = vmatprep.subr.bf16.mxu0 0
          %2543 = vmatpush1.bf16.msra.mxu0 %v2500
          %2544 = vmatprep.subr.bf16.mxu0 0
          %2545 = vmatpush1.bf16.msra.mxu0 %v2501
          %2546 = vmatprep.subr.bf16.mxu0 0
          %2547 = vmatpush1.bf16.msra.mxu0 %v2502
          %2548 = vmatprep.subr.bf16.mxu0 0
          %2549 = vmatpush1.bf16.msra.mxu0 %v2503
          %2550 = vmatprep.subr.bf16.mxu0 0
          %2551 = vmatpush1.bf16.msra.mxu0 %v2504
          %2552 = vmatprep.subr.bf16.mxu0 0
          %2553 = vmatpush1.bf16.msra.mxu0 %v2505
          %2554 = vmatprep.mubr.bf16.mxu0 %v2386
          %2555 = vmatmul.mubr.bf16.gmra.mrb[0].mxu0 %v2385
          %v2556 = vpop.f32.mrb[0].mxu0
          %v2557 = vadd.f32 %v2424, %v2556
          %v2558 = vpop.f32.mrb[0].mxu0
          %v2559 = vpop.f32.mrb[0].mxu0
          %v2560 = vpop.f32.mrb[0].mxu0
          %2561 = vdwg.mxu0
          %2562 = vst [vmem:[%s297] sm:$0xff] %v2557
        $region60: #{tpu_custom_call.1} parent=39 // pred_fallthru
          _
        %s2563 = smul.u32 %s26, 8
        %v2564 = vlaneseq
        %v2565 = vshrl.u32 %v2564, 7
        %v2566 = vstv %s2563
        %v2567 = vadd.s32 %v2566, %v2565
        %s2568 = scalar_select %p303, 4, 12
        %v2569 = vstv %s2568
        %vm2570 = vcmp.lt.s32.totalorder %v2567, %v2569
        %v2571 = vsel %vm2570, 1, 0
        %v2572 = vcvt.s32.f32 %v2571
        %v2573 = vmul.f32 %v2376, %v2572
        %v2574 = vmul.f32 %v2378, %v2572
        %v2575 = vrot.slane %v2573, 4
        %v2576 = vadd.f32 %v2573, %v2575
        %v2577 = vrot.slane %v2576, 2
        %v2578 = vadd.f32 %v2576, %v2577
        %v2579 = vrot.slane %v2578, 1
        %v2580 = vadd.f32 %v2578, %v2579
        %v2581 = vrot.slane %v2574, 4
        %v2582 = vadd.f32 %v2574, %v2581
        %v2583 = vrot.slane %v2582, 2
        %v2584 = vadd.f32 %v2582, %v2583
        %v2585 = vrot.slane %v2584, 1
        %v2586 = vadd.f32 %v2584, %v2585
        %2587 = vxpose.xlu0.b32.start [1/16] %v2573, 128
        %2588 = vxpose.xlu0.b32.cont [2/16] 0.0, 128
        %2589 = vxpose.xlu0.b32.cont [3/16] 0.0, 128
        %2590 = vxpose.xlu0.b32.cont [4/16] 0.0, 128
        %2591 = vxpose.xlu0.b32.cont [5/16] 0.0, 128
        %2592 = vxpose.xlu0.b32.cont [6/16] 0.0, 128
        %2593 = vxpose.xlu0.b32.cont [7/16] 0.0, 128
        %2594 = vxpose.xlu0.b32.cont [8/16] 0.0, 128
        %2595 = vxpose.xlu0.b32.cont [9/16] 0.0, 128
        %2596 = vxpose.xlu0.b32.cont [10/16] 0.0, 128
        %2597 = vxpose.xlu0.b32.cont [11/16] 0.0, 128
        %2598 = vxpose.xlu0.b32.cont [12/16] 0.0, 128
        %2599 = vxpose.xlu0.b32.cont [13/16] 0.0, 128
        %2600 = vxpose.xlu0.b32.cont [14/16] 0.0, 128
        %2601 = vxpose.xlu0.b32.cont [15/16] 0.0, 128
        %2602 = vxpose.xlu0.b32.end [16/16] 0.0, 128
        %v2603 = vpop.trf.xlu0
        %v2604 = vpop.trf.xlu0
        %v2605 = vpop.trf.xlu0
        %v2606 = vpop.trf.xlu0
        %v2607 = vpop.trf.xlu0
        %v2608 = vpop.trf.xlu0
        %v2609 = vpop.trf.xlu0
        %v2610 = vpop.trf.xlu0
        %v2611 = vpop.trf.xlu0
        %v2612 = vpop.trf.xlu0
        %v2613 = vpop.trf.xlu0
        %v2614 = vpop.trf.xlu0
        %v2615 = vpop.trf.xlu0
        %v2616 = vpop.trf.xlu0
        %v2617 = vpop.trf.xlu0
        %v2618 = vpop.trf.xlu0
        %2619 = vxpose.xlu0.b32.start [1/16] %v2574, 128
        %2620 = vxpose.xlu0.b32.cont [2/16] 0.0, 128
        %2621 = vxpose.xlu0.b32.cont [3/16] 0.0, 128
        %2622 = vxpose.xlu0.b32.cont [4/16] 0.0, 128
        %2623 = vxpose.xlu0.b32.cont [5/16] 0.0, 128
        %2624 = vxpose.xlu0.b32.cont [6/16] 0.0, 128
        %2625 = vxpose.xlu0.b32.cont [7/16] 0.0, 128
        %2626 = vxpose.xlu0.b32.cont [8/16] 0.0, 128
        %2627 = vxpose.xlu0.b32.cont [9/16] 0.0, 128
        %2628 = vxpose.xlu0.b32.cont [10/16] 0.0, 128
        %2629 = vxpose.xlu0.b32.cont [11/16] 0.0, 128
        %2630 = vxpose.xlu0.b32.cont [12/16] 0.0, 128
        %2631 = vxpose.xlu0.b32.cont [13/16] 0.0, 128
        %2632 = vxpose.xlu0.b32.cont [14/16] 0.0, 128
        %2633 = vxpose.xlu0.b32.cont [15/16] 0.0, 128
        %2634 = vxpose.xlu0.b32.end [16/16] 0.0, 128
        %v2635 = vpop.trf.xlu0
        %v2636 = vpop.trf.xlu0
        %v2637 = vpop.trf.xlu0
        %v2638 = vpop.trf.xlu0
        %v2639 = vpop.trf.xlu0
        %v2640 = vpop.trf.xlu0
        %v2641 = vpop.trf.xlu0
        %v2642 = vpop.trf.xlu0
        %v2643 = vpop.trf.xlu0
        %v2644 = vpop.trf.xlu0
        %v2645 = vpop.trf.xlu0
        %v2646 = vpop.trf.xlu0
        %v2647 = vpop.trf.xlu0
        %v2648 = vpop.trf.xlu0
        %v2649 = vpop.trf.xlu0
        %v2650 = vpop.trf.xlu0
        %vm2651 = vcmask 64512
        %v2653 = vsel %vm2651, %v2603, 0
        %v2656 = vsel %vm2651, %v2604, 0
        %v2659 = vsel %vm2651, %v2605, 0
        %v2662 = vsel %vm2651, %v2606, 0
        %v2665 = vsel %vm2651, %v2607, 0
        %v2668 = vsel %vm2651, %v2608, 0
        %v2671 = vsel %vm2651, %v2609, 0
        %v2674 = vsel %vm2651, %v2610, 0
        %v2677 = vsel %vm2651, %v2611, 0
        %v2680 = vsel %vm2651, %v2612, 0
        %v2683 = vsel %vm2651, %v2613, 0
        %v2686 = vsel %vm2651, %v2614, 0
        %v2689 = vsel %vm2651, %v2615, 0
        %v2692 = vsel %vm2651, %v2616, 0
        %v2695 = vsel %vm2651, %v2617, 0
        %v2698 = vsel %vm2651, %v2618, 0
        %v2701 = vsel %vm2651, %v2635, 0
        %v2704 = vsel %vm2651, %v2636, 0
        %v2707 = vsel %vm2651, %v2637, 0
        %v2710 = vsel %vm2651, %v2638, 0
        %v2713 = vsel %vm2651, %v2639, 0
        %v2716 = vsel %vm2651, %v2640, 0
        %v2719 = vsel %vm2651, %v2641, 0
        %v2722 = vsel %vm2651, %v2642, 0
        %v2725 = vsel %vm2651, %v2643, 0
        %v2728 = vsel %vm2651, %v2644, 0
        %v2731 = vsel %vm2651, %v2645, 0
        %v2734 = vsel %vm2651, %v2646, 0
        %v2737 = vsel %vm2651, %v2647, 0
        %v2740 = vsel %vm2651, %v2648, 0
        %v2743 = vsel %vm2651, %v2649, 0
        %v2746 = vsel %vm2651, %v2650, 0
        %2748 = vmatprep.subr.mxu0 %v2574
        %2749 = vmatpush1.msra.mxu0 %v2573
        %2750 = vmatprep.subr.mxu0 0.0
        %2751 = vmatpush1.msra.mxu0 0.0
        %2752 = vmatprep.subr.mxu0 0.0
        %2753 = vmatpush1.msra.mxu0 0.0
        %2754 = vmatprep.subr.mxu0 0.0
        %2755 = vmatpush1.msra.mxu0 0.0
        %2756 = vmatprep.subr.mxu0 0.0
        %2757 = vmatpush1.msra.mxu0 0.0
        %2758 = vmatprep.subr.mxu0 0.0
        %2759 = vmatpush1.msra.mxu0 0.0
        %2760 = vmatprep.subr.mxu0 0.0
        %2761 = vmatpush1.msra.mxu0 0.0
        %2762 = vmatprep.subr.mxu0 0.0
        %2763 = vmatpush1.msra.mxu0 0.0
        %2764 = vmatprep.subr.mxu0 0.0
        %2765 = vmatpush1.msra.mxu0 0.0
        %2766 = vmatprep.subr.mxu0 0.0
        %2767 = vmatpush1.msra.mxu0 0.0
        %2768 = vmatprep.subr.mxu0 0.0
        %2769 = vmatpush1.msra.mxu0 0.0
        %2770 = vmatprep.subr.mxu0 0.0
        %2771 = vmatpush1.msra.mxu0 0.0
        %2772 = vmatprep.subr.mxu0 0.0
        %2773 = vmatpush1.msra.mxu0 0.0
        %2774 = vmatprep.subr.mxu0 0.0
        %2775 = vmatpush1.msra.mxu0 0.0
        %2776 = vmatprep.subr.mxu0 0.0
        %2777 = vmatpush1.msra.mxu0 0.0
        %2778 = vmatprep.subr.mxu0 0.0
        %2779 = vmatpush1.msra.mxu0 0.0
        %2780 = vmatprep.subr.mxu0 0.0
        %2781 = vmatpush1.msra.mxu0 0.0
        %2782 = vmatprep.subr.mxu0 0.0
        %2783 = vmatpush1.msra.mxu0 0.0
        %2784 = vmatprep.subr.mxu0 0.0
        %2785 = vmatpush1.msra.mxu0 0.0
        %2786 = vmatprep.subr.mxu0 0.0
        %2787 = vmatpush1.msra.mxu0 0.0
        %2788 = vmatprep.subr.mxu0 0.0
        %2789 = vmatpush1.msra.mxu0 0.0
        %2790 = vmatprep.subr.mxu0 0.0
        %2791 = vmatpush1.msra.mxu0 0.0
        %2792 = vmatprep.subr.mxu0 0.0
        %2793 = vmatpush1.msra.mxu0 0.0
        %2794 = vmatprep.subr.mxu0 0.0
        %2795 = vmatpush1.msra.mxu0 0.0
        %2796 = vmatprep.subr.mxu0 0.0
        %2797 = vmatpush1.msra.mxu0 0.0
        %2798 = vmatprep.subr.mxu0 0.0
        %2799 = vmatpush1.msra.mxu0 0.0
        %2800 = vmatprep.subr.mxu0 0.0
        %2801 = vmatpush1.msra.mxu0 0.0
        %2802 = vmatprep.subr.mxu0 0.0
        %2803 = vmatpush1.msra.mxu0 0.0
        %2804 = vmatprep.subr.mxu0 0.0
        %2805 = vmatpush1.msra.mxu0 0.0
        %2806 = vmatprep.subr.mxu0 0.0
        %2807 = vmatpush1.msra.mxu0 0.0
        %2808 = vmatprep.subr.mxu0 0.0
        %2809 = vmatpush1.msra.mxu0 0.0
        %2810 = vmatprep.subr.mxu0 0.0
        %2811 = vmatpush1.msra.mxu0 0.0
        %2812 = vmatprep.mubr.f32.mxu0 0.0
        %2813 = vmatmul.mubr.f32.gmra.mrb[0].mxu0 %v2653
        %v2814 = vpop.f32.mrb[0].mxu0
        %v2815 = vadd.f32 0.0, %v2814
        %v2816 = vpop.f32.mrb[0].mxu0
        %v2817 = vadd.f32 0.0, %v2816
        %2818 = vmatprep.mubr.f32.mxu0 0.0
        %2819 = vmatmul.mubr.f32.gmra.mrb[0].mxu0 %v2656
        %v2820 = vpop.f32.mrb[0].mxu0
        %v2821 = vadd.f32 0.0, %v2820
        %v2822 = vpop.f32.mrb[0].mxu0
        %v2823 = vadd.f32 0.0, %v2822
        %2824 = vmatprep.mubr.f32.mxu0 0.0
        %2825 = vmatmul.mubr.f32.gmra.mrb[0].mxu0 %v2659
        %v2826 = vpop.f32.mrb[0].mxu0
        %v2827 = vadd.f32 0.0, %v2826
        %v2828 = vpop.f32.mrb[0].mxu0
        %v2829 = vadd.f32 0.0, %v2828
        %2830 = vmatprep.mubr.f32.mxu0 0.0
        %2831 = vmatmul.mubr.f32.gmra.mrb[0].mxu0 %v2662
        %v2832 = vpop.f32.mrb[0].mxu0
        %v2833 = vadd.f32 0.0, %v2832
        %v2834 = vpop.f32.mrb[0].mxu0
        %v2835 = vadd.f32 0.0, %v2834
        %2836 = vmatprep.mubr.f32.mxu0 0.0
        %2837 = vmatmul.mubr.f32.gmra.mrb[0].mxu0 %v2665
        %v2838 = vpop.f32.mrb[0].mxu0
        %v2839 = vadd.f32 0.0, %v2838
        %v2840 = vpop.f32.mrb[0].mxu0
        %v2841 = vadd.f32 0.0, %v2840
        %2842 = vmatprep.mubr.f32.mxu0 0.0
        %2843 = vmatmul.mubr.f32.gmra.mrb[0].mxu0 %v2668
        %v2844 = vpop.f32.mrb[0].mxu0
        %v2845 = vadd.f32 0.0, %v2844
        %v2846 = vpop.f32.mrb[0].mxu0
        %v2847 = vadd.f32 0.0, %v2846
        %2848 = vmatprep.mubr.f32.mxu0 0.0
        %2849 = vmatmul.mubr.f32.gmra.mrb[0].mxu0 %v2671
        %v2850 = vpop.f32.mrb[0].mxu0
        %v2851 = vadd.f32 0.0, %v2850
        %v2852 = vpop.f32.mrb[0].mxu0
        %v2853 = vadd.f32 0.0, %v2852
        %2854 = vmatprep.mubr.f32.mxu0 0.0
        %2855 = vmatmul.mubr.f32.gmra.mrb[0].mxu0 %v2674
        %v2856 = vpop.f32.mrb[0].mxu0
        %v2857 = vadd.f32 0.0, %v2856
        %v2858 = vpop.f32.mrb[0].mxu0
        %v2859 = vadd.f32 0.0, %v2858
        %2860 = vmatprep.mubr.f32.mxu0 0.0
        %2861 = vmatmul.mubr.f32.gmra.mrb[0].mxu0 %v2677
        %v2862 = vpop.f32.mrb[0].mxu0
        %v2863 = vadd.f32 0.0, %v2862
        %v2864 = vpop.f32.mrb[0].mxu0
        %v2865 = vadd.f32 0.0, %v2864
        %2866 = vmatprep.mubr.f32.mxu0 0.0
        %2867 = vmatmul.mubr.f32.gmra.mrb[0].mxu0 %v2680
        %v2868 = vpop.f32.mrb[0].mxu0
        %v2869 = vadd.f32 0.0, %v2868
        %v2870 = vpop.f32.mrb[0].mxu0
        %v2871 = vadd.f32 0.0, %v2870
        %2872 = vmatprep.mubr.f32.mxu0 0.0
        %2873 = vmatmul.mubr.f32.gmra.mrb[0].mxu0 %v2683
        %v2874 = vpop.f32.mrb[0].mxu0
        %v2875 = vadd.f32 0.0, %v2874
        %v2876 = vpop.f32.mrb[0].mxu0
        %v2877 = vadd.f32 0.0, %v2876
        %2878 = vmatprep.mubr.f32.mxu0 0.0
        %2879 = vmatmul.mubr.f32.gmra.mrb[0].mxu0 %v2686
        %v2880 = vpop.f32.mrb[0].mxu0
        %v2881 = vadd.f32 0.0, %v2880
        %v2882 = vpop.f32.mrb[0].mxu0
        %v2883 = vadd.f32 0.0, %v2882
        %2884 = vmatprep.mubr.f32.mxu0 0.0
        %2885 = vmatmul.mubr.f32.gmra.mrb[0].mxu0 %v2689
        %v2886 = vpop.f32.mrb[0].mxu0
        %v2887 = vadd.f32 0.0, %v2886
        %v2888 = vpop.f32.mrb[0].mxu0
        %v2889 = vadd.f32 0.0, %v2888
        %2890 = vmatprep.mubr.f32.mxu0 0.0
        %2891 = vmatmul.mubr.f32.gmra.mrb[0].mxu0 %v2692
        %v2892 = vpop.f32.mrb[0].mxu0
        %v2893 = vadd.f32 0.0, %v2892
        %v2894 = vpop.f32.mrb[0].mxu0
        %v2895 = vadd.f32 0.0, %v2894
        %2896 = vmatprep.mubr.f32.mxu0 0.0
        %2897 = vmatmul.mubr.f32.gmra.mrb[0].mxu0 %v2695
        %v2898 = vpop.f32.mrb[0].mxu0
        %v2899 = vadd.f32 0.0, %v2898
        %v2900 = vpop.f32.mrb[0].mxu0
        %v2901 = vadd.f32 0.0, %v2900
        %2902 = vmatprep.mubr.f32.mxu0 0.0
        %2903 = vmatmul.mubr.f32.gmra.mrb[0].mxu0 %v2698
        %v2904 = vpop.f32.mrb[0].mxu0
        %v2905 = vadd.f32 0.0, %v2904
        %v2906 = vpop.f32.mrb[0].mxu0
        %v2907 = vadd.f32 0.0, %v2906
        %2908 = vmatprep.mubr.f32.mxu0 0.0
        %2909 = vmatmul.mubr.f32.gmra.mrb[0].mxu0 %v2701
        %v2910 = vpop.f32.mrb[0].mxu0
        %v2911 = vadd.f32 0.0, %v2910
        %v2912 = vpop.f32.mrb[0].mxu0
        %v2913 = vadd.f32 0.0, %v2912
        %2914 = vmatprep.mubr.f32.mxu0 0.0
        %2915 = vmatmul.mubr.f32.gmra.mrb[0].mxu0 %v2704
        %v2916 = vpop.f32.mrb[0].mxu0
        %v2917 = vadd.f32 0.0, %v2916
        %v2918 = vpop.f32.mrb[0].mxu0
        %v2919 = vadd.f32 0.0, %v2918
        %2920 = vmatprep.mubr.f32.mxu0 0.0
        %2921 = vmatmul.mubr.f32.gmra.mrb[0].mxu0 %v2707
        %v2922 = vpop.f32.mrb[0].mxu0
        %v2923 = vadd.f32 0.0, %v2922
        %v2924 = vpop.f32.mrb[0].mxu0
        %v2925 = vadd.f32 0.0, %v2924
        %2926 = vmatprep.mubr.f32.mxu0 0.0
        %2927 = vmatmul.mubr.f32.gmra.mrb[0].mxu0 %v2710
        %v2928 = vpop.f32.mrb[0].mxu0
        %v2929 = vadd.f32 0.0, %v2928
        %v2930 = vpop.f32.mrb[0].mxu0
        %v2931 = vadd.f32 0.0, %v2930
        %2932 = vmatprep.mubr.f32.mxu0 0.0
        %2933 = vmatmul.mubr.f32.gmra.mrb[0].mxu0 %v2713
        %v2934 = vpop.f32.mrb[0].mxu0
        %v2935 = vadd.f32 0.0, %v2934
        %v2936 = vpop.f32.mrb[0].mxu0
        %v2937 = vadd.f32 0.0, %v2936
        %2938 = vmatprep.mubr.f32.mxu0 0.0
        %2939 = vmatmul.mubr.f32.gmra.mrb[0].mxu0 %v2716
        %v2940 = vpop.f32.mrb[0].mxu0
        %v2941 = vadd.f32 0.0, %v2940
        %v2942 = vpop.f32.mrb[0].mxu0
        %v2943 = vadd.f32 0.0, %v2942
        %2944 = vmatprep.mubr.f32.mxu0 0.0
        %2945 = vmatmul.mubr.f32.gmra.mrb[0].mxu0 %v2719
        %v2946 = vpop.f32.mrb[0].mxu0
        %v2947 = vadd.f32 0.0, %v2946
        %v2948 = vpop.f32.mrb[0].mxu0
        %v2949 = vadd.f32 0.0, %v2948
        %2950 = vmatprep.mubr.f32.mxu0 0.0
        %2951 = vmatmul.mubr.f32.gmra.mrb[0].mxu0 %v2722
        %v2952 = vpop.f32.mrb[0].mxu0
        %v2953 = vadd.f32 0.0, %v2952
        %v2954 = vpop.f32.mrb[0].mxu0
        %v2955 = vadd.f32 0.0, %v2954
        %2956 = vmatprep.mubr.f32.mxu0 0.0
        %2957 = vmatmul.mubr.f32.gmra.mrb[0].mxu0 %v2725
        %v2958 = vpop.f32.mrb[0].mxu0
        %v2959 = vadd.f32 0.0, %v2958
        %v2960 = vpop.f32.mrb[0].mxu0
        %v2961 = vadd.f32 0.0, %v2960
        %2962 = vmatprep.mubr.f32.mxu0 0.0
        %2963 = vmatmul.mubr.f32.gmra.mrb[0].mxu0 %v2728
        %v2964 = vpop.f32.mrb[0].mxu0
        %v2965 = vadd.f32 0.0, %v2964
        %v2966 = vpop.f32.mrb[0].mxu0
        %v2967 = vadd.f32 0.0, %v2966
        %2968 = vmatprep.mubr.f32.mxu0 0.0
        %2969 = vmatmul.mubr.f32.gmra.mrb[0].mxu0 %v2731
        %v2970 = vpop.f32.mrb[0].mxu0
        %v2971 = vadd.f32 0.0, %v2970
        %v2972 = vpop.f32.mrb[0].mxu0
        %v2973 = vadd.f32 0.0, %v2972
        %2974 = vmatprep.mubr.f32.mxu0 0.0
        %2975 = vmatmul.mubr.f32.gmra.mrb[0].mxu0 %v2734
        %v2976 = vpop.f32.mrb[0].mxu0
        %v2977 = vadd.f32 0.0, %v2976
        %v2978 = vpop.f32.mrb[0].mxu0
        %v2979 = vadd.f32 0.0, %v2978
        %2980 = vmatprep.mubr.f32.mxu0 0.0
        %2981 = vmatmul.mubr.f32.gmra.mrb[0].mxu0 %v2737
        %v2982 = vpop.f32.mrb[0].mxu0
        %v2983 = vadd.f32 0.0, %v2982
        %v2984 = vpop.f32.mrb[0].mxu0
        %v2985 = vadd.f32 0.0, %v2984
        %2986 = vmatprep.mubr.f32.mxu0 0.0
        %2987 = vmatmul.mubr.f32.gmra.mrb[0].mxu0 %v2740
        %v2988 = vpop.f32.mrb[0].mxu0
        %v2989 = vadd.f32 0.0, %v2988
        %v2990 = vpop.f32.mrb[0].mxu0
        %v2991 = vadd.f32 0.0, %v2990
        %2992 = vmatprep.mubr.f32.mxu0 0.0
        %2993 = vmatmul.mubr.f32.gmra.mrb[0].mxu0 %v2743
        %v2994 = vpop.f32.mrb[0].mxu0
        %v2995 = vadd.f32 0.0, %v2994
        %v2996 = vpop.f32.mrb[0].mxu0
        %v2997 = vadd.f32 0.0, %v2996
        %2998 = vmatprep.mubr.f32.mxu0 0.0
        %2999 = vmatmul.mubr.f32.gmra.mrb[0].mxu0 %v2746
        %v3000 = vpop.f32.mrb[0].mxu0
        %v3001 = vadd.f32 0.0, %v3000
        %v3002 = vpop.f32.mrb[0].mxu0
        %v3003 = vadd.f32 0.0, %v3002
        %3004 = vdwg.mxu0
        // Predicated region
        $region61: #{tpu_custom_call.1} parent=39 // pred_check
          %p3005 = pneg %p303
        $region62: #{tpu_custom_call.1} parent=39 // pred_check_branch
          %3007 = sbr.rel (%p3005) target = $region64
        $region63: #{tpu_custom_call.1} parent=39 // pred_region
          %v3008 = vld [vmem:[#allocation2] sm:$0x3]
          %v3011 = vcombine.low %v2580, %v2586
          %v3013 = vunpack.c.l.s4 1966171168
          %v3014 = vunpack.c.0.s8 %v3013
          %v3015 = vlaneseq
          %v3016 = vshrl.u32 %v3015, 7
          %v3017 = vsub.s32 %v3014, %v3016
          %v3018 = vrot.slane %v3011, %v3017
          %v3020 = vunpack.c.l.s4 1966171168
          %v3021 = vunpack.c.0.s8 %v3020
          %v3022 = vlaneseq
          %v3023 = vshrl.u32 %v3022, 7
          %v3024 = vsub.s32 %v3021, %v3023
          %v3025 = vrot.slane %v3018, %v3024
          %v3027 = vadd.f32 %v3008, %v3025
          %v3028 = vlaneseq
          %vm3029 = vcmp.ge.s32.totalorder %v3028, 0
          %vm3030 = vcmp.lt.s32.totalorder %v3028, 256
          %vm3031 = vmand %vm3029, %vm3030
          %3032 = vst.msk [vmem:[#allocation2] sm:$0x3] %vm3031, %v3027
          %v3033 = vld [vmem:[#allocation4] sm:$0xff]
          %v3034 = vld [vmem:[#allocation4 + $0x8] sm:$0xff]
          %v3035 = vld [vmem:[#allocation4 + $0x10] sm:$0xff]
          %v3036 = vld [vmem:[#allocation4 + $0x18] sm:$0xff]
          %v3037 = vld [vmem:[#allocation4 + $0x20] sm:$0xff]
          %v3038 = vld [vmem:[#allocation4 + $0x28] sm:$0xff]
          %v3039 = vld [vmem:[#allocation4 + $0x30] sm:$0xff]
          %v3040 = vld [vmem:[#allocation4 + $0x38] sm:$0xff]
          %v3041 = vld [vmem:[#allocation4 + $0x40] sm:$0xff]
          %v3042 = vld [vmem:[#allocation4 + $0x48] sm:$0xff]
          %v3043 = vld [vmem:[#allocation4 + $0x50] sm:$0xff]
          %v3044 = vld [vmem:[#allocation4 + $0x58] sm:$0xff]
          %v3045 = vld [vmem:[#allocation4 + $0x60] sm:$0xff]
          %v3046 = vld [vmem:[#allocation4 + $0x68] sm:$0xff]
          %v3047 = vld [vmem:[#allocation4 + $0x70] sm:$0xff]
          %v3048 = vld [vmem:[#allocation4 + $0x78] sm:$0xff]
          %v3049 = vld [vmem:[#allocation4 + $0x80] sm:$0xff]
          %v3050 = vld [vmem:[#allocation4 + $0x88] sm:$0xff]
          %v3051 = vld [vmem:[#allocation4 + $0x90] sm:$0xff]
          %v3052 = vld [vmem:[#allocation4 + $0x98] sm:$0xff]
          %v3053 = vld [vmem:[#allocation4 + $0xa0] sm:$0xff]
          %v3054 = vld [vmem:[#allocation4 + $0xa8] sm:$0xff]
          %v3055 = vld [vmem:[#allocation4 + $0xb0] sm:$0xff]
          %v3056 = vld [vmem:[#allocation4 + $0xb8] sm:$0xff]
          %v3057 = vld [vmem:[#allocation4 + $0xc0] sm:$0xff]
          %v3058 = vld [vmem:[#allocation4 + $0xc8] sm:$0xff]
          %v3059 = vld [vmem:[#allocation4 + $0xd0] sm:$0xff]
          %v3060 = vld [vmem:[#allocation4 + $0xd8] sm:$0xff]
          %v3061 = vld [vmem:[#allocation4 + $0xe0] sm:$0xff]
          %v3062 = vld [vmem:[#allocation4 + $0xe8] sm:$0xff]
          %v3063 = vld [vmem:[#allocation4 + $0xf0] sm:$0xff]
          %v3064 = vld [vmem:[#allocation4 + $0xf8] sm:$0xff]
          %v3065 = vld [vmem:[#allocation4 + $0x100] sm:$0xff]
          %v3066 = vld [vmem:[#allocation4 + $0x108] sm:$0xff]
          %v3067 = vld [vmem:[#allocation4 + $0x110] sm:$0xff]
          %v3068 = vld [vmem:[#allocation4 + $0x118] sm:$0xff]
          %v3069 = vld [vmem:[#allocation4 + $0x120] sm:$0xff]
          %v3070 = vld [vmem:[#allocation4 + $0x128] sm:$0xff]
          %v3071 = vld [vmem:[#allocation4 + $0x130] sm:$0xff]
          %v3072 = vld [vmem:[#allocation4 + $0x138] sm:$0xff]
          %v3073 = vld [vmem:[#allocation4 + $0x140] sm:$0xff]
          %v3074 = vld [vmem:[#allocation4 + $0x148] sm:$0xff]
          %v3075 = vld [vmem:[#allocation4 + $0x150] sm:$0xff]
          %v3076 = vld [vmem:[#allocation4 + $0x158] sm:$0xff]
          %v3077 = vld [vmem:[#allocation4 + $0x160] sm:$0xff]
          %v3078 = vld [vmem:[#allocation4 + $0x168] sm:$0xff]
          %v3079 = vld [vmem:[#allocation4 + $0x170] sm:$0xff]
          %v3080 = vld [vmem:[#allocation4 + $0x178] sm:$0xff]
          %v3081 = vld [vmem:[#allocation4 + $0x180] sm:$0xff]
          %v3082 = vld [vmem:[#allocation4 + $0x188] sm:$0xff]
          %v3083 = vld [vmem:[#allocation4 + $0x190] sm:$0xff]
          %v3084 = vld [vmem:[#allocation4 + $0x198] sm:$0xff]
          %v3085 = vld [vmem:[#allocation4 + $0x1a0] sm:$0xff]
          %v3086 = vld [vmem:[#allocation4 + $0x1a8] sm:$0xff]
          %v3087 = vld [vmem:[#allocation4 + $0x1b0] sm:$0xff]
          %v3088 = vld [vmem:[#allocation4 + $0x1b8] sm:$0xff]
          %v3089 = vld [vmem:[#allocation4 + $0x1c0] sm:$0xff]
          %v3090 = vld [vmem:[#allocation4 + $0x1c8] sm:$0xff]
          %v3091 = vld [vmem:[#allocation4 + $0x1d0] sm:$0xff]
          %v3092 = vld [vmem:[#allocation4 + $0x1d8] sm:$0xff]
          %v3093 = vld [vmem:[#allocation4 + $0x1e0] sm:$0xff]
          %v3094 = vld [vmem:[#allocation4 + $0x1e8] sm:$0xff]
          %v3095 = vld [vmem:[#allocation4 + $0x1f0] sm:$0xff]
          %v3096 = vld [vmem:[#allocation4 + $0x1f8] sm:$0xff]
          %v3097 = vadd.f32 %v3033, %v2815
          %v3098 = vadd.f32 %v3034, %v2817
          %v3099 = vadd.f32 %v3035, %v2821
          %v3100 = vadd.f32 %v3036, %v2823
          %v3101 = vadd.f32 %v3037, %v2827
          %v3102 = vadd.f32 %v3038, %v2829
          %v3103 = vadd.f32 %v3039, %v2833
          %v3104 = vadd.f32 %v3040, %v2835
          %v3105 = vadd.f32 %v3041, %v2839
          %v3106 = vadd.f32 %v3042, %v2841
          %v3107 = vadd.f32 %v3043, %v2845
          %v3108 = vadd.f32 %v3044, %v2847
          %v3109 = vadd.f32 %v3045, %v2851
          %v3110 = vadd.f32 %v3046, %v2853
          %v3111 = vadd.f32 %v3047, %v2857
          %v3112 = vadd.f32 %v3048, %v2859
          %v3113 = vadd.f32 %v3049, %v2863
          %v3114 = vadd.f32 %v3050, %v2865
          %v3115 = vadd.f32 %v3051, %v2869
          %v3116 = vadd.f32 %v3052, %v2871
          %v3117 = vadd.f32 %v3053, %v2875
          %v3118 = vadd.f32 %v3054, %v2877
          %v3119 = vadd.f32 %v3055, %v2881
          %v3120 = vadd.f32 %v3056, %v2883
          %v3121 = vadd.f32 %v3057, %v2887
          %v3122 = vadd.f32 %v3058, %v2889
          %v3123 = vadd.f32 %v3059, %v2893
          %v3124 = vadd.f32 %v3060, %v2895
          %v3125 = vadd.f32 %v3061, %v2899
          %v3126 = vadd.f32 %v3062, %v2901
          %v3127 = vadd.f32 %v3063, %v2905
          %v3128 = vadd.f32 %v3064, %v2907
          %v3129 = vadd.f32 %v3065, %v2911
          %v3130 = vadd.f32 %v3066, %v2913
          %v3131 = vadd.f32 %v3067, %v2917
          %v3132 = vadd.f32 %v3068, %v2919
          %v3133 = vadd.f32 %v3069, %v2923
          %v3134 = vadd.f32 %v3070, %v2925
          %v3135 = vadd.f32 %v3071, %v2929
          %v3136 = vadd.f32 %v3072, %v2931
          %v3137 = vadd.f32 %v3073, %v2935
          %v3138 = vadd.f32 %v3074, %v2937
          %v3139 = vadd.f32 %v3075, %v2941
          %v3140 = vadd.f32 %v3076, %v2943
          %v3141 = vadd.f32 %v3077, %v2947
          %v3142 = vadd.f32 %v3078, %v2949
          %v3143 = vadd.f32 %v3079, %v2953
          %v3144 = vadd.f32 %v3080, %v2955
          %v3145 = vadd.f32 %v3081, %v2959
          %v3146 = vadd.f32 %v3082, %v2961
          %v3147 = vadd.f32 %v3083, %v2965
          %v3148 = vadd.f32 %v3084, %v2967
          %v3149 = vadd.f32 %v3085, %v2971
          %v3150 = vadd.f32 %v3086, %v2973
          %v3151 = vadd.f32 %v3087, %v2977
          %v3152 = vadd.f32 %v3088, %v2979
          %v3153 = vadd.f32 %v3089, %v2983
          %v3154 = vadd.f32 %v3090, %v2985
          %v3155 = vadd.f32 %v3091, %v2989
          %v3156 = vadd.f32 %v3092, %v2991
          %v3157 = vadd.f32 %v3093, %v2995
          %v3158 = vadd.f32 %v3094, %v2997
          %v3159 = vadd.f32 %v3095, %v3001
          %v3160 = vadd.f32 %v3096, %v3003
          %3161 = vst [vmem:[#allocation4] sm:$0xff] %v3097
          %3162 = vst [vmem:[#allocation4 + $0x8] sm:$0xff] %v3098
          %3163 = vst [vmem:[#allocation4 + $0x10] sm:$0xff] %v3099
          %3164 = vst [vmem:[#allocation4 + $0x18] sm:$0xff] %v3100
          %3165 = vst [vmem:[#allocation4 + $0x20] sm:$0xff] %v3101
          %3166 = vst [vmem:[#allocation4 + $0x28] sm:$0xff] %v3102
          %3167 = vst [vmem:[#allocation4 + $0x30] sm:$0xff] %v3103
          %3168 = vst [vmem:[#allocation4 + $0x38] sm:$0xff] %v3104
          %3169 = vst [vmem:[#allocation4 + $0x40] sm:$0xff] %v3105
          %3170 = vst [vmem:[#allocation4 + $0x48] sm:$0xff] %v3106
          %3171 = vst [vmem:[#allocation4 + $0x50] sm:$0xff] %v3107
          %3172 = vst [vmem:[#allocation4 + $0x58] sm:$0xff] %v3108
          %3173 = vst [vmem:[#allocation4 + $0x60] sm:$0xff] %v3109
          %3174 = vst [vmem:[#allocation4 + $0x68] sm:$0xff] %v3110
          %3175 = vst [vmem:[#allocation4 + $0x70] sm:$0xff] %v3111
          %3176 = vst [vmem:[#allocation4 + $0x78] sm:$0xff] %v3112
          %3177 = vst [vmem:[#allocation4 + $0x80] sm:$0xff] %v3113
          %3178 = vst [vmem:[#allocation4 + $0x88] sm:$0xff] %v3114
          %3179 = vst [vmem:[#allocation4 + $0x90] sm:$0xff] %v3115
          %3180 = vst [vmem:[#allocation4 + $0x98] sm:$0xff] %v3116
          %3181 = vst [vmem:[#allocation4 + $0xa0] sm:$0xff] %v3117
          %3182 = vst [vmem:[#allocation4 + $0xa8] sm:$0xff] %v3118
          %3183 = vst [vmem:[#allocation4 + $0xb0] sm:$0xff] %v3119
          %3184 = vst [vmem:[#allocation4 + $0xb8] sm:$0xff] %v3120
          %3185 = vst [vmem:[#allocation4 + $0xc0] sm:$0xff] %v3121
          %3186 = vst [vmem:[#allocation4 + $0xc8] sm:$0xff] %v3122
          %3187 = vst [vmem:[#allocation4 + $0xd0] sm:$0xff] %v3123
          %3188 = vst [vmem:[#allocation4 + $0xd8] sm:$0xff] %v3124
          %3189 = vst [vmem:[#allocation4 + $0xe0] sm:$0xff] %v3125
          %3190 = vst [vmem:[#allocation4 + $0xe8] sm:$0xff] %v3126
          %3191 = vst [vmem:[#allocation4 + $0xf0] sm:$0xff] %v3127
          %3192 = vst [vmem:[#allocation4 + $0xf8] sm:$0xff] %v3128
          %3193 = vst [vmem:[#allocation4 + $0x100] sm:$0xff] %v3129
          %3194 = vst [vmem:[#allocation4 + $0x108] sm:$0xff] %v3130
          %3195 = vst [vmem:[#allocation4 + $0x110] sm:$0xff] %v3131
          %3196 = vst [vmem:[#allocation4 + $0x118] sm:$0xff] %v3132
          %3197 = vst [vmem:[#allocation4 + $0x120] sm:$0xff] %v3133
          %3198 = vst [vmem:[#allocation4 + $0x128] sm:$0xff] %v3134
          %3199 = vst [vmem:[#allocation4 + $0x130] sm:$0xff] %v3135
          %3200 = vst [vmem:[#allocation4 + $0x138] sm:$0xff] %v3136
          %3201 = vst [vmem:[#allocation4 + $0x140] sm:$0xff] %v3137
          %3202 = vst [vmem:[#allocation4 + $0x148] sm:$0xff] %v3138
          %3203 = vst [vmem:[#allocation4 + $0x150] sm:$0xff] %v3139
          %3204 = vst [vmem:[#allocation4 + $0x158] sm:$0xff] %v3140
          %3205 = vst [vmem:[#allocation4 + $0x160] sm:$0xff] %v3141
          %3206 = vst [vmem:[#allocation4 + $0x168] sm:$0xff] %v3142
          %3207 = vst [vmem:[#allocation4 + $0x170] sm:$0xff] %v3143
          %3208 = vst [vmem:[#allocation4 + $0x178] sm:$0xff] %v3144
          %3209 = vst [vmem:[#allocation4 + $0x180] sm:$0xff] %v3145
          %3210 = vst [vmem:[#allocation4 + $0x188] sm:$0xff] %v3146
          %3211 = vst [vmem:[#allocation4 + $0x190] sm:$0xff] %v3147
          %3212 = vst [vmem:[#allocation4 + $0x198] sm:$0xff] %v3148
          %3213 = vst [vmem:[#allocation4 + $0x1a0] sm:$0xff] %v3149
          %3214 = vst [vmem:[#allocation4 + $0x1a8] sm:$0xff] %v3150
          %3215 = vst [vmem:[#allocation4 + $0x1b0] sm:$0xff] %v3151
          %3216 = vst [vmem:[#allocation4 + $0x1b8] sm:$0xff] %v3152
          %3217 = vst [vmem:[#allocation4 + $0x1c0] sm:$0xff] %v3153
          %3218 = vst [vmem:[#allocation4 + $0x1c8] sm:$0xff] %v3154
          %3219 = vst [vmem:[#allocation4 + $0x1d0] sm:$0xff] %v3155
          %3220 = vst [vmem:[#allocation4 + $0x1d8] sm:$0xff] %v3156
          %3221 = vst [vmem:[#allocation4 + $0x1e0] sm:$0xff] %v3157
          %3222 = vst [vmem:[#allocation4 + $0x1e8] sm:$0xff] %v3158
          %3223 = vst [vmem:[#allocation4 + $0x1f0] sm:$0xff] %v3159
          %3224 = vst [vmem:[#allocation4 + $0x1f8] sm:$0xff] %v3160
        $region64: #{tpu_custom_call.1} parent=39 // pred_fallthru
          _
        %p3225 = scmp.ge.s32.totalorder %s26, 1
        // Predicated region
        $region65: #{tpu_custom_call.1} parent=39 // pred_check
          %p3226 = pneg %p3225
        $region66: #{tpu_custom_call.1} parent=39 // pred_check_branch
          %3228 = sbr.rel (%p3226) target = $region68
        $region67: #{tpu_custom_call.1} parent=39 // pred_region
          %v3229 = vld [vmem:[#allocation3] sm:$0x3]
          %v3232 = vcombine.low %v2580, %v2586
          %v3234 = vunpack.c.l.s4 1966171168
          %v3235 = vunpack.c.0.s8 %v3234
          %v3236 = vlaneseq
          %v3237 = vshrl.u32 %v3236, 7
          %v3238 = vsub.s32 %v3235, %v3237
          %v3239 = vrot.slane %v3232, %v3238
          %v3241 = vunpack.c.l.s4 1966171168
          %v3242 = vunpack.c.0.s8 %v3241
          %v3243 = vlaneseq
          %v3244 = vshrl.u32 %v3243, 7
          %v3245 = vsub.s32 %v3242, %v3244
          %v3246 = vrot.slane %v3239, %v3245
          %v3248 = vadd.f32 %v3229, %v3246
          %v3249 = vlaneseq
          %vm3250 = vcmp.ge.s32.totalorder %v3249, 0
          %vm3251 = vcmp.lt.s32.totalorder %v3249, 256
          %vm3252 = vmand %vm3250, %vm3251
          %3253 = vst.msk [vmem:[#allocation3] sm:$0x3] %vm3252, %v3248
          %v3254 = vld [vmem:[#allocation5] sm:$0xff]
          %v3255 = vld [vmem:[#allocation5 + $0x8] sm:$0xff]
          %v3256 = vld [vmem:[#allocation5 + $0x10] sm:$0xff]
          %v3257 = vld [vmem:[#allocation5 + $0x18] sm:$0xff]
          %v3258 = vld [vmem:[#allocation5 + $0x20] sm:$0xff]
          %v3259 = vld [vmem:[#allocation5 + $0x28] sm:$0xff]
          %v3260 = vld [vmem:[#allocation5 + $0x30] sm:$0xff]
          %v3261 = vld [vmem:[#allocation5 + $0x38] sm:$0xff]
          %v3262 = vld [vmem:[#allocation5 + $0x40] sm:$0xff]
          %v3263 = vld [vmem:[#allocation5 + $0x48] sm:$0xff]
          %v3264 = vld [vmem:[#allocation5 + $0x50] sm:$0xff]
          %v3265 = vld [vmem:[#allocation5 + $0x58] sm:$0xff]
          %v3266 = vld [vmem:[#allocation5 + $0x60] sm:$0xff]
          %v3267 = vld [vmem:[#allocation5 + $0x68] sm:$0xff]
          %v3268 = vld [vmem:[#allocation5 + $0x70] sm:$0xff]
          %v3269 = vld [vmem:[#allocation5 + $0x78] sm:$0xff]
          %v3270 = vld [vmem:[#allocation5 + $0x80] sm:$0xff]
          %v3271 = vld [vmem:[#allocation5 + $0x88] sm:$0xff]
          %v3272 = vld [vmem:[#allocation5 + $0x90] sm:$0xff]
          %v3273 = vld [vmem:[#allocation5 + $0x98] sm:$0xff]
          %v3274 = vld [vmem:[#allocation5 + $0xa0] sm:$0xff]
          %v3275 = vld [vmem:[#allocation5 + $0xa8] sm:$0xff]
          %v3276 = vld [vmem:[#allocation5 + $0xb0] sm:$0xff]
          %v3277 = vld [vmem:[#allocation5 + $0xb8] sm:$0xff]
          %v3278 = vld [vmem:[#allocation5 + $0xc0] sm:$0xff]
          %v3279 = vld [vmem:[#allocation5 + $0xc8] sm:$0xff]
          %v3280 = vld [vmem:[#allocation5 + $0xd0] sm:$0xff]
          %v3281 = vld [vmem:[#allocation5 + $0xd8] sm:$0xff]
          %v3282 = vld [vmem:[#allocation5 + $0xe0] sm:$0xff]
          %v3283 = vld [vmem:[#allocation5 + $0xe8] sm:$0xff]
          %v3284 = vld [vmem:[#allocation5 + $0xf0] sm:$0xff]
          %v3285 = vld [vmem:[#allocation5 + $0xf8] sm:$0xff]
          %v3286 = vld [vmem:[#allocation5 + $0x100] sm:$0xff]
          %v3287 = vld [vmem:[#allocation5 + $0x108] sm:$0xff]
          %v3288 = vld [vmem:[#allocation5 + $0x110] sm:$0xff]
          %v3289 = vld [vmem:[#allocation5 + $0x118] sm:$0xff]
          %v3290 = vld [vmem:[#allocation5 + $0x120] sm:$0xff]
          %v3291 = vld [vmem:[#allocation5 + $0x128] sm:$0xff]
          %v3292 = vld [vmem:[#allocation5 + $0x130] sm:$0xff]
          %v3293 = vld [vmem:[#allocation5 + $0x138] sm:$0xff]
          %v3294 = vld [vmem:[#allocation5 + $0x140] sm:$0xff]
          %v3295 = vld [vmem:[#allocation5 + $0x148] sm:$0xff]
          %v3296 = vld [vmem:[#allocation5 + $0x150] sm:$0xff]
          %v3297 = vld [vmem:[#allocation5 + $0x158] sm:$0xff]
          %v3298 = vld [vmem:[#allocation5 + $0x160] sm:$0xff]
          %v3299 = vld [vmem:[#allocation5 + $0x168] sm:$0xff]
          %v3300 = vld [vmem:[#allocation5 + $0x170] sm:$0xff]
          %v3301 = vld [vmem:[#allocation5 + $0x178] sm:$0xff]
          %v3302 = vld [vmem:[#allocation5 + $0x180] sm:$0xff]
          %v3303 = vld [vmem:[#allocation5 + $0x188] sm:$0xff]
          %v3304 = vld [vmem:[#allocation5 + $0x190] sm:$0xff]
          %v3305 = vld [vmem:[#allocation5 + $0x198] sm:$0xff]
          %v3306 = vld [vmem:[#allocation5 + $0x1a0] sm:$0xff]
          %v3307 = vld [vmem:[#allocation5 + $0x1a8] sm:$0xff]
          %v3308 = vld [vmem:[#allocation5 + $0x1b0] sm:$0xff]
          %v3309 = vld [vmem:[#allocation5 + $0x1b8] sm:$0xff]
          %v3310 = vld [vmem:[#allocation5 + $0x1c0] sm:$0xff]
          %v3311 = vld [vmem:[#allocation5 + $0x1c8] sm:$0xff]
          %v3312 = vld [vmem:[#allocation5 + $0x1d0] sm:$0xff]
          %v3313 = vld [vmem:[#allocation5 + $0x1d8] sm:$0xff]
          %v3314 = vld [vmem:[#allocation5 + $0x1e0] sm:$0xff]
          %v3315 = vld [vmem:[#allocation5 + $0x1e8] sm:$0xff]
          %v3316 = vld [vmem:[#allocation5 + $0x1f0] sm:$0xff]
          %v3317 = vld [vmem:[#allocation5 + $0x1f8] sm:$0xff]
          %v3318 = vadd.f32 %v3254, %v2815
          %v3319 = vadd.f32 %v3255, %v2817
          %v3320 = vadd.f32 %v3256, %v2821
          %v3321 = vadd.f32 %v3257, %v2823
          %v3322 = vadd.f32 %v3258, %v2827
          %v3323 = vadd.f32 %v3259, %v2829
          %v3324 = vadd.f32 %v3260, %v2833
          %v3325 = vadd.f32 %v3261, %v2835
          %v3326 = vadd.f32 %v3262, %v2839
          %v3327 = vadd.f32 %v3263, %v2841
          %v3328 = vadd.f32 %v3264, %v2845
          %v3329 = vadd.f32 %v3265, %v2847
          %v3330 = vadd.f32 %v3266, %v2851
          %v3331 = vadd.f32 %v3267, %v2853
          %v3332 = vadd.f32 %v3268, %v2857
          %v3333 = vadd.f32 %v3269, %v2859
          %v3334 = vadd.f32 %v3270, %v2863
          %v3335 = vadd.f32 %v3271, %v2865
          %v3336 = vadd.f32 %v3272, %v2869
          %v3337 = vadd.f32 %v3273, %v2871
          %v3338 = vadd.f32 %v3274, %v2875
          %v3339 = vadd.f32 %v3275, %v2877
          %v3340 = vadd.f32 %v3276, %v2881
          %v3341 = vadd.f32 %v3277, %v2883
          %v3342 = vadd.f32 %v3278, %v2887
          %v3343 = vadd.f32 %v3279, %v2889
          %v3344 = vadd.f32 %v3280, %v2893
          %v3345 = vadd.f32 %v3281, %v2895
          %v3346 = vadd.f32 %v3282, %v2899
          %v3347 = vadd.f32 %v3283, %v2901
          %v3348 = vadd.f32 %v3284, %v2905
          %v3349 = vadd.f32 %v3285, %v2907
          %v3350 = vadd.f32 %v3286, %v2911
          %v3351 = vadd.f32 %v3287, %v2913
          %v3352 = vadd.f32 %v3288, %v2917
          %v3353 = vadd.f32 %v3289, %v2919
          %v3354 = vadd.f32 %v3290, %v2923
          %v3355 = vadd.f32 %v3291, %v2925
          %v3356 = vadd.f32 %v3292, %v2929
          %v3357 = vadd.f32 %v3293, %v2931
          %v3358 = vadd.f32 %v3294, %v2935
          %v3359 = vadd.f32 %v3295, %v2937
          %v3360 = vadd.f32 %v3296, %v2941
          %v3361 = vadd.f32 %v3297, %v2943
          %v3362 = vadd.f32 %v3298, %v2947
          %v3363 = vadd.f32 %v3299, %v2949
          %v3364 = vadd.f32 %v3300, %v2953
          %v3365 = vadd.f32 %v3301, %v2955
          %v3366 = vadd.f32 %v3302, %v2959
          %v3367 = vadd.f32 %v3303, %v2961
          %v3368 = vadd.f32 %v3304, %v2965
          %v3369 = vadd.f32 %v3305, %v2967
          %v3370 = vadd.f32 %v3306, %v2971
          %v3371 = vadd.f32 %v3307, %v2973
          %v3372 = vadd.f32 %v3308, %v2977
          %v3373 = vadd.f32 %v3309, %v2979
          %v3374 = vadd.f32 %v3310, %v2983
          %v3375 = vadd.f32 %v3311, %v2985
          %v3376 = vadd.f32 %v3312, %v2989
          %v3377 = vadd.f32 %v3313, %v2991
          %v3378 = vadd.f32 %v3314, %v2995
          %v3379 = vadd.f32 %v3315, %v2997
          %v3380 = vadd.f32 %v3316, %v3001
          %v3381 = vadd.f32 %v3317, %v3003
          %3382 = vst [vmem:[#allocation5] sm:$0xff] %v3318
          %3383 = vst [vmem:[#allocation5 + $0x8] sm:$0xff] %v3319
          %3384 = vst [vmem:[#allocation5 + $0x10] sm:$0xff] %v3320
          %3385 = vst [vmem:[#allocation5 + $0x18] sm:$0xff] %v3321
          %3386 = vst [vmem:[#allocation5 + $0x20] sm:$0xff] %v3322
          %3387 = vst [vmem:[#allocation5 + $0x28] sm:$0xff] %v3323
          %3388 = vst [vmem:[#allocation5 + $0x30] sm:$0xff] %v3324
          %3389 = vst [vmem:[#allocation5 + $0x38] sm:$0xff] %v3325
          %3390 = vst [vmem:[#allocation5 + $0x40] sm:$0xff] %v3326
          %3391 = vst [vmem:[#allocation5 + $0x48] sm:$0xff] %v3327
          %3392 = vst [vmem:[#allocation5 + $0x50] sm:$0xff] %v3328
          %3393 = vst [vmem:[#allocation5 + $0x58] sm:$0xff] %v3329
          %3394 = vst [vmem:[#allocation5 + $0x60] sm:$0xff] %v3330
          %3395 = vst [vmem:[#allocation5 + $0x68] sm:$0xff] %v3331
          %3396 = vst [vmem:[#allocation5 + $0x70] sm:$0xff] %v3332
          %3397 = vst [vmem:[#allocation5 + $0x78] sm:$0xff] %v3333
          %3398 = vst [vmem:[#allocation5 + $0x80] sm:$0xff] %v3334
          %3399 = vst [vmem:[#allocation5 + $0x88] sm:$0xff] %v3335
          %3400 = vst [vmem:[#allocation5 + $0x90] sm:$0xff] %v3336
          %3401 = vst [vmem:[#allocation5 + $0x98] sm:$0xff] %v3337
          %3402 = vst [vmem:[#allocation5 + $0xa0] sm:$0xff] %v3338
          %3403 = vst [vmem:[#allocation5 + $0xa8] sm:$0xff] %v3339
          %3404 = vst [vmem:[#allocation5 + $0xb0] sm:$0xff] %v3340
          %3405 = vst [vmem:[#allocation5 + $0xb8] sm:$0xff] %v3341
          %3406 = vst [vmem:[#allocation5 + $0xc0] sm:$0xff] %v3342
          %3407 = vst [vmem:[#allocation5 + $0xc8] sm:$0xff] %v3343
          %3408 = vst [vmem:[#allocation5 + $0xd0] sm:$0xff] %v3344
          %3409 = vst [vmem:[#allocation5 + $0xd8] sm:$0xff] %v3345
          %3410 = vst [vmem:[#allocation5 + $0xe0] sm:$0xff] %v3346
          %3411 = vst [vmem:[#allocation5 + $0xe8] sm:$0xff] %v3347
          %3412 = vst [vmem:[#allocation5 + $0xf0] sm:$0xff] %v3348
          %3413 = vst [vmem:[#allocation5 + $0xf8] sm:$0xff] %v3349
          %3414 = vst [vmem:[#allocation5 + $0x100] sm:$0xff] %v3350
          %3415 = vst [vmem:[#allocation5 + $0x108] sm:$0xff] %v3351
          %3416 = vst [vmem:[#allocation5 + $0x110] sm:$0xff] %v3352
          %3417 = vst [vmem:[#allocation5 + $0x118] sm:$0xff] %v3353
          %3418 = vst [vmem:[#allocation5 + $0x120] sm:$0xff] %v3354
          %3419 = vst [vmem:[#allocation5 + $0x128] sm:$0xff] %v3355
          %3420 = vst [vmem:[#allocation5 + $0x130] sm:$0xff] %v3356
          %3421 = vst [vmem:[#allocation5 + $0x138] sm:$0xff] %v3357
          %3422 = vst [vmem:[#allocation5 + $0x140] sm:$0xff] %v3358
          %3423 = vst [vmem:[#allocation5 + $0x148] sm:$0xff] %v3359
          %3424 = vst [vmem:[#allocation5 + $0x150] sm:$0xff] %v3360
          %3425 = vst [vmem:[#allocation5 + $0x158] sm:$0xff] %v3361
          %3426 = vst [vmem:[#allocation5 + $0x160] sm:$0xff] %v3362
          %3427 = vst [vmem:[#allocation5 + $0x168] sm:$0xff] %v3363
          %3428 = vst [vmem:[#allocation5 + $0x170] sm:$0xff] %v3364
          %3429 = vst [vmem:[#allocation5 + $0x178] sm:$0xff] %v3365
          %3430 = vst [vmem:[#allocation5 + $0x180] sm:$0xff] %v3366
          %3431 = vst [vmem:[#allocation5 + $0x188] sm:$0xff] %v3367
          %3432 = vst [vmem:[#allocation5 + $0x190] sm:$0xff] %v3368
          %3433 = vst [vmem:[#allocation5 + $0x198] sm:$0xff] %v3369
          %3434 = vst [vmem:[#allocation5 + $0x1a0] sm:$0xff] %v3370
          %3435 = vst [vmem:[#allocation5 + $0x1a8] sm:$0xff] %v3371
          %3436 = vst [vmem:[#allocation5 + $0x1b0] sm:$0xff] %v3372
          %3437 = vst [vmem:[#allocation5 + $0x1b8] sm:$0xff] %v3373
          %3438 = vst [vmem:[#allocation5 + $0x1c0] sm:$0xff] %v3374
          %3439 = vst [vmem:[#allocation5 + $0x1c8] sm:$0xff] %v3375
          %3440 = vst [vmem:[#allocation5 + $0x1d0] sm:$0xff] %v3376
          %3441 = vst [vmem:[#allocation5 + $0x1d8] sm:$0xff] %v3377
          %3442 = vst [vmem:[#allocation5 + $0x1e0] sm:$0xff] %v3378
          %3443 = vst [vmem:[#allocation5 + $0x1e8] sm:$0xff] %v3379
          %3444 = vst [vmem:[#allocation5 + $0x1f0] sm:$0xff] %v3380
          %3445 = vst [vmem:[#allocation5 + $0x1f8] sm:$0xff] %v3381
        $region68: #{tpu_custom_call.1} parent=39 // pred_fallthru
          _
        %p3446 = scmp.eq.s32.totalorder %s26, 1
        // Predicated region
        $region69: #{tpu_custom_call.1} parent=39 // pred_check
          %p3447 = pneg %p3446
        $region70: #{tpu_custom_call.1} parent=39 // pred_check_branch
          %3449 = sbr.rel (%p3447) target = $region72
        $region71: #{tpu_custom_call.1} parent=39 // pred_region
          %v3450 = vld [vmem:[#allocation2] sm:$0x3]
          %v3451 = vld [vmem:[#allocation3] sm:$0x3]
          %v3452 = vld [vmem:[#allocation4] sm:$0xff]
          %v3453 = vld [vmem:[#allocation4 + $0x8] sm:$0xff]
          %v3454 = vld [vmem:[#allocation4 + $0x10] sm:$0xff]
          %v3455 = vld [vmem:[#allocation4 + $0x18] sm:$0xff]
          %v3456 = vld [vmem:[#allocation4 + $0x20] sm:$0xff]
          %v3457 = vld [vmem:[#allocation4 + $0x28] sm:$0xff]
          %v3458 = vld [vmem:[#allocation4 + $0x30] sm:$0xff]
          %v3459 = vld [vmem:[#allocation4 + $0x38] sm:$0xff]
          %v3460 = vld [vmem:[#allocation4 + $0x40] sm:$0xff]
          %v3461 = vld [vmem:[#allocation4 + $0x48] sm:$0xff]
          %v3462 = vld [vmem:[#allocation4 + $0x50] sm:$0xff]
          %v3463 = vld [vmem:[#allocation4 + $0x58] sm:$0xff]
          %v3464 = vld [vmem:[#allocation4 + $0x60] sm:$0xff]
          %v3465 = vld [vmem:[#allocation4 + $0x68] sm:$0xff]
          %v3466 = vld [vmem:[#allocation4 + $0x70] sm:$0xff]
          %v3467 = vld [vmem:[#allocation4 + $0x78] sm:$0xff]
          %v3468 = vld [vmem:[#allocation4 + $0x80] sm:$0xff]
          %v3469 = vld [vmem:[#allocation4 + $0x88] sm:$0xff]
          %v3470 = vld [vmem:[#allocation4 + $0x90] sm:$0xff]
          %v3471 = vld [vmem:[#allocation4 + $0x98] sm:$0xff]
          %v3472 = vld [vmem:[#allocation4 + $0xa0] sm:$0xff]
          %v3473 = vld [vmem:[#allocation4 + $0xa8] sm:$0xff]
          %v3474 = vld [vmem:[#allocation4 + $0xb0] sm:$0xff]
          %v3475 = vld [vmem:[#allocation4 + $0xb8] sm:$0xff]
          %v3476 = vld [vmem:[#allocation4 + $0xc0] sm:$0xff]
          %v3477 = vld [vmem:[#allocation4 + $0xc8] sm:$0xff]
          %v3478 = vld [vmem:[#allocation4 + $0xd0] sm:$0xff]
          %v3479 = vld [vmem:[#allocation4 + $0xd8] sm:$0xff]
          %v3480 = vld [vmem:[#allocation4 + $0xe0] sm:$0xff]
          %v3481 = vld [vmem:[#allocation4 + $0xe8] sm:$0xff]
          %v3482 = vld [vmem:[#allocation4 + $0xf0] sm:$0xff]
          %v3483 = vld [vmem:[#allocation4 + $0xf8] sm:$0xff]
          %v3484 = vld [vmem:[#allocation4 + $0x100] sm:$0xff]
          %v3485 = vld [vmem:[#allocation4 + $0x108] sm:$0xff]
          %v3486 = vld [vmem:[#allocation4 + $0x110] sm:$0xff]
          %v3487 = vld [vmem:[#allocation4 + $0x118] sm:$0xff]
          %v3488 = vld [vmem:[#allocation4 + $0x120] sm:$0xff]
          %v3489 = vld [vmem:[#allocation4 + $0x128] sm:$0xff]
          %v3490 = vld [vmem:[#allocation4 + $0x130] sm:$0xff]
          %v3491 = vld [vmem:[#allocation4 + $0x138] sm:$0xff]
          %v3492 = vld [vmem:[#allocation4 + $0x140] sm:$0xff]
          %v3493 = vld [vmem:[#allocation4 + $0x148] sm:$0xff]
          %v3494 = vld [vmem:[#allocation4 + $0x150] sm:$0xff]
          %v3495 = vld [vmem:[#allocation4 + $0x158] sm:$0xff]
          %v3496 = vld [vmem:[#allocation4 + $0x160] sm:$0xff]
          %v3497 = vld [vmem:[#allocation4 + $0x168] sm:$0xff]
          %v3498 = vld [vmem:[#allocation4 + $0x170] sm:$0xff]
          %v3499 = vld [vmem:[#allocation4 + $0x178] sm:$0xff]
          %v3500 = vld [vmem:[#allocation4 + $0x180] sm:$0xff]
          %v3501 = vld [vmem:[#allocation4 + $0x188] sm:$0xff]
          %v3502 = vld [vmem:[#allocation4 + $0x190] sm:$0xff]
          %v3503 = vld [vmem:[#allocation4 + $0x198] sm:$0xff]
          %v3504 = vld [vmem:[#allocation4 + $0x1a0] sm:$0xff]
          %v3505 = vld [vmem:[#allocation4 + $0x1a8] sm:$0xff]
          %v3506 = vld [vmem:[#allocation4 + $0x1b0] sm:$0xff]
          %v3507 = vld [vmem:[#allocation4 + $0x1b8] sm:$0xff]
          %v3508 = vld [vmem:[#allocation4 + $0x1c0] sm:$0xff]
          %v3509 = vld [vmem:[#allocation4 + $0x1c8] sm:$0xff]
          %v3510 = vld [vmem:[#allocation4 + $0x1d0] sm:$0xff]
          %v3511 = vld [vmem:[#allocation4 + $0x1d8] sm:$0xff]
          %v3512 = vld [vmem:[#allocation4 + $0x1e0] sm:$0xff]
          %v3513 = vld [vmem:[#allocation4 + $0x1e8] sm:$0xff]
          %v3514 = vld [vmem:[#allocation4 + $0x1f0] sm:$0xff]
          %v3515 = vld [vmem:[#allocation4 + $0x1f8] sm:$0xff]
          %v3517 = vlaneseq
          %v3518 = vshrl.u32 %v3517, 7
          %v3519 = vsub.s32 0, %v3518
          %v3520 = vrot.slane %v3450, %v3519
          %v3521 = vlaneseq
          %v3522 = vshrl.u32 %v3521, 7
          %v3523 = vsub.s32 1, %v3522
          %v3524 = vrot.slane %v3450, %v3523
          %3527 = vxpose.xlu0.b32.start [1/16] %v3520, 128
          %3528 = vxpose.xlu0.b32.cont [2/16] 0.0, 128
          %3529 = vxpose.xlu0.b32.cont [3/16] 0.0, 128
          %3530 = vxpose.xlu0.b32.cont [4/16] 0.0, 128
          %3531 = vxpose.xlu0.b32.cont [5/16] 0.0, 128
          %3532 = vxpose.xlu0.b32.cont [6/16] 0.0, 128
          %3533 = vxpose.xlu0.b32.cont [7/16] 0.0, 128
          %3534 = vxpose.xlu0.b32.cont [8/16] 0.0, 128
          %3535 = vxpose.xlu0.b32.cont [9/16] 0.0, 128
          %3536 = vxpose.xlu0.b32.cont [10/16] 0.0, 128
          %3537 = vxpose.xlu0.b32.cont [11/16] 0.0, 128
          %3538 = vxpose.xlu0.b32.cont [12/16] 0.0, 128
          %3539 = vxpose.xlu0.b32.cont [13/16] 0.0, 128
          %3540 = vxpose.xlu0.b32.cont [14/16] 0.0, 128
          %3541 = vxpose.xlu0.b32.cont [15/16] 0.0, 128
          %3542 = vxpose.xlu0.b32.end [16/16] 0.0, 128
          %v3543 = vpop.trf.xlu0
          %v3544 = vpop.trf.xlu0
          %v3545 = vpop.trf.xlu0
          %v3546 = vpop.trf.xlu0
          %v3547 = vpop.trf.xlu0
          %v3548 = vpop.trf.xlu0
          %v3549 = vpop.trf.xlu0
          %v3550 = vpop.trf.xlu0
          %v3551 = vpop.trf.xlu0
          %v3552 = vpop.trf.xlu0
          %v3553 = vpop.trf.xlu0
          %v3554 = vpop.trf.xlu0
          %v3555 = vpop.trf.xlu0
          %v3556 = vpop.trf.xlu0
          %v3557 = vpop.trf.xlu0
          %v3558 = vpop.trf.xlu0
          %3559 = vxpose.xlu0.b32.start [1/16] %v3524, 128
          %3560 = vxpose.xlu0.b32.cont [2/16] 0.0, 128
          %3561 = vxpose.xlu0.b32.cont [3/16] 0.0, 128
          %3562 = vxpose.xlu0.b32.cont [4/16] 0.0, 128
          %3563 = vxpose.xlu0.b32.cont [5/16] 0.0, 128
          %3564 = vxpose.xlu0.b32.cont [6/16] 0.0, 128
          %3565 = vxpose.xlu0.b32.cont [7/16] 0.0, 128
          %3566 = vxpose.xlu0.b32.cont [8/16] 0.0, 128
          %3567 = vxpose.xlu0.b32.cont [9/16] 0.0, 128
          %3568 = vxpose.xlu0.b32.cont [10/16] 0.0, 128
          %3569 = vxpose.xlu0.b32.cont [11/16] 0.0, 128
          %3570 = vxpose.xlu0.b32.cont [12/16] 0.0, 128
          %3571 = vxpose.xlu0.b32.cont [13/16] 0.0, 128
          %3572 = vxpose.xlu0.b32.cont [14/16] 0.0, 128
          %3573 = vxpose.xlu0.b32.cont [15/16] 0.0, 128
          %3574 = vxpose.xlu0.b32.end [16/16] 0.0, 128
          %v3575 = vpop.trf.xlu0
          %v3576 = vpop.trf.xlu0
          %v3577 = vpop.trf.xlu0
          %v3578 = vpop.trf.xlu0
          %v3579 = vpop.trf.xlu0
          %v3580 = vpop.trf.xlu0
          %v3581 = vpop.trf.xlu0
          %v3582 = vpop.trf.xlu0
          %v3583 = vpop.trf.xlu0
          %v3584 = vpop.trf.xlu0
          %v3585 = vpop.trf.xlu0
          %v3586 = vpop.trf.xlu0
          %v3587 = vpop.trf.xlu0
          %v3588 = vpop.trf.xlu0
          %v3589 = vpop.trf.xlu0
          %v3590 = vpop.trf.xlu0
          %3592 = vset.pattern.permute.xlu0 0
          %3593 = vperm.xlu0 %3592, %v3543
          %v3594 = vpop.permute.xlu0 %3593
          %3597 = vset.pattern.permute.xlu0 0
          %3598 = vperm.xlu0 %3597, %v3544
          %v3599 = vpop.permute.xlu0 %3598
          %3602 = vset.pattern.permute.xlu0 0
          %3603 = vperm.xlu0 %3602, %v3545
          %v3604 = vpop.permute.xlu0 %3603
          %3607 = vset.pattern.permute.xlu0 0
          %3608 = vperm.xlu0 %3607, %v3546
          %v3609 = vpop.permute.xlu0 %3608
          %3612 = vset.pattern.permute.xlu0 0
          %3613 = vperm.xlu0 %3612, %v3547
          %v3614 = vpop.permute.xlu0 %3613
          %3617 = vset.pattern.permute.xlu0 0
          %3618 = vperm.xlu0 %3617, %v3548
          %v3619 = vpop.permute.xlu0 %3618
          %3622 = vset.pattern.permute.xlu0 0
          %3623 = vperm.xlu0 %3622, %v3549
          %v3624 = vpop.permute.xlu0 %3623
          %3627 = vset.pattern.permute.xlu0 0
          %3628 = vperm.xlu0 %3627, %v3550
          %v3629 = vpop.permute.xlu0 %3628
          %3632 = vset.pattern.permute.xlu0 0
          %3633 = vperm.xlu0 %3632, %v3551
          %v3634 = vpop.permute.xlu0 %3633
          %3637 = vset.pattern.permute.xlu0 0
          %3638 = vperm.xlu0 %3637, %v3552
          %v3639 = vpop.permute.xlu0 %3638
          %3642 = vset.pattern.permute.xlu0 0
          %3643 = vperm.xlu0 %3642, %v3553
          %v3644 = vpop.permute.xlu0 %3643
          %3647 = vset.pattern.permute.xlu0 0
          %3648 = vperm.xlu0 %3647, %v3554
          %v3649 = vpop.permute.xlu0 %3648
          %3652 = vset.pattern.permute.xlu0 0
          %3653 = vperm.xlu0 %3652, %v3555
          %v3654 = vpop.permute.xlu0 %3653
          %3657 = vset.pattern.permute.xlu0 0
          %3658 = vperm.xlu0 %3657, %v3556
          %v3659 = vpop.permute.xlu0 %3658
          %3662 = vset.pattern.permute.xlu0 0
          %3663 = vperm.xlu0 %3662, %v3557
          %v3664 = vpop.permute.xlu0 %3663
          %3667 = vset.pattern.permute.xlu0 0
          %3668 = vperm.xlu0 %3667, %v3558
          %v3669 = vpop.permute.xlu0 %3668
          %3672 = vset.pattern.permute.xlu0 0
          %3673 = vperm.xlu0 %3672, %v3575
          %v3674 = vpop.permute.xlu0 %3673
          %3677 = vset.pattern.permute.xlu0 0
          %3678 = vperm.xlu0 %3677, %v3576
          %v3679 = vpop.permute.xlu0 %3678
          %3682 = vset.pattern.permute.xlu0 0
          %3683 = vperm.xlu0 %3682, %v3577
          %v3684 = vpop.permute.xlu0 %3683
          %3687 = vset.pattern.permute.xlu0 0
          %3688 = vperm.xlu0 %3687, %v3578
          %v3689 = vpop.permute.xlu0 %3688
          %3692 = vset.pattern.permute.xlu0 0
          %3693 = vperm.xlu0 %3692, %v3579
          %v3694 = vpop.permute.xlu0 %3693
          %3697 = vset.pattern.permute.xlu0 0
          %3698 = vperm.xlu0 %3697, %v3580
          %v3699 = vpop.permute.xlu0 %3698
          %3702 = vset.pattern.permute.xlu0 0
          %3703 = vperm.xlu0 %3702, %v3581
          %v3704 = vpop.permute.xlu0 %3703
          %3707 = vset.pattern.permute.xlu0 0
          %3708 = vperm.xlu0 %3707, %v3582
          %v3709 = vpop.permute.xlu0 %3708
          %3712 = vset.pattern.permute.xlu0 0
          %3713 = vperm.xlu0 %3712, %v3583
          %v3714 = vpop.permute.xlu0 %3713
          %3717 = vset.pattern.permute.xlu0 0
          %3718 = vperm.xlu0 %3717, %v3584
          %v3719 = vpop.permute.xlu0 %3718
          %3722 = vset.pattern.permute.xlu0 0
          %3723 = vperm.xlu0 %3722, %v3585
          %v3724 = vpop.permute.xlu0 %3723
          %3727 = vset.pattern.permute.xlu0 0
          %3728 = vperm.xlu0 %3727, %v3586
          %v3729 = vpop.permute.xlu0 %3728
          %3732 = vset.pattern.permute.xlu0 0
          %3733 = vperm.xlu0 %3732, %v3587
          %v3734 = vpop.permute.xlu0 %3733
          %3737 = vset.pattern.permute.xlu0 0
          %3738 = vperm.xlu0 %3737, %v3588
          %v3739 = vpop.permute.xlu0 %3738
          %3742 = vset.pattern.permute.xlu0 0
          %3743 = vperm.xlu0 %3742, %v3589
          %v3744 = vpop.permute.xlu0 %3743
          %3747 = vset.pattern.permute.xlu0 0
          %3748 = vperm.xlu0 %3747, %v3590
          %v3749 = vpop.permute.xlu0 %3748
          %v3751 = vmul.f32 %v3594, %v3520
          %v3752 = vmul.f32 %v3594, %v3524
          %v3753 = vmul.f32 %v3599, %v3520
          %v3754 = vmul.f32 %v3599, %v3524
          %v3755 = vmul.f32 %v3604, %v3520
          %v3756 = vmul.f32 %v3604, %v3524
          %v3757 = vmul.f32 %v3609, %v3520
          %v3758 = vmul.f32 %v3609, %v3524
          %v3759 = vmul.f32 %v3614, %v3520
          %v3760 = vmul.f32 %v3614, %v3524
          %v3761 = vmul.f32 %v3619, %v3520
          %v3762 = vmul.f32 %v3619, %v3524
          %v3763 = vmul.f32 %v3624, %v3520
          %v3764 = vmul.f32 %v3624, %v3524
          %v3765 = vmul.f32 %v3629, %v3520
          %v3766 = vmul.f32 %v3629, %v3524
          %v3767 = vmul.f32 %v3634, %v3520
          %v3768 = vmul.f32 %v3634, %v3524
          %v3769 = vmul.f32 %v3639, %v3520
          %v3770 = vmul.f32 %v3639, %v3524
          %v3771 = vmul.f32 %v3644, %v3520
          %v3772 = vmul.f32 %v3644, %v3524
          %v3773 = vmul.f32 %v3649, %v3520
          %v3774 = vmul.f32 %v3649, %v3524
          %v3775 = vmul.f32 %v3654, %v3520
          %v3776 = vmul.f32 %v3654, %v3524
          %v3777 = vmul.f32 %v3659, %v3520
          %v3778 = vmul.f32 %v3659, %v3524
          %v3779 = vmul.f32 %v3664, %v3520
          %v3780 = vmul.f32 %v3664, %v3524
          %v3781 = vmul.f32 %v3669, %v3520
          %v3782 = vmul.f32 %v3669, %v3524
          %v3783 = vmul.f32 %v3674, %v3520
          %v3784 = vmul.f32 %v3674, %v3524
          %v3785 = vmul.f32 %v3679, %v3520
          %v3786 = vmul.f32 %v3679, %v3524
          %v3787 = vmul.f32 %v3684, %v3520
          %v3788 = vmul.f32 %v3684, %v3524
          %v3789 = vmul.f32 %v3689, %v3520
          %v3790 = vmul.f32 %v3689, %v3524
          %v3791 = vmul.f32 %v3694, %v3520
          %v3792 = vmul.f32 %v3694, %v3524
          %v3793 = vmul.f32 %v3699, %v3520
          %v3794 = vmul.f32 %v3699, %v3524
          %v3795 = vmul.f32 %v3704, %v3520
          %v3796 = vmul.f32 %v3704, %v3524
          %v3797 = vmul.f32 %v3709, %v3520
          %v3798 = vmul.f32 %v3709, %v3524
          %v3799 = vmul.f32 %v3714, %v3520
          %v3800 = vmul.f32 %v3714, %v3524
          %v3801 = vmul.f32 %v3719, %v3520
          %v3802 = vmul.f32 %v3719, %v3524
          %v3803 = vmul.f32 %v3724, %v3520
          %v3804 = vmul.f32 %v3724, %v3524
          %v3805 = vmul.f32 %v3729, %v3520
          %v3806 = vmul.f32 %v3729, %v3524
          %v3807 = vmul.f32 %v3734, %v3520
          %v3808 = vmul.f32 %v3734, %v3524
          %v3809 = vmul.f32 %v3739, %v3520
          %v3810 = vmul.f32 %v3739, %v3524
          %v3811 = vmul.f32 %v3744, %v3520
          %v3812 = vmul.f32 %v3744, %v3524
          %v3813 = vmul.f32 %v3749, %v3520
          %v3814 = vmul.f32 %v3749, %v3524
          %v3815 = vrcp.pop 4.0
          %v3816 = vmul.f32 %v3751, %v3815
          %v3817 = vmul.f32 %v3752, %v3815
          %v3818 = vmul.f32 %v3753, %v3815
          %v3819 = vmul.f32 %v3754, %v3815
          %v3820 = vmul.f32 %v3755, %v3815
          %v3821 = vmul.f32 %v3756, %v3815
          %v3822 = vmul.f32 %v3757, %v3815
          %v3823 = vmul.f32 %v3758, %v3815
          %v3824 = vmul.f32 %v3759, %v3815
          %v3825 = vmul.f32 %v3760, %v3815
          %v3826 = vmul.f32 %v3761, %v3815
          %v3827 = vmul.f32 %v3762, %v3815
          %v3828 = vmul.f32 %v3763, %v3815
          %v3829 = vmul.f32 %v3764, %v3815
          %v3830 = vmul.f32 %v3765, %v3815
          %v3831 = vmul.f32 %v3766, %v3815
          %v3832 = vmul.f32 %v3767, %v3815
          %v3833 = vmul.f32 %v3768, %v3815
          %v3834 = vmul.f32 %v3769, %v3815
          %v3835 = vmul.f32 %v3770, %v3815
          %v3836 = vmul.f32 %v3771, %v3815
          %v3837 = vmul.f32 %v3772, %v3815
          %v3838 = vmul.f32 %v3773, %v3815
          %v3839 = vmul.f32 %v3774, %v3815
          %v3840 = vmul.f32 %v3775, %v3815
          %v3841 = vmul.f32 %v3776, %v3815
          %v3842 = vmul.f32 %v3777, %v3815
          %v3843 = vmul.f32 %v3778, %v3815
          %v3844 = vmul.f32 %v3779, %v3815
          %v3845 = vmul.f32 %v3780, %v3815
          %v3846 = vmul.f32 %v3781, %v3815
          %v3847 = vmul.f32 %v3782, %v3815
          %v3848 = vmul.f32 %v3783, %v3815
          %v3849 = vmul.f32 %v3784, %v3815
          %v3850 = vmul.f32 %v3785, %v3815
          %v3851 = vmul.f32 %v3786, %v3815
          %v3852 = vmul.f32 %v3787, %v3815
          %v3853 = vmul.f32 %v3788, %v3815
          %v3854 = vmul.f32 %v3789, %v3815
          %v3855 = vmul.f32 %v3790, %v3815
          %v3856 = vmul.f32 %v3791, %v3815
          %v3857 = vmul.f32 %v3792, %v3815
          %v3858 = vmul.f32 %v3793, %v3815
          %v3859 = vmul.f32 %v3794, %v3815
          %v3860 = vmul.f32 %v3795, %v3815
          %v3861 = vmul.f32 %v3796, %v3815
          %v3862 = vmul.f32 %v3797, %v3815
          %v3863 = vmul.f32 %v3798, %v3815
          %v3864 = vmul.f32 %v3799, %v3815
          %v3865 = vmul.f32 %v3800, %v3815
          %v3866 = vmul.f32 %v3801, %v3815
          %v3867 = vmul.f32 %v3802, %v3815
          %v3868 = vmul.f32 %v3803, %v3815
          %v3869 = vmul.f32 %v3804, %v3815
          %v3870 = vmul.f32 %v3805, %v3815
          %v3871 = vmul.f32 %v3806, %v3815
          %v3872 = vmul.f32 %v3807, %v3815
          %v3873 = vmul.f32 %v3808, %v3815
          %v3874 = vmul.f32 %v3809, %v3815
          %v3875 = vmul.f32 %v3810, %v3815
          %v3876 = vmul.f32 %v3811, %v3815
          %v3877 = vmul.f32 %v3812, %v3815
          %v3878 = vmul.f32 %v3813, %v3815
          %v3879 = vmul.f32 %v3814, %v3815
          %v3880 = vsub.f32 %v3452, %v3816
          %v3881 = vsub.f32 %v3453, %v3817
          %v3882 = vsub.f32 %v3454, %v3818
          %v3883 = vsub.f32 %v3455, %v3819
          %v3884 = vsub.f32 %v3456, %v3820
          %v3885 = vsub.f32 %v3457, %v3821
          %v3886 = vsub.f32 %v3458, %v3822
          %v3887 = vsub.f32 %v3459, %v3823
          %v3888 = vsub.f32 %v3460, %v3824
          %v3889 = vsub.f32 %v3461, %v3825
          %v3890 = vsub.f32 %v3462, %v3826
          %v3891 = vsub.f32 %v3463, %v3827
          %v3892 = vsub.f32 %v3464, %v3828
          %v3893 = vsub.f32 %v3465, %v3829
          %v3894 = vsub.f32 %v3466, %v3830
          %v3895 = vsub.f32 %v3467, %v3831
          %v3896 = vsub.f32 %v3468, %v3832
          %v3897 = vsub.f32 %v3469, %v3833
          %v3898 = vsub.f32 %v3470, %v3834
          %v3899 = vsub.f32 %v3471, %v3835
          %v3900 = vsub.f32 %v3472, %v3836
          %v3901 = vsub.f32 %v3473, %v3837
          %v3902 = vsub.f32 %v3474, %v3838
          %v3903 = vsub.f32 %v3475, %v3839
          %v3904 = vsub.f32 %v3476, %v3840
          %v3905 = vsub.f32 %v3477, %v3841
          %v3906 = vsub.f32 %v3478, %v3842
          %v3907 = vsub.f32 %v3479, %v3843
          %v3908 = vsub.f32 %v3480, %v3844
          %v3909 = vsub.f32 %v3481, %v3845
          %v3910 = vsub.f32 %v3482, %v3846
          %v3911 = vsub.f32 %v3483, %v3847
          %v3912 = vsub.f32 %v3484, %v3848
          %v3913 = vsub.f32 %v3485, %v3849
          %v3914 = vsub.f32 %v3486, %v3850
          %v3915 = vsub.f32 %v3487, %v3851
          %v3916 = vsub.f32 %v3488, %v3852
          %v3917 = vsub.f32 %v3489, %v3853
          %v3918 = vsub.f32 %v3490, %v3854
          %v3919 = vsub.f32 %v3491, %v3855
          %v3920 = vsub.f32 %v3492, %v3856
          %v3921 = vsub.f32 %v3493, %v3857
          %v3922 = vsub.f32 %v3494, %v3858
          %v3923 = vsub.f32 %v3495, %v3859
          %v3924 = vsub.f32 %v3496, %v3860
          %v3925 = vsub.f32 %v3497, %v3861
          %v3926 = vsub.f32 %v3498, %v3862
          %v3927 = vsub.f32 %v3499, %v3863
          %v3928 = vsub.f32 %v3500, %v3864
          %v3929 = vsub.f32 %v3501, %v3865
          %v3930 = vsub.f32 %v3502, %v3866
          %v3931 = vsub.f32 %v3503, %v3867
          %v3932 = vsub.f32 %v3504, %v3868
          %v3933 = vsub.f32 %v3505, %v3869
          %v3934 = vsub.f32 %v3506, %v3870
          %v3935 = vsub.f32 %v3507, %v3871
          %v3936 = vsub.f32 %v3508, %v3872
          %v3937 = vsub.f32 %v3509, %v3873
          %v3938 = vsub.f32 %v3510, %v3874
          %v3939 = vsub.f32 %v3511, %v3875
          %v3940 = vsub.f32 %v3512, %v3876
          %v3941 = vsub.f32 %v3513, %v3877
          %v3942 = vsub.f32 %v3514, %v3878
          %v3943 = vsub.f32 %v3515, %v3879
          %v3944 = vrcp.pop 3.0
          %v3945 = vmul.f32 %v3880, %v3944
          %v3946 = vmul.f32 %v3881, %v3944
          %v3947 = vmul.f32 %v3882, %v3944
          %v3948 = vmul.f32 %v3883, %v3944
          %v3949 = vmul.f32 %v3884, %v3944
          %v3950 = vmul.f32 %v3885, %v3944
          %v3951 = vmul.f32 %v3886, %v3944
          %v3952 = vmul.f32 %v3887, %v3944
          %v3953 = vmul.f32 %v3888, %v3944
          %v3954 = vmul.f32 %v3889, %v3944
          %v3955 = vmul.f32 %v3890, %v3944
          %v3956 = vmul.f32 %v3891, %v3944
          %v3957 = vmul.f32 %v3892, %v3944
          %v3958 = vmul.f32 %v3893, %v3944
          %v3959 = vmul.f32 %v3894, %v3944
          %v3960 = vmul.f32 %v3895, %v3944
          %v3961 = vmul.f32 %v3896, %v3944
          %v3962 = vmul.f32 %v3897, %v3944
          %v3963 = vmul.f32 %v3898, %v3944
          %v3964 = vmul.f32 %v3899, %v3944
          %v3965 = vmul.f32 %v3900, %v3944
          %v3966 = vmul.f32 %v3901, %v3944
          %v3967 = vmul.f32 %v3902, %v3944
          %v3968 = vmul.f32 %v3903, %v3944
          %v3969 = vmul.f32 %v3904, %v3944
          %v3970 = vmul.f32 %v3905, %v3944
          %v3971 = vmul.f32 %v3906, %v3944
          %v3972 = vmul.f32 %v3907, %v3944
          %v3973 = vmul.f32 %v3908, %v3944
          %v3974 = vmul.f32 %v3909, %v3944
          %v3975 = vmul.f32 %v3910, %v3944
          %v3976 = vmul.f32 %v3911, %v3944
          %v3977 = vmul.f32 %v3912, %v3944
          %v3978 = vmul.f32 %v3913, %v3944
          %v3979 = vmul.f32 %v3914, %v3944
          %v3980 = vmul.f32 %v3915, %v3944
          %v3981 = vmul.f32 %v3916, %v3944
          %v3982 = vmul.f32 %v3917, %v3944
          %v3983 = vmul.f32 %v3918, %v3944
          %v3984 = vmul.f32 %v3919, %v3944
          %v3985 = vmul.f32 %v3920, %v3944
          %v3986 = vmul.f32 %v3921, %v3944
          %v3987 = vmul.f32 %v3922, %v3944
          %v3988 = vmul.f32 %v3923, %v3944
          %v3989 = vmul.f32 %v3924, %v3944
          %v3990 = vmul.f32 %v3925, %v3944
          %v3991 = vmul.f32 %v3926, %v3944
          %v3992 = vmul.f32 %v3927, %v3944
          %v3993 = vmul.f32 %v3928, %v3944
          %v3994 = vmul.f32 %v3929, %v3944
          %v3995 = vmul.f32 %v3930, %v3944
          %v3996 = vmul.f32 %v3931, %v3944
          %v3997 = vmul.f32 %v3932, %v3944
          %v3998 = vmul.f32 %v3933, %v3944
          %v3999 = vmul.f32 %v3934, %v3944
          %v4000 = vmul.f32 %v3935, %v3944
          %v4001 = vmul.f32 %v3936, %v3944
          %v4002 = vmul.f32 %v3937, %v3944
          %v4003 = vmul.f32 %v3938, %v3944
          %v4004 = vmul.f32 %v3939, %v3944
          %v4005 = vmul.f32 %v3940, %v3944
          %v4006 = vmul.f32 %v3941, %v3944
          %v4007 = vmul.f32 %v3942, %v3944
          %v4008 = vmul.f32 %v3943, %v3944
          %v4009 = vld [vmem:[#allocation5] sm:$0xff]
          %v4010 = vld [vmem:[#allocation5 + $0x8] sm:$0xff]
          %v4011 = vld [vmem:[#allocation5 + $0x10] sm:$0xff]
          %v4012 = vld [vmem:[#allocation5 + $0x18] sm:$0xff]
          %v4013 = vld [vmem:[#allocation5 + $0x20] sm:$0xff]
          %v4014 = vld [vmem:[#allocation5 + $0x28] sm:$0xff]
          %v4015 = vld [vmem:[#allocation5 + $0x30] sm:$0xff]
          %v4016 = vld [vmem:[#allocation5 + $0x38] sm:$0xff]
          %v4017 = vld [vmem:[#allocation5 + $0x40] sm:$0xff]
          %v4018 = vld [vmem:[#allocation5 + $0x48] sm:$0xff]
          %v4019 = vld [vmem:[#allocation5 + $0x50] sm:$0xff]
          %v4020 = vld [vmem:[#allocation5 + $0x58] sm:$0xff]
          %v4021 = vld [vmem:[#allocation5 + $0x60] sm:$0xff]
          %v4022 = vld [vmem:[#allocation5 + $0x68] sm:$0xff]
          %v4023 = vld [vmem:[#allocation5 + $0x70] sm:$0xff]
          %v4024 = vld [vmem:[#allocation5 + $0x78] sm:$0xff]
          %v4025 = vld [vmem:[#allocation5 + $0x80] sm:$0xff]
          %v4026 = vld [vmem:[#allocation5 + $0x88] sm:$0xff]
          %v4027 = vld [vmem:[#allocation5 + $0x90] sm:$0xff]
          %v4028 = vld [vmem:[#allocation5 + $0x98] sm:$0xff]
          %v4029 = vld [vmem:[#allocation5 + $0xa0] sm:$0xff]
          %v4030 = vld [vmem:[#allocation5 + $0xa8] sm:$0xff]
          %v4031 = vld [vmem:[#allocation5 + $0xb0] sm:$0xff]
          %v4032 = vld [vmem:[#allocation5 + $0xb8] sm:$0xff]
          %v4033 = vld [vmem:[#allocation5 + $0xc0] sm:$0xff]
          %v4034 = vld [vmem:[#allocation5 + $0xc8] sm:$0xff]
          %v4035 = vld [vmem:[#allocation5 + $0xd0] sm:$0xff]
          %v4036 = vld [vmem:[#allocation5 + $0xd8] sm:$0xff]
          %v4037 = vld [vmem:[#allocation5 + $0xe0] sm:$0xff]
          %v4038 = vld [vmem:[#allocation5 + $0xe8] sm:$0xff]
          %v4039 = vld [vmem:[#allocation5 + $0xf0] sm:$0xff]
          %v4040 = vld [vmem:[#allocation5 + $0xf8] sm:$0xff]
          %v4041 = vld [vmem:[#allocation5 + $0x100] sm:$0xff]
          %v4042 = vld [vmem:[#allocation5 + $0x108] sm:$0xff]
          %v4043 = vld [vmem:[#allocation5 + $0x110] sm:$0xff]
          %v4044 = vld [vmem:[#allocation5 + $0x118] sm:$0xff]
          %v4045 = vld [vmem:[#allocation5 + $0x120] sm:$0xff]
          %v4046 = vld [vmem:[#allocation5 + $0x128] sm:$0xff]
          %v4047 = vld [vmem:[#allocation5 + $0x130] sm:$0xff]
          %v4048 = vld [vmem:[#allocation5 + $0x138] sm:$0xff]
          %v4049 = vld [vmem:[#allocation5 + $0x140] sm:$0xff]
          %v4050 = vld [vmem:[#allocation5 + $0x148] sm:$0xff]
          %v4051 = vld [vmem:[#allocation5 + $0x150] sm:$0xff]
          %v4052 = vld [vmem:[#allocation5 + $0x158] sm:$0xff]
          %v4053 = vld [vmem:[#allocation5 + $0x160] sm:$0xff]
          %v4054 = vld [vmem:[#allocation5 + $0x168] sm:$0xff]
          %v4055 = vld [vmem:[#allocation5 + $0x170] sm:$0xff]
          %v4056 = vld [vmem:[#allocation5 + $0x178] sm:$0xff]
          %v4057 = vld [vmem:[#allocation5 + $0x180] sm:$0xff]
          %v4058 = vld [vmem:[#allocation5 + $0x188] sm:$0xff]
          %v4059 = vld [vmem:[#allocation5 + $0x190] sm:$0xff]
          %v4060 = vld [vmem:[#allocation5 + $0x198] sm:$0xff]
          %v4061 = vld [vmem:[#allocation5 + $0x1a0] sm:$0xff]
          %v4062 = vld [vmem:[#allocation5 + $0x1a8] sm:$0xff]
          %v4063 = vld [vmem:[#allocation5 + $0x1b0] sm:$0xff]
          %v4064 = vld [vmem:[#allocation5 + $0x1b8] sm:$0xff]
          %v4065 = vld [vmem:[#allocation5 + $0x1c0] sm:$0xff]
          %v4066 = vld [vmem:[#allocation5 + $0x1c8] sm:$0xff]
          %v4067 = vld [vmem:[#allocation5 + $0x1d0] sm:$0xff]
          %v4068 = vld [vmem:[#allocation5 + $0x1d8] sm:$0xff]
          %v4069 = vld [vmem:[#allocation5 + $0x1e0] sm:$0xff]
          %v4070 = vld [vmem:[#allocation5 + $0x1e8] sm:$0xff]
          %v4071 = vld [vmem:[#allocation5 + $0x1f0] sm:$0xff]
          %v4072 = vld [vmem:[#allocation5 + $0x1f8] sm:$0xff]
          %v4074 = vlaneseq
          %v4075 = vshrl.u32 %v4074, 7
          %v4076 = vsub.s32 0, %v4075
          %v4077 = vrot.slane %v3451, %v4076
          %v4078 = vlaneseq
          %v4079 = vshrl.u32 %v4078, 7
          %v4080 = vsub.s32 1, %v4079
          %v4081 = vrot.slane %v3451, %v4080
          %4084 = vxpose.xlu0.b32.start [1/16] %v4077, 128
          %4085 = vxpose.xlu0.b32.cont [2/16] 0.0, 128
          %4086 = vxpose.xlu0.b32.cont [3/16] 0.0, 128
          %4087 = vxpose.xlu0.b32.cont [4/16] 0.0, 128
          %4088 = vxpose.xlu0.b32.cont [5/16] 0.0, 128
          %4089 = vxpose.xlu0.b32.cont [6/16] 0.0, 128
          %4090 = vxpose.xlu0.b32.cont [7/16] 0.0, 128
          %4091 = vxpose.xlu0.b32.cont [8/16] 0.0, 128
          %4092 = vxpose.xlu0.b32.cont [9/16] 0.0, 128
          %4093 = vxpose.xlu0.b32.cont [10/16] 0.0, 128
          %4094 = vxpose.xlu0.b32.cont [11/16] 0.0, 128
          %4095 = vxpose.xlu0.b32.cont [12/16] 0.0, 128
          %4096 = vxpose.xlu0.b32.cont [13/16] 0.0, 128
          %4097 = vxpose.xlu0.b32.cont [14/16] 0.0, 128
          %4098 = vxpose.xlu0.b32.cont [15/16] 0.0, 128
          %4099 = vxpose.xlu0.b32.end [16/16] 0.0, 128
          %v4100 = vpop.trf.xlu0
          %v4101 = vpop.trf.xlu0
          %v4102 = vpop.trf.xlu0
          %v4103 = vpop.trf.xlu0
          %v4104 = vpop.trf.xlu0
          %v4105 = vpop.trf.xlu0
          %v4106 = vpop.trf.xlu0
          %v4107 = vpop.trf.xlu0
          %v4108 = vpop.trf.xlu0
          %v4109 = vpop.trf.xlu0
          %v4110 = vpop.trf.xlu0
          %v4111 = vpop.trf.xlu0
          %v4112 = vpop.trf.xlu0
          %v4113 = vpop.trf.xlu0
          %v4114 = vpop.trf.xlu0
          %v4115 = vpop.trf.xlu0
          %4116 = vxpose.xlu0.b32.start [1/16] %v4081, 128
          %4117 = vxpose.xlu0.b32.cont [2/16] 0.0, 128
          %4118 = vxpose.xlu0.b32.cont [3/16] 0.0, 128
          %4119 = vxpose.xlu0.b32.cont [4/16] 0.0, 128
          %4120 = vxpose.xlu0.b32.cont [5/16] 0.0, 128
          %4121 = vxpose.xlu0.b32.cont [6/16] 0.0, 128
          %4122 = vxpose.xlu0.b32.cont [7/16] 0.0, 128
          %4123 = vxpose.xlu0.b32.cont [8/16] 0.0, 128
          %4124 = vxpose.xlu0.b32.cont [9/16] 0.0, 128
          %4125 = vxpose.xlu0.b32.cont [10/16] 0.0, 128
          %4126 = vxpose.xlu0.b32.cont [11/16] 0.0, 128
          %4127 = vxpose.xlu0.b32.cont [12/16] 0.0, 128
          %4128 = vxpose.xlu0.b32.cont [13/16] 0.0, 128
          %4129 = vxpose.xlu0.b32.cont [14/16] 0.0, 128
          %4130 = vxpose.xlu0.b32.cont [15/16] 0.0, 128
          %4131 = vxpose.xlu0.b32.end [16/16] 0.0, 128
          %v4132 = vpop.trf.xlu0
          %v4133 = vpop.trf.xlu0
          %v4134 = vpop.trf.xlu0
          %v4135 = vpop.trf.xlu0
          %v4136 = vpop.trf.xlu0
          %v4137 = vpop.trf.xlu0
          %v4138 = vpop.trf.xlu0
          %v4139 = vpop.trf.xlu0
          %v4140 = vpop.trf.xlu0
          %v4141 = vpop.trf.xlu0
          %v4142 = vpop.trf.xlu0
          %v4143 = vpop.trf.xlu0
          %v4144 = vpop.trf.xlu0
          %v4145 = vpop.trf.xlu0
          %v4146 = vpop.trf.xlu0
          %v4147 = vpop.trf.xlu0
          %4149 = vset.pattern.permute.xlu0 0
          %4150 = vperm.xlu0 %4149, %v4100
          %v4151 = vpop.permute.xlu0 %4150
          %4154 = vset.pattern.permute.xlu0 0
          %4155 = vperm.xlu0 %4154, %v4101
          %v4156 = vpop.permute.xlu0 %4155
          %4159 = vset.pattern.permute.xlu0 0
          %4160 = vperm.xlu0 %4159, %v4102
          %v4161 = vpop.permute.xlu0 %4160
          %4164 = vset.pattern.permute.xlu0 0
          %4165 = vperm.xlu0 %4164, %v4103
          %v4166 = vpop.permute.xlu0 %4165
          %4169 = vset.pattern.permute.xlu0 0
          %4170 = vperm.xlu0 %4169, %v4104
          %v4171 = vpop.permute.xlu0 %4170
          %4174 = vset.pattern.permute.xlu0 0
          %4175 = vperm.xlu0 %4174, %v4105
          %v4176 = vpop.permute.xlu0 %4175
          %4179 = vset.pattern.permute.xlu0 0
          %4180 = vperm.xlu0 %4179, %v4106
          %v4181 = vpop.permute.xlu0 %4180
          %4184 = vset.pattern.permute.xlu0 0
          %4185 = vperm.xlu0 %4184, %v4107
          %v4186 = vpop.permute.xlu0 %4185
          %4189 = vset.pattern.permute.xlu0 0
          %4190 = vperm.xlu0 %4189, %v4108
          %v4191 = vpop.permute.xlu0 %4190
          %4194 = vset.pattern.permute.xlu0 0
          %4195 = vperm.xlu0 %4194, %v4109
          %v4196 = vpop.permute.xlu0 %4195
          %4199 = vset.pattern.permute.xlu0 0
          %4200 = vperm.xlu0 %4199, %v4110
          %v4201 = vpop.permute.xlu0 %4200
          %4204 = vset.pattern.permute.xlu0 0
          %4205 = vperm.xlu0 %4204, %v4111
          %v4206 = vpop.permute.xlu0 %4205
          %4209 = vset.pattern.permute.xlu0 0
          %4210 = vperm.xlu0 %4209, %v4112
          %v4211 = vpop.permute.xlu0 %4210
          %4214 = vset.pattern.permute.xlu0 0
          %4215 = vperm.xlu0 %4214, %v4113
          %v4216 = vpop.permute.xlu0 %4215
          %4219 = vset.pattern.permute.xlu0 0
          %4220 = vperm.xlu0 %4219, %v4114
          %v4221 = vpop.permute.xlu0 %4220
          %4224 = vset.pattern.permute.xlu0 0
          %4225 = vperm.xlu0 %4224, %v4115
          %v4226 = vpop.permute.xlu0 %4225
          %4229 = vset.pattern.permute.xlu0 0
          %4230 = vperm.xlu0 %4229, %v4132
          %v4231 = vpop.permute.xlu0 %4230
          %4234 = vset.pattern.permute.xlu0 0
          %4235 = vperm.xlu0 %4234, %v4133
          %v4236 = vpop.permute.xlu0 %4235
          %4239 = vset.pattern.permute.xlu0 0
          %4240 = vperm.xlu0 %4239, %v4134
          %v4241 = vpop.permute.xlu0 %4240
          %4244 = vset.pattern.permute.xlu0 0
          %4245 = vperm.xlu0 %4244, %v4135
          %v4246 = vpop.permute.xlu0 %4245
          %4249 = vset.pattern.permute.xlu0 0
          %4250 = vperm.xlu0 %4249, %v4136
          %v4251 = vpop.permute.xlu0 %4250
          %4254 = vset.pattern.permute.xlu0 0
          %4255 = vperm.xlu0 %4254, %v4137
          %v4256 = vpop.permute.xlu0 %4255
          %4259 = vset.pattern.permute.xlu0 0
          %4260 = vperm.xlu0 %4259, %v4138
          %v4261 = vpop.permute.xlu0 %4260
          %4264 = vset.pattern.permute.xlu0 0
          %4265 = vperm.xlu0 %4264, %v4139
          %v4266 = vpop.permute.xlu0 %4265
          %4269 = vset.pattern.permute.xlu0 0
          %4270 = vperm.xlu0 %4269, %v4140
          %v4271 = vpop.permute.xlu0 %4270
          %4274 = vset.pattern.permute.xlu0 0
          %4275 = vperm.xlu0 %4274, %v4141
          %v4276 = vpop.permute.xlu0 %4275
          %4279 = vset.pattern.permute.xlu0 0
          %4280 = vperm.xlu0 %4279, %v4142
          %v4281 = vpop.permute.xlu0 %4280
          %4284 = vset.pattern.permute.xlu0 0
          %4285 = vperm.xlu0 %4284, %v4143
          %v4286 = vpop.permute.xlu0 %4285
          %4289 = vset.pattern.permute.xlu0 0
          %4290 = vperm.xlu0 %4289, %v4144
          %v4291 = vpop.permute.xlu0 %4290
          %4294 = vset.pattern.permute.xlu0 0
          %4295 = vperm.xlu0 %4294, %v4145
          %v4296 = vpop.permute.xlu0 %4295
          %4299 = vset.pattern.permute.xlu0 0
          %4300 = vperm.xlu0 %4299, %v4146
          %v4301 = vpop.permute.xlu0 %4300
          %4304 = vset.pattern.permute.xlu0 0
          %4305 = vperm.xlu0 %4304, %v4147
          %v4306 = vpop.permute.xlu0 %4305
          %v4308 = vmul.f32 %v4151, %v4077
          %v4309 = vmul.f32 %v4151, %v4081
          %v4310 = vmul.f32 %v4156, %v4077
          %v4311 = vmul.f32 %v4156, %v4081
          %v4312 = vmul.f32 %v4161, %v4077
          %v4313 = vmul.f32 %v4161, %v4081
          %v4314 = vmul.f32 %v4166, %v4077
          %v4315 = vmul.f32 %v4166, %v4081
          %v4316 = vmul.f32 %v4171, %v4077
          %v4317 = vmul.f32 %v4171, %v4081
          %v4318 = vmul.f32 %v4176, %v4077
          %v4319 = vmul.f32 %v4176, %v4081
          %v4320 = vmul.f32 %v4181, %v4077
          %v4321 = vmul.f32 %v4181, %v4081
          %v4322 = vmul.f32 %v4186, %v4077
          %v4323 = vmul.f32 %v4186, %v4081
          %v4324 = vmul.f32 %v4191, %v4077
          %v4325 = vmul.f32 %v4191, %v4081
          %v4326 = vmul.f32 %v4196, %v4077
          %v4327 = vmul.f32 %v4196, %v4081
          %v4328 = vmul.f32 %v4201, %v4077
          %v4329 = vmul.f32 %v4201, %v4081
          %v4330 = vmul.f32 %v4206, %v4077
          %v4331 = vmul.f32 %v4206, %v4081
          %v4332 = vmul.f32 %v4211, %v4077
          %v4333 = vmul.f32 %v4211, %v4081
          %v4334 = vmul.f32 %v4216, %v4077
          %v4335 = vmul.f32 %v4216, %v4081
          %v4336 = vmul.f32 %v4221, %v4077
          %v4337 = vmul.f32 %v4221, %v4081
          %v4338 = vmul.f32 %v4226, %v4077
          %v4339 = vmul.f32 %v4226, %v4081
          %v4340 = vmul.f32 %v4231, %v4077
          %v4341 = vmul.f32 %v4231, %v4081
          %v4342 = vmul.f32 %v4236, %v4077
          %v4343 = vmul.f32 %v4236, %v4081
          %v4344 = vmul.f32 %v4241, %v4077
          %v4345 = vmul.f32 %v4241, %v4081
          %v4346 = vmul.f32 %v4246, %v4077
          %v4347 = vmul.f32 %v4246, %v4081
          %v4348 = vmul.f32 %v4251, %v4077
          %v4349 = vmul.f32 %v4251, %v4081
          %v4350 = vmul.f32 %v4256, %v4077
          %v4351 = vmul.f32 %v4256, %v4081
          %v4352 = vmul.f32 %v4261, %v4077
          %v4353 = vmul.f32 %v4261, %v4081
          %v4354 = vmul.f32 %v4266, %v4077
          %v4355 = vmul.f32 %v4266, %v4081
          %v4356 = vmul.f32 %v4271, %v4077
          %v4357 = vmul.f32 %v4271, %v4081
          %v4358 = vmul.f32 %v4276, %v4077
          %v4359 = vmul.f32 %v4276, %v4081
          %v4360 = vmul.f32 %v4281, %v4077
          %v4361 = vmul.f32 %v4281, %v4081
          %v4362 = vmul.f32 %v4286, %v4077
          %v4363 = vmul.f32 %v4286, %v4081
          %v4364 = vmul.f32 %v4291, %v4077
          %v4365 = vmul.f32 %v4291, %v4081
          %v4366 = vmul.f32 %v4296, %v4077
          %v4367 = vmul.f32 %v4296, %v4081
          %v4368 = vmul.f32 %v4301, %v4077
          %v4369 = vmul.f32 %v4301, %v4081
          %v4370 = vmul.f32 %v4306, %v4077
          %v4371 = vmul.f32 %v4306, %v4081
          %v4372 = vmul.f32 %v4308, %v3815
          %v4373 = vmul.f32 %v4309, %v3815
          %v4374 = vmul.f32 %v4310, %v3815
          %v4375 = vmul.f32 %v4311, %v3815
          %v4376 = vmul.f32 %v4312, %v3815
          %v4377 = vmul.f32 %v4313, %v3815
          %v4378 = vmul.f32 %v4314, %v3815
          %v4379 = vmul.f32 %v4315, %v3815
          %v4380 = vmul.f32 %v4316, %v3815
          %v4381 = vmul.f32 %v4317, %v3815
          %v4382 = vmul.f32 %v4318, %v3815
          %v4383 = vmul.f32 %v4319, %v3815
          %v4384 = vmul.f32 %v4320, %v3815
          %v4385 = vmul.f32 %v4321, %v3815
          %v4386 = vmul.f32 %v4322, %v3815
          %v4387 = vmul.f32 %v4323, %v3815
          %v4388 = vmul.f32 %v4324, %v3815
          %v4389 = vmul.f32 %v4325, %v3815
          %v4390 = vmul.f32 %v4326, %v3815
          %v4391 = vmul.f32 %v4327, %v3815
          %v4392 = vmul.f32 %v4328, %v3815
          %v4393 = vmul.f32 %v4329, %v3815
          %v4394 = vmul.f32 %v4330, %v3815
          %v4395 = vmul.f32 %v4331, %v3815
          %v4396 = vmul.f32 %v4332, %v3815
          %v4397 = vmul.f32 %v4333, %v3815
          %v4398 = vmul.f32 %v4334, %v3815
          %v4399 = vmul.f32 %v4335, %v3815
          %v4400 = vmul.f32 %v4336, %v3815
          %v4401 = vmul.f32 %v4337, %v3815
          %v4402 = vmul.f32 %v4338, %v3815
          %v4403 = vmul.f32 %v4339, %v3815
          %v4404 = vmul.f32 %v4340, %v3815
          %v4405 = vmul.f32 %v4341, %v3815
          %v4406 = vmul.f32 %v4342, %v3815
          %v4407 = vmul.f32 %v4343, %v3815
          %v4408 = vmul.f32 %v4344, %v3815
          %v4409 = vmul.f32 %v4345, %v3815
          %v4410 = vmul.f32 %v4346, %v3815
          %v4411 = vmul.f32 %v4347, %v3815
          %v4412 = vmul.f32 %v4348, %v3815
          %v4413 = vmul.f32 %v4349, %v3815
          %v4414 = vmul.f32 %v4350, %v3815
          %v4415 = vmul.f32 %v4351, %v3815
          %v4416 = vmul.f32 %v4352, %v3815
          %v4417 = vmul.f32 %v4353, %v3815
          %v4418 = vmul.f32 %v4354, %v3815
          %v4419 = vmul.f32 %v4355, %v3815
          %v4420 = vmul.f32 %v4356, %v3815
          %v4421 = vmul.f32 %v4357, %v3815
          %v4422 = vmul.f32 %v4358, %v3815
          %v4423 = vmul.f32 %v4359, %v3815
          %v4424 = vmul.f32 %v4360, %v3815
          %v4425 = vmul.f32 %v4361, %v3815
          %v4426 = vmul.f32 %v4362, %v3815
          %v4427 = vmul.f32 %v4363, %v3815
          %v4428 = vmul.f32 %v4364, %v3815
          %v4429 = vmul.f32 %v4365, %v3815
          %v4430 = vmul.f32 %v4366, %v3815
          %v4431 = vmul.f32 %v4367, %v3815
          %v4432 = vmul.f32 %v4368, %v3815
          %v4433 = vmul.f32 %v4369, %v3815
          %v4434 = vmul.f32 %v4370, %v3815
          %v4435 = vmul.f32 %v4371, %v3815
          %v4436 = vsub.f32 %v4009, %v4372
          %v4437 = vsub.f32 %v4010, %v4373
          %v4438 = vsub.f32 %v4011, %v4374
          %v4439 = vsub.f32 %v4012, %v4375
          %v4440 = vsub.f32 %v4013, %v4376
          %v4441 = vsub.f32 %v4014, %v4377
          %v4442 = vsub.f32 %v4015, %v4378
          %v4443 = vsub.f32 %v4016, %v4379
          %v4444 = vsub.f32 %v4017, %v4380
          %v4445 = vsub.f32 %v4018, %v4381
          %v4446 = vsub.f32 %v4019, %v4382
          %v4447 = vsub.f32 %v4020, %v4383
          %v4448 = vsub.f32 %v4021, %v4384
          %v4449 = vsub.f32 %v4022, %v4385
          %v4450 = vsub.f32 %v4023, %v4386
          %v4451 = vsub.f32 %v4024, %v4387
          %v4452 = vsub.f32 %v4025, %v4388
          %v4453 = vsub.f32 %v4026, %v4389
          %v4454 = vsub.f32 %v4027, %v4390
          %v4455 = vsub.f32 %v4028, %v4391
          %v4456 = vsub.f32 %v4029, %v4392
          %v4457 = vsub.f32 %v4030, %v4393
          %v4458 = vsub.f32 %v4031, %v4394
          %v4459 = vsub.f32 %v4032, %v4395
          %v4460 = vsub.f32 %v4033, %v4396
          %v4461 = vsub.f32 %v4034, %v4397
          %v4462 = vsub.f32 %v4035, %v4398
          %v4463 = vsub.f32 %v4036, %v4399
          %v4464 = vsub.f32 %v4037, %v4400
          %v4465 = vsub.f32 %v4038, %v4401
          %v4466 = vsub.f32 %v4039, %v4402
          %v4467 = vsub.f32 %v4040, %v4403
          %v4468 = vsub.f32 %v4041, %v4404
          %v4469 = vsub.f32 %v4042, %v4405
          %v4470 = vsub.f32 %v4043, %v4406
          %v4471 = vsub.f32 %v4044, %v4407
          %v4472 = vsub.f32 %v4045, %v4408
          %v4473 = vsub.f32 %v4046, %v4409
          %v4474 = vsub.f32 %v4047, %v4410
          %v4475 = vsub.f32 %v4048, %v4411
          %v4476 = vsub.f32 %v4049, %v4412
          %v4477 = vsub.f32 %v4050, %v4413
          %v4478 = vsub.f32 %v4051, %v4414
          %v4479 = vsub.f32 %v4052, %v4415
          %v4480 = vsub.f32 %v4053, %v4416
          %v4481 = vsub.f32 %v4054, %v4417
          %v4482 = vsub.f32 %v4055, %v4418
          %v4483 = vsub.f32 %v4056, %v4419
          %v4484 = vsub.f32 %v4057, %v4420
          %v4485 = vsub.f32 %v4058, %v4421
          %v4486 = vsub.f32 %v4059, %v4422
          %v4487 = vsub.f32 %v4060, %v4423
          %v4488 = vsub.f32 %v4061, %v4424
          %v4489 = vsub.f32 %v4062, %v4425
          %v4490 = vsub.f32 %v4063, %v4426
          %v4491 = vsub.f32 %v4064, %v4427
          %v4492 = vsub.f32 %v4065, %v4428
          %v4493 = vsub.f32 %v4066, %v4429
          %v4494 = vsub.f32 %v4067, %v4430
          %v4495 = vsub.f32 %v4068, %v4431
          %v4496 = vsub.f32 %v4069, %v4432
          %v4497 = vsub.f32 %v4070, %v4433
          %v4498 = vsub.f32 %v4071, %v4434
          %v4499 = vsub.f32 %v4072, %v4435
          %v4500 = vmul.f32 %v4436, %v3944
          %v4501 = vmul.f32 %v4437, %v3944
          %v4502 = vmul.f32 %v4438, %v3944
          %v4503 = vmul.f32 %v4439, %v3944
          %v4504 = vmul.f32 %v4440, %v3944
          %v4505 = vmul.f32 %v4441, %v3944
          %v4506 = vmul.f32 %v4442, %v3944
          %v4507 = vmul.f32 %v4443, %v3944
          %v4508 = vmul.f32 %v4444, %v3944
          %v4509 = vmul.f32 %v4445, %v3944
          %v4510 = vmul.f32 %v4446, %v3944
          %v4511 = vmul.f32 %v4447, %v3944
          %v4512 = vmul.f32 %v4448, %v3944
          %v4513 = vmul.f32 %v4449, %v3944
          %v4514 = vmul.f32 %v4450, %v3944
          %v4515 = vmul.f32 %v4451, %v3944
          %v4516 = vmul.f32 %v4452, %v3944
          %v4517 = vmul.f32 %v4453, %v3944
          %v4518 = vmul.f32 %v4454, %v3944
          %v4519 = vmul.f32 %v4455, %v3944
          %v4520 = vmul.f32 %v4456, %v3944
          %v4521 = vmul.f32 %v4457, %v3944
          %v4522 = vmul.f32 %v4458, %v3944
          %v4523 = vmul.f32 %v4459, %v3944
          %v4524 = vmul.f32 %v4460, %v3944
          %v4525 = vmul.f32 %v4461, %v3944
          %v4526 = vmul.f32 %v4462, %v3944
          %v4527 = vmul.f32 %v4463, %v3944
          %v4528 = vmul.f32 %v4464, %v3944
          %v4529 = vmul.f32 %v4465, %v3944
          %v4530 = vmul.f32 %v4466, %v3944
          %v4531 = vmul.f32 %v4467, %v3944
          %v4532 = vmul.f32 %v4468, %v3944
          %v4533 = vmul.f32 %v4469, %v3944
          %v4534 = vmul.f32 %v4470, %v3944
          %v4535 = vmul.f32 %v4471, %v3944
          %v4536 = vmul.f32 %v4472, %v3944
          %v4537 = vmul.f32 %v4473, %v3944
          %v4538 = vmul.f32 %v4474, %v3944
          %v4539 = vmul.f32 %v4475, %v3944
          %v4540 = vmul.f32 %v4476, %v3944
          %v4541 = vmul.f32 %v4477, %v3944
          %v4542 = vmul.f32 %v4478, %v3944
          %v4543 = vmul.f32 %v4479, %v3944
          %v4544 = vmul.f32 %v4480, %v3944
          %v4545 = vmul.f32 %v4481, %v3944
          %v4546 = vmul.f32 %v4482, %v3944
          %v4547 = vmul.f32 %v4483, %v3944
          %v4548 = vmul.f32 %v4484, %v3944
          %v4549 = vmul.f32 %v4485, %v3944
          %v4550 = vmul.f32 %v4486, %v3944
          %v4551 = vmul.f32 %v4487, %v3944
          %v4552 = vmul.f32 %v4488, %v3944
          %v4553 = vmul.f32 %v4489, %v3944
          %v4554 = vmul.f32 %v4490, %v3944
          %v4555 = vmul.f32 %v4491, %v3944
          %v4556 = vmul.f32 %v4492, %v3944
          %v4557 = vmul.f32 %v4493, %v3944
          %v4558 = vmul.f32 %v4494, %v3944
          %v4559 = vmul.f32 %v4495, %v3944
          %v4560 = vmul.f32 %v4496, %v3944
          %v4561 = vmul.f32 %v4497, %v3944
          %v4562 = vmul.f32 %v4498, %v3944
          %v4563 = vmul.f32 %v4499, %v3944
          %v4564 = vsub.f32 %v3945, %v4500
          %v4565 = vsub.f32 %v3946, %v4501
          %v4566 = vsub.f32 %v3947, %v4502
          %v4567 = vsub.f32 %v3948, %v4503
          %v4568 = vsub.f32 %v3949, %v4504
          %v4569 = vsub.f32 %v3950, %v4505
          %v4570 = vsub.f32 %v3951, %v4506
          %v4571 = vsub.f32 %v3952, %v4507
          %v4572 = vsub.f32 %v3953, %v4508
          %v4573 = vsub.f32 %v3954, %v4509
          %v4574 = vsub.f32 %v3955, %v4510
          %v4575 = vsub.f32 %v3956, %v4511
          %v4576 = vsub.f32 %v3957, %v4512
          %v4577 = vsub.f32 %v3958, %v4513
          %v4578 = vsub.f32 %v3959, %v4514
          %v4579 = vsub.f32 %v3960, %v4515
          %v4580 = vsub.f32 %v3961, %v4516
          %v4581 = vsub.f32 %v3962, %v4517
          %v4582 = vsub.f32 %v3963, %v4518
          %v4583 = vsub.f32 %v3964, %v4519
          %v4584 = vsub.f32 %v3965, %v4520
          %v4585 = vsub.f32 %v3966, %v4521
          %v4586 = vsub.f32 %v3967, %v4522
          %v4587 = vsub.f32 %v3968, %v4523
          %v4588 = vsub.f32 %v3969, %v4524
          %v4589 = vsub.f32 %v3970, %v4525
          %v4590 = vsub.f32 %v3971, %v4526
          %v4591 = vsub.f32 %v3972, %v4527
          %v4592 = vsub.f32 %v3973, %v4528
          %v4593 = vsub.f32 %v3974, %v4529
          %v4594 = vsub.f32 %v3975, %v4530
          %v4595 = vsub.f32 %v3976, %v4531
          %v4596 = vsub.f32 %v3977, %v4532
          %v4597 = vsub.f32 %v3978, %v4533
          %v4598 = vsub.f32 %v3979, %v4534
          %v4599 = vsub.f32 %v3980, %v4535
          %v4600 = vsub.f32 %v3981, %v4536
          %v4601 = vsub.f32 %v3982, %v4537
          %v4602 = vsub.f32 %v3983, %v4538
          %v4603 = vsub.f32 %v3984, %v4539
          %v4604 = vsub.f32 %v3985, %v4540
          %v4605 = vsub.f32 %v3986, %v4541
          %v4606 = vsub.f32 %v3987, %v4542
          %v4607 = vsub.f32 %v3988, %v4543
          %v4608 = vsub.f32 %v3989, %v4544
          %v4609 = vsub.f32 %v3990, %v4545
          %v4610 = vsub.f32 %v3991, %v4546
          %v4611 = vsub.f32 %v3992, %v4547
          %v4612 = vsub.f32 %v3993, %v4548
          %v4613 = vsub.f32 %v3994, %v4549
          %v4614 = vsub.f32 %v3995, %v4550
          %v4615 = vsub.f32 %v3996, %v4551
          %v4616 = vsub.f32 %v3997, %v4552
          %v4617 = vsub.f32 %v3998, %v4553
          %v4618 = vsub.f32 %v3999, %v4554
          %v4619 = vsub.f32 %v4000, %v4555
          %v4620 = vsub.f32 %v4001, %v4556
          %v4621 = vsub.f32 %v4002, %v4557
          %v4622 = vsub.f32 %v4003, %v4558
          %v4623 = vsub.f32 %v4004, %v4559
          %v4624 = vsub.f32 %v4005, %v4560
          %v4625 = vsub.f32 %v4006, %v4561
          %v4626 = vsub.f32 %v4007, %v4562
          %v4627 = vsub.f32 %v4008, %v4563
          %v4628 = vmul.f32 %v4564, %v4564
          %v4629 = vmul.f32 %v4565, %v4565
          %v4630 = vmul.f32 %v4566, %v4566
          %v4631 = vmul.f32 %v4567, %v4567
          %v4632 = vmul.f32 %v4568, %v4568
          %v4633 = vmul.f32 %v4569, %v4569
          %v4634 = vmul.f32 %v4570, %v4570
          %v4635 = vmul.f32 %v4571, %v4571
          %v4636 = vmul.f32 %v4572, %v4572
          %v4637 = vmul.f32 %v4573, %v4573
          %v4638 = vmul.f32 %v4574, %v4574
          %v4639 = vmul.f32 %v4575, %v4575
          %v4640 = vmul.f32 %v4576, %v4576
          %v4641 = vmul.f32 %v4577, %v4577
          %v4642 = vmul.f32 %v4578, %v4578
          %v4643 = vmul.f32 %v4579, %v4579
          %v4644 = vmul.f32 %v4580, %v4580
          %v4645 = vmul.f32 %v4581, %v4581
          %v4646 = vmul.f32 %v4582, %v4582
          %v4647 = vmul.f32 %v4583, %v4583
          %v4648 = vmul.f32 %v4584, %v4584
          %v4649 = vmul.f32 %v4585, %v4585
          %v4650 = vmul.f32 %v4586, %v4586
          %v4651 = vmul.f32 %v4587, %v4587
          %v4652 = vmul.f32 %v4588, %v4588
          %v4653 = vmul.f32 %v4589, %v4589
          %v4654 = vmul.f32 %v4590, %v4590
          %v4655 = vmul.f32 %v4591, %v4591
          %v4656 = vmul.f32 %v4592, %v4592
          %v4657 = vmul.f32 %v4593, %v4593
          %v4658 = vmul.f32 %v4594, %v4594
          %v4659 = vmul.f32 %v4595, %v4595
          %v4660 = vmul.f32 %v4596, %v4596
          %v4661 = vmul.f32 %v4597, %v4597
          %v4662 = vmul.f32 %v4598, %v4598
          %v4663 = vmul.f32 %v4599, %v4599
          %v4664 = vmul.f32 %v4600, %v4600
          %v4665 = vmul.f32 %v4601, %v4601
          %v4666 = vmul.f32 %v4602, %v4602
          %v4667 = vmul.f32 %v4603, %v4603
          %v4668 = vmul.f32 %v4604, %v4604
          %v4669 = vmul.f32 %v4605, %v4605
          %v4670 = vmul.f32 %v4606, %v4606
          %v4671 = vmul.f32 %v4607, %v4607
          %v4672 = vmul.f32 %v4608, %v4608
          %v4673 = vmul.f32 %v4609, %v4609
          %v4674 = vmul.f32 %v4610, %v4610
          %v4675 = vmul.f32 %v4611, %v4611
          %v4676 = vmul.f32 %v4612, %v4612
          %v4677 = vmul.f32 %v4613, %v4613
          %v4678 = vmul.f32 %v4614, %v4614
          %v4679 = vmul.f32 %v4615, %v4615
          %v4680 = vmul.f32 %v4616, %v4616
          %v4681 = vmul.f32 %v4617, %v4617
          %v4682 = vmul.f32 %v4618, %v4618
          %v4683 = vmul.f32 %v4619, %v4619
          %v4684 = vmul.f32 %v4620, %v4620
          %v4685 = vmul.f32 %v4621, %v4621
          %v4686 = vmul.f32 %v4622, %v4622
          %v4687 = vmul.f32 %v4623, %v4623
          %v4688 = vmul.f32 %v4624, %v4624
          %v4689 = vmul.f32 %v4625, %v4625
          %v4690 = vmul.f32 %v4626, %v4626
          %v4691 = vmul.f32 %v4627, %v4627
          %v4692 = vadd.f32 %v4628, %v4629
          %4693 = vadd.xlane.f32.xlu0 %v4692
          %v4694 = vpop.xlane.xlu0 %4693
          %v4695 = vadd.f32 %v4630, %v4631
          %4696 = vadd.xlane.f32.xlu0 %v4695
          %v4697 = vpop.xlane.xlu0 %4696
          %v4698 = vadd.f32 %v4632, %v4633
          %4699 = vadd.xlane.f32.xlu0 %v4698
          %v4700 = vpop.xlane.xlu0 %4699
          %v4701 = vadd.f32 %v4634, %v4635
          %4702 = vadd.xlane.f32.xlu0 %v4701
          %v4703 = vpop.xlane.xlu0 %4702
          %v4704 = vadd.f32 %v4636, %v4637
          %4705 = vadd.xlane.f32.xlu0 %v4704
          %v4706 = vpop.xlane.xlu0 %4705
          %v4707 = vadd.f32 %v4638, %v4639
          %4708 = vadd.xlane.f32.xlu0 %v4707
          %v4709 = vpop.xlane.xlu0 %4708
          %v4710 = vadd.f32 %v4640, %v4641
          %4711 = vadd.xlane.f32.xlu0 %v4710
          %v4712 = vpop.xlane.xlu0 %4711
          %v4713 = vadd.f32 %v4642, %v4643
          %4714 = vadd.xlane.f32.xlu0 %v4713
          %v4715 = vpop.xlane.xlu0 %4714
          %v4716 = vadd.f32 %v4644, %v4645
          %4717 = vadd.xlane.f32.xlu0 %v4716
          %v4718 = vpop.xlane.xlu0 %4717
          %v4719 = vadd.f32 %v4646, %v4647
          %4720 = vadd.xlane.f32.xlu0 %v4719
          %v4721 = vpop.xlane.xlu0 %4720
          %v4722 = vadd.f32 %v4648, %v4649
          %4723 = vadd.xlane.f32.xlu0 %v4722
          %v4724 = vpop.xlane.xlu0 %4723
          %v4725 = vadd.f32 %v4650, %v4651
          %4726 = vadd.xlane.f32.xlu0 %v4725
          %v4727 = vpop.xlane.xlu0 %4726
          %v4728 = vadd.f32 %v4652, %v4653
          %4729 = vadd.xlane.f32.xlu0 %v4728
          %v4730 = vpop.xlane.xlu0 %4729
          %v4731 = vadd.f32 %v4654, %v4655
          %4732 = vadd.xlane.f32.xlu0 %v4731
          %v4733 = vpop.xlane.xlu0 %4732
          %v4734 = vadd.f32 %v4656, %v4657
          %4735 = vadd.xlane.f32.xlu0 %v4734
          %v4736 = vpop.xlane.xlu0 %4735
          %v4737 = vadd.f32 %v4658, %v4659
          %4738 = vadd.xlane.f32.xlu0 %v4737
          %v4739 = vpop.xlane.xlu0 %4738
          %v4740 = vadd.f32 %v4660, %v4661
          %4741 = vadd.xlane.f32.xlu0 %v4740
          %v4742 = vpop.xlane.xlu0 %4741
          %v4743 = vadd.f32 %v4662, %v4663
          %4744 = vadd.xlane.f32.xlu0 %v4743
          %v4745 = vpop.xlane.xlu0 %4744
          %v4746 = vadd.f32 %v4664, %v4665
          %4747 = vadd.xlane.f32.xlu0 %v4746
          %v4748 = vpop.xlane.xlu0 %4747
          %v4749 = vadd.f32 %v4666, %v4667
          %4750 = vadd.xlane.f32.xlu0 %v4749
          %v4751 = vpop.xlane.xlu0 %4750
          %v4752 = vadd.f32 %v4668, %v4669
          %4753 = vadd.xlane.f32.xlu0 %v4752
          %v4754 = vpop.xlane.xlu0 %4753
          %v4755 = vadd.f32 %v4670, %v4671
          %4756 = vadd.xlane.f32.xlu0 %v4755
          %v4757 = vpop.xlane.xlu0 %4756
          %v4758 = vadd.f32 %v4672, %v4673
          %4759 = vadd.xlane.f32.xlu0 %v4758
          %v4760 = vpop.xlane.xlu0 %4759
          %v4761 = vadd.f32 %v4674, %v4675
          %4762 = vadd.xlane.f32.xlu0 %v4761
          %v4763 = vpop.xlane.xlu0 %4762
          %v4764 = vadd.f32 %v4676, %v4677
          %4765 = vadd.xlane.f32.xlu0 %v4764
          %v4766 = vpop.xlane.xlu0 %4765
          %v4767 = vadd.f32 %v4678, %v4679
          %4768 = vadd.xlane.f32.xlu0 %v4767
          %v4769 = vpop.xlane.xlu0 %4768
          %v4770 = vadd.f32 %v4680, %v4681
          %4771 = vadd.xlane.f32.xlu0 %v4770
          %v4772 = vpop.xlane.xlu0 %4771
          %v4773 = vadd.f32 %v4682, %v4683
          %4774 = vadd.xlane.f32.xlu0 %v4773
          %v4775 = vpop.xlane.xlu0 %4774
          %v4776 = vadd.f32 %v4684, %v4685
          %4777 = vadd.xlane.f32.xlu0 %v4776
          %v4778 = vpop.xlane.xlu0 %4777
          %v4779 = vadd.f32 %v4686, %v4687
          %4780 = vadd.xlane.f32.xlu0 %v4779
          %v4781 = vpop.xlane.xlu0 %4780
          %v4782 = vadd.f32 %v4688, %v4689
          %4783 = vadd.xlane.f32.xlu0 %v4782
          %v4784 = vpop.xlane.xlu0 %4783
          %v4785 = vadd.f32 %v4690, %v4691
          %4786 = vadd.xlane.f32.xlu0 %v4785
          %v4787 = vpop.xlane.xlu0 %4786
          %v4788 = vadd.f32 %v4694, %v4697
          %v4789 = vadd.f32 %v4788, %v4700
          %v4790 = vadd.f32 %v4789, %v4703
          %v4791 = vadd.f32 %v4790, %v4706
          %v4792 = vadd.f32 %v4791, %v4709
          %v4793 = vadd.f32 %v4792, %v4712
          %v4794 = vadd.f32 %v4793, %v4715
          %v4795 = vadd.f32 %v4794, %v4718
          %v4796 = vadd.f32 %v4795, %v4721
          %v4797 = vadd.f32 %v4796, %v4724
          %v4798 = vadd.f32 %v4797, %v4727
          %v4799 = vadd.f32 %v4798, %v4730
          %v4800 = vadd.f32 %v4799, %v4733
          %v4801 = vadd.f32 %v4800, %v4736
          %v4802 = vadd.f32 %v4801, %v4739
          %v4803 = vadd.f32 %v4802, %v4742
          %v4804 = vadd.f32 %v4803, %v4745
          %v4805 = vadd.f32 %v4804, %v4748
          %v4806 = vadd.f32 %v4805, %v4751
          %v4807 = vadd.f32 %v4806, %v4754
          %v4808 = vadd.f32 %v4807, %v4757
          %v4809 = vadd.f32 %v4808, %v4760
          %v4810 = vadd.f32 %v4809, %v4763
          %v4811 = vadd.f32 %v4810, %v4766
          %v4812 = vadd.f32 %v4811, %v4769
          %v4813 = vadd.f32 %v4812, %v4772
          %v4814 = vadd.f32 %v4813, %v4775
          %v4815 = vadd.f32 %v4814, %v4778
          %v4816 = vadd.f32 %v4815, %v4781
          %v4817 = vadd.f32 %v4816, %v4784
          %v4818 = vadd.f32 %v4817, %v4787
          %v4819 = vrot.slane %v4818, 4
          %v4820 = vadd.f32 %v4818, %v4819
          %v4821 = vrot.slane %v4820, 2
          %v4822 = vadd.f32 %v4820, %v4821
          %v4823 = vrot.slane %v4822, 1
          %v4824 = vadd.f32 %v4822, %v4823
          %vm4825 = vcmask 0
          %4826 = vst.msk [vmem:[#allocation13] sm:$0x1] %vm4825, %v4824
        $region72: #{tpu_custom_call.1} parent=39 // pred_fallthru
          _
        %s4827 = sand.u32 %s148, 1
        %s4828 = scalar_lea.sflag [#allocation8], %s4827
        %s4829 = sand.u32 %s148, 1
        %s4830 = smul.addr %s4829, 8
        %s4831 = scalar_lea.vmem [#allocation12], %s4830
        // Predicated region
        $region73: #{tpu_custom_call.1} parent=39 // pred_check
          %p4832 = pneg %p158
        $region74: #{tpu_custom_call.1} parent=39 // pred_check_branch
          %4834 = sbr.rel (%p4832) target = $region76
        $region75: #{tpu_custom_call.1} parent=39 // pred_region
          %p4835 = scmp.lt.s32.totalorder %s26, 0
          %s4836 = scalar_select %p4835, %s26, 0
          %s4838 = ssub.s32 128, 128
          %4839 = vsyncadd %s4828, %s4838
          %s4840 = smul.addr %s4836, 128
          %s4841 = scalar_lea.hbm %s5, %s4840
          %s4843 = sshll.u32 %s4831, 4
          %s4844 = int_to_ptr.vmem [resolvable:$true] %s4843
          %4846 = dma.vmem_to_hbm [thread:$0]  %s4844, 128, %s4841, %s4828
        $region76: #{tpu_custom_call.1} parent=39 // pred_fallthru
          _
        // Predicated region
        $region77: #{tpu_custom_call.1} parent=39 // pred_check
          %p4847 = pneg %p179
        $region78: #{tpu_custom_call.1} parent=39 // pred_check_branch
          %4849 = sbr.rel (%p4847) target = $region80
        $region79: #{tpu_custom_call.1} parent=39 // pred_region
          %s4851 = ssub.s32 16, 16
          %4852 = vsyncadd [#allocation14], %s4851
          %s4854 = sshll.u32 [#allocation13], 4
          %s4855 = int_to_ptr.vmem [resolvable:$true] %s4854
          %4857 = dma.vmem_to_hbm [thread:$0]  %s4855, 16, %s6, [#allocation14]
        $region80: #{tpu_custom_call.1} parent=39 // pred_fallthru
          _
        // Predicated region
        $region81: #{tpu_custom_call.1} parent=39 // pred_check
          %p4858 = pneg %p179
        $region82: #{tpu_custom_call.1} parent=39 // pred_check_branch
          %4860 = sbr.rel (%p4858) target = $region84
        $region83: #{tpu_custom_call.1} parent=39 // pred_region
          %4861 = dma.done [#allocation14], 16
        $region84: #{tpu_custom_call.1} parent=39 // pred_fallthru
          _
      $region40: #{tpu_custom_call.1} parent=5 // pred_fallthru
        _
      %p4862 = scmp.le.s32.totalorder 2, %s21
      // Predicated region
      $region85: #{tpu_custom_call.1} parent=5 // pred_check
        %p4863 = pneg %p4862
      $region86: #{tpu_custom_call.1} parent=5 // pred_check_branch
        %4865 = sbr.rel (%p4863) target = $region88
      $region87: #{tpu_custom_call.1} parent=5 // pred_region
        %s4866 = ssub.s32 %s21, 2
        // Predicated region
        $region89: #{tpu_custom_call.1} parent=87 // pred_check
          %p4867 = pneg %p164
        $region90: #{tpu_custom_call.1} parent=87 // pred_check_branch
          %4869 = sbr.rel (%p4867) target = $region92
        $region91: #{tpu_custom_call.1} parent=87 // pred_region
          %s4870 = sand.u32 %s149, 1
          %s4871 = scalar_lea.sflag [#allocation8], %s4870
          %s4872 = sand.u32 %s149, 1
          %s4873 = smul.addr %s4872, 8
          %s4874 = scalar_lea.vmem [#allocation12], %s4873
          %4875 = dma.done %s4871, 128
        $region92: #{tpu_custom_call.1} parent=87 // pred_fallthru
          _
      $region88: #{tpu_custom_call.1} parent=5 // pred_fallthru
        _
    $region6: #{tpu_custom_call.1} parent=1 // loop_footer
      %s25 = sadd.s32 1, %s21
    $region7: #{tpu_custom_call.1} parent=1 // loop_footer_branch
      %20 = sbr.rel target = $region3
    $region8: #{tpu_custom_call.1} parent=1 // loop_exit
      _
    %4876 = vsyncpa [#allocation7], 1
    %s4877 = scalar_lea.sflag [#allocation7], 1
    %4878 = vsyncpa %s4877, 1
    %4879 = vsyncpa [#allocation10], 1
    %4880 = vsyncpa [#allocation8], 1
    %s4881 = scalar_lea.sflag [#allocation8], 1
    %4882 = vsyncpa %s4881, 1
    %4883 = vsyncpa [#allocation14], 1

</llo_original>
